<compile_context>
chip_gen: v7x
topology: tpu7x:2x2x1
jax: 0.10.0
libtpu: 0.0.40
codegen_flags: <defaults>
</compile_context>

<pallas_src>
import math

import jax
import jax.numpy as jnp
from jax.experimental import pallas as pl
from jax.experimental.pallas import tpu as pltpu

HEADS = 8
DIM_HEAD = 64
INNER_DIM = HEADS * DIM_HEAD  # 512
LN_EPS = 1e-5                 # PyTorch nn.LayerNorm default

# Row indices of the packed (8, D) vector bundle.
_BO, _B2, _LN1G, _LN1B, _FFNG, _FFNB, _LN2G, _LN2B = range(8)


def _layernorm(x, gamma, beta, eps=LN_EPS):
    # Biased variance over the last axis (matches torch.nn.LayerNorm).
    mu = jnp.mean(x, axis=-1, keepdims=True)
    var = jnp.mean(jnp.square(x - mu), axis=-1, keepdims=True)
    return (x - mu) * jax.lax.rsqrt(var + eps) * gamma + beta


def _gelu_exact(x):
    # PyTorch nn.GELU() default is the exact (erf-based) GELU.
    return 0.5 * x * (1.0 + jax.scipy.special.erf(x * (1.0 / math.sqrt(2.0))))


def cross_transformer_kernel(
    tgt_ref, src_ref,
    wq_ref, wkv_ref, wo_ref, w1_ref, w2_ref,
    vecs_ref, b1_ref,
    out_ref,
):
    bt, n, d = tgt_ref.shape
    m = src_ref.shape[1]

    # Flatten batch into rows: all dense row-wise math happens on (Bt*N, D).
    tgt = tgt_ref[...].reshape(bt * n, d)          # (R, D)  f32
    src = src_ref[...].reshape(bt * m, d)          # (Rs, D) f32

    vecs = vecs_ref[...]                           # (8, D) f32
    bo = vecs[_BO:_BO + 1, :]
    b2 = vecs[_B2:_B2 + 1, :]
    ln1_g, ln1_b = vecs[_LN1G:_LN1G + 1, :], vecs[_LN1B:_LN1B + 1, :]
    ffn_g, ffn_b = vecs[_FFNG:_FFNG + 1, :], vecs[_FFNB:_FFNB + 1, :]
    ln2_g, ln2_b = vecs[_LN2G:_LN2G + 1, :], vecs[_LN2B:_LN2B + 1, :]

    # ---- MultiHAtten(q=target, k=source, v=source) ----
    # Q projection and fused K/V projection: bf16 on the MXU, f32 accumulation.
    q = jnp.dot(tgt.astype(jnp.bfloat16), wq_ref[...],
                preferred_element_type=jnp.float32)                 # (R, 512)
    kv = jnp.dot(src.astype(jnp.bfloat16), wkv_ref[...],
                 preferred_element_type=jnp.float32)                # (Rs, 1024)

    scale = DIM_HEAD ** (-0.5)
    # Fold the 1/sqrt(d) scale into q once (instead of per-head score scaling).
    q3 = (q * scale).reshape(bt, n, INNER_DIM).astype(jnp.bfloat16)     # (Bt, N, 512)
    k3 = kv[:, :INNER_DIM].reshape(bt, m, INNER_DIM).astype(jnp.bfloat16)
    v3 = kv[:, INNER_DIM:].reshape(bt, m, INNER_DIM).astype(jnp.bfloat16)

    wo = wo_ref[...]                                                # (512, D) bf16
    proj = jnp.zeros((bt * n, d), jnp.float32)
    for h in range(HEADS):                                          # static unroll
        lo = h * DIM_HEAD
        qh = q3[:, :, lo:lo + DIM_HEAD]                             # (Bt, N, 64)
        kh = k3[:, :, lo:lo + DIM_HEAD]                             # (Bt, M, 64)
        vh = v3[:, :, lo:lo + DIM_HEAD]                             # (Bt, M, 64)

        # Batched over Bt, contracting the head dim: no explicit transpose.
        s = jnp.einsum('bnd,bmd->bnm', qh, kh,
                       preferred_element_type=jnp.float32)          # (Bt, N, M)
        s = s - jnp.max(s, axis=-1, keepdims=True)
        e = jnp.exp(s)
        inv = pl.reciprocal(jnp.sum(e, axis=-1, keepdims=True), approx=True)
        attn = e * inv                                              # softmax(dim=-1)

        oh = jnp.einsum('bnm,bmd->bnd', attn.astype(jnp.bfloat16), vh,
                        preferred_element_type=jnp.float32)         # (Bt, N, 64)
        # Fold the 'b n (h d)' concat into the output projection: accumulate
        # (attn @ v_h) @ Wo[h*64:(h+1)*64, :].
        proj = proj + jnp.dot(
            oh.reshape(bt * n, DIM_HEAD).astype(jnp.bfloat16),
            wo[lo:lo + DIM_HEAD, :],
            preferred_element_type=jnp.float32)                     # (R, D)

    proj = proj + bo                                                # to_out Linear bias

    # ---- residual + LayerNorm1 ----
    x = _layernorm(proj + tgt, ln1_g, ln1_b)

    # ---- FeedForward (pre-norm) ----
    y = _layernorm(x, ffn_g, ffn_b)
    y = jnp.dot(y.astype(jnp.bfloat16), w1_ref[...],
                preferred_element_type=jnp.float32) + b1_ref[...]
    y = _gelu_exact(y)
    y = jnp.dot(y.astype(jnp.bfloat16), w2_ref[...],
                preferred_element_type=jnp.float32) + b2

    # ---- residual + LayerNorm2 ----
    out_ref[...] = _layernorm(y + x, ln2_g, ln2_b).reshape(bt, n, d)


def cross_transformer(target_x, source_x, params, *, max_batch_tile=8):
    B, N, D = target_x.shape
    _, M, _ = source_x.shape
    mlp_dim = params["w1"].shape[1]

    # Largest batch tile <= max_batch_tile that divides B.
    bt = min(B, max_batch_tile)
    while B % bt:
        bt -= 1

    # Fuse K/V projection weights; cast matmul weights to bf16 for the MXU.
    wq = params["wq"].astype(jnp.bfloat16)
    wkv = jnp.concatenate([params["wk"], params["wv"]], axis=1).astype(jnp.bfloat16)
    wo = params["wo"].astype(jnp.bfloat16)
    w1 = params["w1"].astype(jnp.bfloat16)
    w2 = params["w2"].astype(jnp.bfloat16)

    # Pack the eight (1, D) vectors into one (8, D) array -> one input DMA.
    vecs = jnp.concatenate(
        [params["bo"], params["b2"],
         params["ln1_g"], params["ln1_b"],
         params["ffn_g"], params["ffn_b"],
         params["ln2_g"], params["ln2_b"]],
        axis=0).astype(jnp.float32)
    b1 = params["b1"].astype(jnp.float32)

    def const_spec(shape):
        return pl.BlockSpec(shape, lambda b: (0,) * len(shape))

    in_specs = [
        pl.BlockSpec((bt, N, D), lambda b: (b, 0, 0)),   # target_x
        pl.BlockSpec((bt, M, D), lambda b: (b, 0, 0)),   # source_x
        const_spec((D, INNER_DIM)),                      # wq
        const_spec((D, 2 * INNER_DIM)),                  # wkv (fused k/v)
        const_spec((INNER_DIM, D)),                      # wo
        const_spec((D, mlp_dim)),                        # ffn w1
        const_spec((mlp_dim, D)),                        # ffn w2
        const_spec((8, D)),                              # packed biases / LN params
        const_spec((1, mlp_dim)),                        # ffn b1
    ]
    out_spec = pl.BlockSpec((bt, N, D), lambda b: (b, 0, 0))

    return pl.pallas_call(
        cross_transformer_kernel,
        out_shape=jax.ShapeDtypeStruct((B, N, D), jnp.float32),
        grid_spec=pltpu.PrefetchScalarGridSpec(
            num_scalar_prefetch=0,
            grid=(B // bt,),
            in_specs=in_specs,
            out_specs=out_spec,
        ),
        compiler_params=pltpu.CompilerParams(dimension_semantics=("parallel",)),
    )(target_x, source_x, wq, wkv, wo, w1, w2, vecs, b1)


def cross_transformer_ref(tgt, src, params):
    """Pure-JAX f32 reference (mirrors the PyTorch module)."""
    def ln(x, g, b):
        mu = x.mean(-1, keepdims=True)
        var = jnp.square(x - mu).mean(-1, keepdims=True)
        return (x - mu) / jnp.sqrt(var + LN_EPS) * g + b

    B, N, _ = tgt.shape
    M = src.shape[1]
    q = tgt @ params["wq"]
    k = src @ params["wk"]
    v = src @ params["wv"]
    qh = q.reshape(B, N, HEADS, DIM_HEAD).transpose(0, 2, 1, 3)
    kh = k.reshape(B, M, HEADS, DIM_HEAD).transpose(0, 2, 1, 3)
    vh = v.reshape(B, M, HEADS, DIM_HEAD).transpose(0, 2, 1, 3)
    dots = jnp.einsum('bhnd,bhmd->bhnm', qh, kh) * DIM_HEAD ** (-0.5)
    attn = jax.nn.softmax(dots, axis=-1)
    o = jnp.einsum('bhnm,bhmd->bhnd', attn, vh)
    o = o.transpose(0, 2, 1, 3).reshape(B, N, INNER_DIM)
    proj = o @ params["wo"] + params["bo"]
    x = ln(proj + tgt, params["ln1_g"], params["ln1_b"])
    y = ln(x, params["ffn_g"], params["ffn_b"])
    y = y @ params["w1"] + params["b1"]
    y = 0.5 * y * (1.0 + jax.scipy.special.erf(y / math.sqrt(2.0)))
    y = y @ params["w2"] + params["b2"]
    return ln(y + x, params["ln2_g"], params["ln2_b"])


def init_params(key, dim, mlp_dim):
    ks = jax.random.split(key, 8)
    s = 0.02
    return {
        "wq": s * jax.random.normal(ks[0], (dim, INNER_DIM), jnp.float32),
        "wk": s * jax.random.normal(ks[1], (dim, INNER_DIM), jnp.float32),
        "wv": s * jax.random.normal(ks[2], (dim, INNER_DIM), jnp.float32),
        "wo": s * jax.random.normal(ks[3], (INNER_DIM, dim), jnp.float32),
        "bo": s * jax.random.normal(ks[4], (1, dim), jnp.float32),
        "w1": s * jax.random.normal(ks[5], (dim, mlp_dim), jnp.float32),
        "b1": s * jax.random.normal(ks[6], (1, mlp_dim), jnp.float32),
        "w2": s * jax.random.normal(ks[7], (mlp_dim, dim), jnp.float32),
        "b2": jnp.zeros((1, dim), jnp.float32),
        "ln1_g": jnp.ones((1, dim), jnp.float32),
        "ln1_b": jnp.zeros((1, dim), jnp.float32),
        "ln2_g": jnp.ones((1, dim), jnp.float32),
        "ln2_b": jnp.zeros((1, dim), jnp.float32),
        "ffn_g": jnp.ones((1, dim), jnp.float32),
        "ffn_b": jnp.zeros((1, dim), jnp.float32),
    }


if __name__ == "__main__":
    B, N, M, DIM, MLP_DIM = 2, 8, 8, 32, 64

    key = jax.random.PRNGKey(0)
    k_t, k_s, k_p = jax.random.split(key, 3)
    target_x = jax.random.normal(k_t, (B, N, DIM), jnp.float32)
    source_x = jax.random.normal(k_s, (B, M, DIM), jnp.float32)
    params = init_params(k_p, DIM, MLP_DIM)

    out = cross_transformer(target_x, source_x, params)
    out = jax.block_until_ready(out)

    ref = cross_transformer_ref(target_x, source_x, params)
    ref = jax.block_until_ready(ref)

    assert out.shape == (B, N, DIM) and bool(jnp.all(jnp.isfinite(out)))
    # bf16 matmuls + approx reciprocal introduce small deviations vs. the f32 reference.
    max_err = float(jnp.max(jnp.abs(out - ref)))
    assert max_err < 3e-2, f"mismatch vs reference: {max_err}"
    print("KERNEL_OK")
</pallas_src>

<mosaic_0001>
module attributes {stable_mosaic.version = 11 : i64} {
  func.func @cross_transformer_kernel(%arg0: i32, %arg1: memref<2x8x32xf32, #tpu.memory_space<vmem>>, %arg2: memref<2x8x32xf32, #tpu.memory_space<vmem>>, %arg3: memref<32x512xbf16, #tpu.memory_space<vmem>>, %arg4: memref<32x1024xbf16, #tpu.memory_space<vmem>>, %arg5: memref<512x32xbf16, #tpu.memory_space<vmem>>, %arg6: memref<32x64xbf16, #tpu.memory_space<vmem>>, %arg7: memref<64x32xbf16, #tpu.memory_space<vmem>>, %arg8: memref<8x32xf32, #tpu.memory_space<vmem>>, %arg9: memref<1x64xf32, #tpu.memory_space<vmem>>, %arg10: memref<2x8x32xf32, #tpu.memory_space<vmem>>) attributes {dimension_semantics = [#tpu.dimension_semantics<parallel>], iteration_bounds = array<i64: 1>, scalar_prefetch = 0 : i64, scratch_operands = 0 : i64, tpu.core_type = #tpu.core_type<tc>, window_params = [{transform_indices = @transform_0, window_bounds = array<i64: 2, 8, 32>}, {transform_indices = @transform_1, window_bounds = array<i64: 2, 8, 32>}, {pipeline_mode = #tpu.pipeline_mode<synchronous>, transform_indices = @transform_2, window_bounds = array<i64: 32, 512>}, {pipeline_mode = #tpu.pipeline_mode<synchronous>, transform_indices = @transform_3, window_bounds = array<i64: 32, 1024>}, {pipeline_mode = #tpu.pipeline_mode<synchronous>, transform_indices = @transform_4, window_bounds = array<i64: 512, 32>}, {pipeline_mode = #tpu.pipeline_mode<synchronous>, transform_indices = @transform_5, window_bounds = array<i64: 32, 64>}, {pipeline_mode = #tpu.pipeline_mode<synchronous>, transform_indices = @transform_6, window_bounds = array<i64: 64, 32>}, {pipeline_mode = #tpu.pipeline_mode<synchronous>, transform_indices = @transform_7, window_bounds = array<i64: 8, 32>}, {pipeline_mode = #tpu.pipeline_mode<synchronous>, transform_indices = @transform_8, window_bounds = array<i64: 1, 64>}, {transform_indices = @transform_9, window_bounds = array<i64: 2, 8, 32>}]} {
    %c0 = arith.constant 0 : index
    %c0_0 = arith.constant 0 : index
    %c0_1 = arith.constant 0 : index
    %0 = vector.load %arg1[%c0, %c0_0, %c0_1] : memref<2x8x32xf32, #tpu.memory_space<vmem>>, vector<2x8x32xf32>
    %1 = vector.shape_cast %0 : vector<2x8x32xf32> to vector<16x32xf32>
    %c0_2 = arith.constant 0 : index
    %c0_3 = arith.constant 0 : index
    %c0_4 = arith.constant 0 : index
    %2 = vector.load %arg2[%c0_2, %c0_3, %c0_4] : memref<2x8x32xf32, #tpu.memory_space<vmem>>, vector<2x8x32xf32>
    %3 = vector.shape_cast %2 : vector<2x8x32xf32> to vector<16x32xf32>
    %c0_5 = arith.constant 0 : index
    %c0_6 = arith.constant 0 : index
    %4 = vector.load %arg8[%c0_5, %c0_6] : memref<8x32xf32, #tpu.memory_space<vmem>>, vector<8x32xf32>
    %5 = vector.extract_strided_slice %4 {offsets = [0, 0], sizes = [1, 32], strides = [1, 1]} : vector<8x32xf32> to vector<1x32xf32>
    %6 = vector.extract_strided_slice %4 {offsets = [1, 0], sizes = [1, 32], strides = [1, 1]} : vector<8x32xf32> to vector<1x32xf32>
    %7 = vector.extract_strided_slice %4 {offsets = [2, 0], sizes = [1, 32], strides = [1, 1]} : vector<8x32xf32> to vector<1x32xf32>
    %8 = vector.extract_strided_slice %4 {offsets = [3, 0], sizes = [1, 32], strides = [1, 1]} : vector<8x32xf32> to vector<1x32xf32>
    %9 = vector.extract_strided_slice %4 {offsets = [4, 0], sizes = [1, 32], strides = [1, 1]} : vector<8x32xf32> to vector<1x32xf32>
    %10 = vector.extract_strided_slice %4 {offsets = [5, 0], sizes = [1, 32], strides = [1, 1]} : vector<8x32xf32> to vector<1x32xf32>
    %11 = vector.extract_strided_slice %4 {offsets = [6, 0], sizes = [1, 32], strides = [1, 1]} : vector<8x32xf32> to vector<1x32xf32>
    %12 = vector.extract_strided_slice %4 {offsets = [7, 0], sizes = [1, 32], strides = [1, 1]} : vector<8x32xf32> to vector<1x32xf32>
    %13 = arith.truncf %1 : vector<16x32xf32> to vector<16x32xbf16>
    %c0_7 = arith.constant 0 : index
    %c0_8 = arith.constant 0 : index
    %14 = vector.load %arg3[%c0_7, %c0_8] : memref<32x512xbf16, #tpu.memory_space<vmem>>, vector<32x512xbf16>
    %cst = arith.constant dense<0.000000e+00> : vector<16x512xf32>
    %15 = tpu.matmul %13, %14, %cst {dimension_numbers = #tpu.dot_dimension_numbers<[1], [0], [0], [1], [0, 0, 1, 1], [], []>} : vector<16x32xbf16>, vector<32x512xbf16>, vector<16x512xf32> -> vector<16x512xf32>
    %16 = arith.truncf %3 : vector<16x32xf32> to vector<16x32xbf16>
    %c0_9 = arith.constant 0 : index
    %c0_10 = arith.constant 0 : index
    %17 = vector.load %arg4[%c0_9, %c0_10] : memref<32x1024xbf16, #tpu.memory_space<vmem>>, vector<32x1024xbf16>
    %cst_11 = arith.constant dense<0.000000e+00> : vector<16x1024xf32>
    %18 = tpu.matmul %16, %17, %cst_11 {dimension_numbers = #tpu.dot_dimension_numbers<[1], [0], [0], [1], [0, 0, 1, 1], [], []>} : vector<16x32xbf16>, vector<32x1024xbf16>, vector<16x1024xf32> -> vector<16x1024xf32>
    %cst_12 = arith.constant 1.250000e-01 : f32
    %19 = vector.broadcast %cst_12 : f32 to vector<16x512xf32>
    %20 = arith.mulf %15, %19 : vector<16x512xf32>
    %21 = vector.shape_cast %20 : vector<16x512xf32> to vector<2x8x512xf32>
    %22 = arith.truncf %21 : vector<2x8x512xf32> to vector<2x8x512xbf16>
    %23 = vector.extract_strided_slice %18 {offsets = [0, 0], sizes = [16, 512], strides = [1, 1]} : vector<16x1024xf32> to vector<16x512xf32>
    %24 = vector.shape_cast %23 : vector<16x512xf32> to vector<2x8x512xf32>
    %25 = arith.truncf %24 : vector<2x8x512xf32> to vector<2x8x512xbf16>
    %26 = vector.extract_strided_slice %18 {offsets = [0, 512], sizes = [16, 512], strides = [1, 1]} : vector<16x1024xf32> to vector<16x512xf32>
    %27 = vector.shape_cast %26 : vector<16x512xf32> to vector<2x8x512xf32>
    %28 = arith.truncf %27 : vector<2x8x512xf32> to vector<2x8x512xbf16>
    %c0_13 = arith.constant 0 : index
    %c0_14 = arith.constant 0 : index
    %29 = vector.load %arg5[%c0_13, %c0_14] : memref<512x32xbf16, #tpu.memory_space<vmem>>, vector<512x32xbf16>
    %cst_15 = arith.constant 0.000000e+00 : f32
    %30 = vector.broadcast %cst_15 : f32 to vector<16x32xf32>
    %31 = vector.extract_strided_slice %22 {offsets = [0, 0, 0], sizes = [2, 8, 64], strides = [1, 1, 1]} : vector<2x8x512xbf16> to vector<2x8x64xbf16>
    %32 = vector.extract_strided_slice %25 {offsets = [0, 0, 0], sizes = [2, 8, 64], strides = [1, 1, 1]} : vector<2x8x512xbf16> to vector<2x8x64xbf16>
    %33 = vector.extract_strided_slice %28 {offsets = [0, 0, 0], sizes = [2, 8, 64], strides = [1, 1, 1]} : vector<2x8x512xbf16> to vector<2x8x64xbf16>
    "tpu.trace_start"() <{level = 10 : i32, message = "bnd,bmd->bnm"}> : () -> ()
    %cst_16 = arith.constant dense<0.000000e+00> : vector<2x8x8xf32>
    %34 = tpu.matmul %31, %32, %cst_16 {dimension_numbers = #tpu.dot_dimension_numbers<[2], [2], [1], [1], [0, 0, 0, 1, 1, 1], [0], [0]>} : vector<2x8x64xbf16>, vector<2x8x64xbf16>, vector<2x8x8xf32> -> vector<2x8x8xf32>
    "tpu.trace_stop"() : () -> ()
    %cst_17 = arith.constant dense<0xFF800000> : vector<2x8xf32>
    %35 = vector.multi_reduction <maximumf>, %34, %cst_17 [2] : vector<2x8x8xf32> to vector<2x8xf32>
    %36 = vector.shape_cast %35 : vector<2x8xf32> to vector<2x8x1xf32>
    %37 = vector.broadcast %36 : vector<2x8x1xf32> to vector<2x8x8xf32>
    %38 = arith.subf %34, %37 : vector<2x8x8xf32>
    %39 = math.exp %38 : vector<2x8x8xf32>
    %cst_18 = arith.constant dense<0.000000e+00> : vector<2x8xf32>
    %40 = vector.multi_reduction <add>, %39, %cst_18 [2] : vector<2x8x8xf32> to vector<2x8xf32>
    %41 = vector.shape_cast %40 : vector<2x8xf32> to vector<2x8x1xf32>
    %42 = tpu.reciprocal %41 {approx = true} : vector<2x8x1xf32> -> vector<2x8x1xf32>
    %43 = vector.broadcast %42 : vector<2x8x1xf32> to vector<2x8x8xf32>
    %44 = arith.mulf %39, %43 : vector<2x8x8xf32>
    %45 = arith.truncf %44 : vector<2x8x8xf32> to vector<2x8x8xbf16>
    "tpu.trace_start"() <{level = 10 : i32, message = "bnm,bmd->bnd"}> : () -> ()
    %cst_19 = arith.constant dense<0.000000e+00> : vector<2x8x64xf32>
    %46 = tpu.matmul %45, %33, %cst_19 {dimension_numbers = #tpu.dot_dimension_numbers<[2], [1], [1], [2], [0, 0, 0, 1, 1, 2], [0], [0]>} : vector<2x8x8xbf16>, vector<2x8x64xbf16>, vector<2x8x64xf32> -> vector<2x8x64xf32>
    "tpu.trace_stop"() : () -> ()
    %47 = vector.shape_cast %46 : vector<2x8x64xf32> to vector<16x64xf32>
    %48 = arith.truncf %47 : vector<16x64xf32> to vector<16x64xbf16>
    %49 = vector.extract_strided_slice %29 {offsets = [0, 0], sizes = [64, 32], strides = [1, 1]} : vector<512x32xbf16> to vector<64x32xbf16>
    %cst_20 = arith.constant dense<0.000000e+00> : vector<16x32xf32>
    %50 = tpu.matmul %48, %49, %cst_20 {dimension_numbers = #tpu.dot_dimension_numbers<[1], [0], [0], [1], [0, 0, 1, 1], [], []>} : vector<16x64xbf16>, vector<64x32xbf16>, vector<16x32xf32> -> vector<16x32xf32>
    %51 = arith.addf %30, %50 : vector<16x32xf32>
    %52 = vector.extract_strided_slice %22 {offsets = [0, 0, 64], sizes = [2, 8, 64], strides = [1, 1, 1]} : vector<2x8x512xbf16> to vector<2x8x64xbf16>
    %53 = vector.extract_strided_slice %25 {offsets = [0, 0, 64], sizes = [2, 8, 64], strides = [1, 1, 1]} : vector<2x8x512xbf16> to vector<2x8x64xbf16>
    %54 = vector.extract_strided_slice %28 {offsets = [0, 0, 64], sizes = [2, 8, 64], strides = [1, 1, 1]} : vector<2x8x512xbf16> to vector<2x8x64xbf16>
    "tpu.trace_start"() <{level = 10 : i32, message = "bnd,bmd->bnm"}> : () -> ()
    %cst_21 = arith.constant dense<0.000000e+00> : vector<2x8x8xf32>
    %55 = tpu.matmul %52, %53, %cst_21 {dimension_numbers = #tpu.dot_dimension_numbers<[2], [2], [1], [1], [0, 0, 0, 1, 1, 1], [0], [0]>} : vector<2x8x64xbf16>, vector<2x8x64xbf16>, vector<2x8x8xf32> -> vector<2x8x8xf32>
    "tpu.trace_stop"() : () -> ()
    %cst_22 = arith.constant dense<0xFF800000> : vector<2x8xf32>
    %56 = vector.multi_reduction <maximumf>, %55, %cst_22 [2] : vector<2x8x8xf32> to vector<2x8xf32>
    %57 = vector.shape_cast %56 : vector<2x8xf32> to vector<2x8x1xf32>
    %58 = vector.broadcast %57 : vector<2x8x1xf32> to vector<2x8x8xf32>
    %59 = arith.subf %55, %58 : vector<2x8x8xf32>
    %60 = math.exp %59 : vector<2x8x8xf32>
    %cst_23 = arith.constant dense<0.000000e+00> : vector<2x8xf32>
    %61 = vector.multi_reduction <add>, %60, %cst_23 [2] : vector<2x8x8xf32> to vector<2x8xf32>
    %62 = vector.shape_cast %61 : vector<2x8xf32> to vector<2x8x1xf32>
    %63 = tpu.reciprocal %62 {approx = true} : vector<2x8x1xf32> -> vector<2x8x1xf32>
    %64 = vector.broadcast %63 : vector<2x8x1xf32> to vector<2x8x8xf32>
    %65 = arith.mulf %60, %64 : vector<2x8x8xf32>
    %66 = arith.truncf %65 : vector<2x8x8xf32> to vector<2x8x8xbf16>
    "tpu.trace_start"() <{level = 10 : i32, message = "bnm,bmd->bnd"}> : () -> ()
    %cst_24 = arith.constant dense<0.000000e+00> : vector<2x8x64xf32>
    %67 = tpu.matmul %66, %54, %cst_24 {dimension_numbers = #tpu.dot_dimension_numbers<[2], [1], [1], [2], [0, 0, 0, 1, 1, 2], [0], [0]>} : vector<2x8x8xbf16>, vector<2x8x64xbf16>, vector<2x8x64xf32> -> vector<2x8x64xf32>
    "tpu.trace_stop"() : () -> ()
    %68 = vector.shape_cast %67 : vector<2x8x64xf32> to vector<16x64xf32>
    %69 = arith.truncf %68 : vector<16x64xf32> to vector<16x64xbf16>
    %70 = vector.extract_strided_slice %29 {offsets = [64, 0], sizes = [64, 32], strides = [1, 1]} : vector<512x32xbf16> to vector<64x32xbf16>
    %cst_25 = arith.constant dense<0.000000e+00> : vector<16x32xf32>
    %71 = tpu.matmul %69, %70, %cst_25 {dimension_numbers = #tpu.dot_dimension_numbers<[1], [0], [0], [1], [0, 0, 1, 1], [], []>} : vector<16x64xbf16>, vector<64x32xbf16>, vector<16x32xf32> -> vector<16x32xf32>
    %72 = arith.addf %51, %71 : vector<16x32xf32>
    %73 = vector.extract_strided_slice %22 {offsets = [0, 0, 128], sizes = [2, 8, 64], strides = [1, 1, 1]} : vector<2x8x512xbf16> to vector<2x8x64xbf16>
    %74 = vector.extract_strided_slice %25 {offsets = [0, 0, 128], sizes = [2, 8, 64], strides = [1, 1, 1]} : vector<2x8x512xbf16> to vector<2x8x64xbf16>
    %75 = vector.extract_strided_slice %28 {offsets = [0, 0, 128], sizes = [2, 8, 64], strides = [1, 1, 1]} : vector<2x8x512xbf16> to vector<2x8x64xbf16>
    "tpu.trace_start"() <{level = 10 : i32, message = "bnd,bmd->bnm"}> : () -> ()
    %cst_26 = arith.constant dense<0.000000e+00> : vector<2x8x8xf32>
    %76 = tpu.matmul %73, %74, %cst_26 {dimension_numbers = #tpu.dot_dimension_numbers<[2], [2], [1], [1], [0, 0, 0, 1, 1, 1], [0], [0]>} : vector<2x8x64xbf16>, vector<2x8x64xbf16>, vector<2x8x8xf32> -> vector<2x8x8xf32>
    "tpu.trace_stop"() : () -> ()
    %cst_27 = arith.constant dense<0xFF800000> : vector<2x8xf32>
    %77 = vector.multi_reduction <maximumf>, %76, %cst_27 [2] : vector<2x8x8xf32> to vector<2x8xf32>
    %78 = vector.shape_cast %77 : vector<2x8xf32> to vector<2x8x1xf32>
    %79 = vector.broadcast %78 : vector<2x8x1xf32> to vector<2x8x8xf32>
    %80 = arith.subf %76, %79 : vector<2x8x8xf32>
    %81 = math.exp %80 : vector<2x8x8xf32>
    %cst_28 = arith.constant dense<0.000000e+00> : vector<2x8xf32>
    %82 = vector.multi_reduction <add>, %81, %cst_28 [2] : vector<2x8x8xf32> to vector<2x8xf32>
    %83 = vector.shape_cast %82 : vector<2x8xf32> to vector<2x8x1xf32>
    %84 = tpu.reciprocal %83 {approx = true} : vector<2x8x1xf32> -> vector<2x8x1xf32>
    %85 = vector.broadcast %84 : vector<2x8x1xf32> to vector<2x8x8xf32>
    %86 = arith.mulf %81, %85 : vector<2x8x8xf32>
    %87 = arith.truncf %86 : vector<2x8x8xf32> to vector<2x8x8xbf16>
    "tpu.trace_start"() <{level = 10 : i32, message = "bnm,bmd->bnd"}> : () -> ()
    %cst_29 = arith.constant dense<0.000000e+00> : vector<2x8x64xf32>
    %88 = tpu.matmul %87, %75, %cst_29 {dimension_numbers = #tpu.dot_dimension_numbers<[2], [1], [1], [2], [0, 0, 0, 1, 1, 2], [0], [0]>} : vector<2x8x8xbf16>, vector<2x8x64xbf16>, vector<2x8x64xf32> -> vector<2x8x64xf32>
    "tpu.trace_stop"() : () -> ()
    %89 = vector.shape_cast %88 : vector<2x8x64xf32> to vector<16x64xf32>
    %90 = arith.truncf %89 : vector<16x64xf32> to vector<16x64xbf16>
    %91 = vector.extract_strided_slice %29 {offsets = [128, 0], sizes = [64, 32], strides = [1, 1]} : vector<512x32xbf16> to vector<64x32xbf16>
    %cst_30 = arith.constant dense<0.000000e+00> : vector<16x32xf32>
    %92 = tpu.matmul %90, %91, %cst_30 {dimension_numbers = #tpu.dot_dimension_numbers<[1], [0], [0], [1], [0, 0, 1, 1], [], []>} : vector<16x64xbf16>, vector<64x32xbf16>, vector<16x32xf32> -> vector<16x32xf32>
    %93 = arith.addf %72, %92 : vector<16x32xf32>
    %94 = vector.extract_strided_slice %22 {offsets = [0, 0, 192], sizes = [2, 8, 64], strides = [1, 1, 1]} : vector<2x8x512xbf16> to vector<2x8x64xbf16>
    %95 = vector.extract_strided_slice %25 {offsets = [0, 0, 192], sizes = [2, 8, 64], strides = [1, 1, 1]} : vector<2x8x512xbf16> to vector<2x8x64xbf16>
    %96 = vector.extract_strided_slice %28 {offsets = [0, 0, 192], sizes = [2, 8, 64], strides = [1, 1, 1]} : vector<2x8x512xbf16> to vector<2x8x64xbf16>
    "tpu.trace_start"() <{level = 10 : i32, message = "bnd,bmd->bnm"}> : () -> ()
    %cst_31 = arith.constant dense<0.000000e+00> : vector<2x8x8xf32>
    %97 = tpu.matmul %94, %95, %cst_31 {dimension_numbers = #tpu.dot_dimension_numbers<[2], [2], [1], [1], [0, 0, 0, 1, 1, 1], [0], [0]>} : vector<2x8x64xbf16>, vector<2x8x64xbf16>, vector<2x8x8xf32> -> vector<2x8x8xf32>
    "tpu.trace_stop"() : () -> ()
    %cst_32 = arith.constant dense<0xFF800000> : vector<2x8xf32>
    %98 = vector.multi_reduction <maximumf>, %97, %cst_32 [2] : vector<2x8x8xf32> to vector<2x8xf32>
    %99 = vector.shape_cast %98 : vector<2x8xf32> to vector<2x8x1xf32>
    %100 = vector.broadcast %99 : vector<2x8x1xf32> to vector<2x8x8xf32>
    %101 = arith.subf %97, %100 : vector<2x8x8xf32>
    %102 = math.exp %101 : vector<2x8x8xf32>
    %cst_33 = arith.constant dense<0.000000e+00> : vector<2x8xf32>
    %103 = vector.multi_reduction <add>, %102, %cst_33 [2] : vector<2x8x8xf32> to vector<2x8xf32>
    %104 = vector.shape_cast %103 : vector<2x8xf32> to vector<2x8x1xf32>
    %105 = tpu.reciprocal %104 {approx = true} : vector<2x8x1xf32> -> vector<2x8x1xf32>
    %106 = vector.broadcast %105 : vector<2x8x1xf32> to vector<2x8x8xf32>
    %107 = arith.mulf %102, %106 : vector<2x8x8xf32>
    %108 = arith.truncf %107 : vector<2x8x8xf32> to vector<2x8x8xbf16>
    "tpu.trace_start"() <{level = 10 : i32, message = "bnm,bmd->bnd"}> : () -> ()
    %cst_34 = arith.constant dense<0.000000e+00> : vector<2x8x64xf32>
    %109 = tpu.matmul %108, %96, %cst_34 {dimension_numbers = #tpu.dot_dimension_numbers<[2], [1], [1], [2], [0, 0, 0, 1, 1, 2], [0], [0]>} : vector<2x8x8xbf16>, vector<2x8x64xbf16>, vector<2x8x64xf32> -> vector<2x8x64xf32>
    "tpu.trace_stop"() : () -> ()
    %110 = vector.shape_cast %109 : vector<2x8x64xf32> to vector<16x64xf32>
    %111 = arith.truncf %110 : vector<16x64xf32> to vector<16x64xbf16>
    %112 = vector.extract_strided_slice %29 {offsets = [192, 0], sizes = [64, 32], strides = [1, 1]} : vector<512x32xbf16> to vector<64x32xbf16>
    %cst_35 = arith.constant dense<0.000000e+00> : vector<16x32xf32>
    %113 = tpu.matmul %111, %112, %cst_35 {dimension_numbers = #tpu.dot_dimension_numbers<[1], [0], [0], [1], [0, 0, 1, 1], [], []>} : vector<16x64xbf16>, vector<64x32xbf16>, vector<16x32xf32> -> vector<16x32xf32>
    %114 = arith.addf %93, %113 : vector<16x32xf32>
    %115 = vector.extract_strided_slice %22 {offsets = [0, 0, 256], sizes = [2, 8, 64], strides = [1, 1, 1]} : vector<2x8x512xbf16> to vector<2x8x64xbf16>
    %116 = vector.extract_strided_slice %25 {offsets = [0, 0, 256], sizes = [2, 8, 64], strides = [1, 1, 1]} : vector<2x8x512xbf16> to vector<2x8x64xbf16>
    %117 = vector.extract_strided_slice %28 {offsets = [0, 0, 256], sizes = [2, 8, 64], strides = [1, 1, 1]} : vector<2x8x512xbf16> to vector<2x8x64xbf16>
    "tpu.trace_start"() <{level = 10 : i32, message = "bnd,bmd->bnm"}> : () -> ()
    %cst_36 = arith.constant dense<0.000000e+00> : vector<2x8x8xf32>
    %118 = tpu.matmul %115, %116, %cst_36 {dimension_numbers = #tpu.dot_dimension_numbers<[2], [2], [1], [1], [0, 0, 0, 1, 1, 1], [0], [0]>} : vector<2x8x64xbf16>, vector<2x8x64xbf16>, vector<2x8x8xf32> -> vector<2x8x8xf32>
    "tpu.trace_stop"() : () -> ()
    %cst_37 = arith.constant dense<0xFF800000> : vector<2x8xf32>
    %119 = vector.multi_reduction <maximumf>, %118, %cst_37 [2] : vector<2x8x8xf32> to vector<2x8xf32>
    %120 = vector.shape_cast %119 : vector<2x8xf32> to vector<2x8x1xf32>
    %121 = vector.broadcast %120 : vector<2x8x1xf32> to vector<2x8x8xf32>
    %122 = arith.subf %118, %121 : vector<2x8x8xf32>
    %123 = math.exp %122 : vector<2x8x8xf32>
    %cst_38 = arith.constant dense<0.000000e+00> : vector<2x8xf32>
    %124 = vector.multi_reduction <add>, %123, %cst_38 [2] : vector<2x8x8xf32> to vector<2x8xf32>
    %125 = vector.shape_cast %124 : vector<2x8xf32> to vector<2x8x1xf32>
    %126 = tpu.reciprocal %125 {approx = true} : vector<2x8x1xf32> -> vector<2x8x1xf32>
    %127 = vector.broadcast %126 : vector<2x8x1xf32> to vector<2x8x8xf32>
    %128 = arith.mulf %123, %127 : vector<2x8x8xf32>
    %129 = arith.truncf %128 : vector<2x8x8xf32> to vector<2x8x8xbf16>
    "tpu.trace_start"() <{level = 10 : i32, message = "bnm,bmd->bnd"}> : () -> ()
    %cst_39 = arith.constant dense<0.000000e+00> : vector<2x8x64xf32>
    %130 = tpu.matmul %129, %117, %cst_39 {dimension_numbers = #tpu.dot_dimension_numbers<[2], [1], [1], [2], [0, 0, 0, 1, 1, 2], [0], [0]>} : vector<2x8x8xbf16>, vector<2x8x64xbf16>, vector<2x8x64xf32> -> vector<2x8x64xf32>
    "tpu.trace_stop"() : () -> ()
    %131 = vector.shape_cast %130 : vector<2x8x64xf32> to vector<16x64xf32>
    %132 = arith.truncf %131 : vector<16x64xf32> to vector<16x64xbf16>
    %133 = vector.extract_strided_slice %29 {offsets = [256, 0], sizes = [64, 32], strides = [1, 1]} : vector<512x32xbf16> to vector<64x32xbf16>
    %cst_40 = arith.constant dense<0.000000e+00> : vector<16x32xf32>
    %134 = tpu.matmul %132, %133, %cst_40 {dimension_numbers = #tpu.dot_dimension_numbers<[1], [0], [0], [1], [0, 0, 1, 1], [], []>} : vector<16x64xbf16>, vector<64x32xbf16>, vector<16x32xf32> -> vector<16x32xf32>
    %135 = arith.addf %114, %134 : vector<16x32xf32>
    %136 = vector.extract_strided_slice %22 {offsets = [0, 0, 320], sizes = [2, 8, 64], strides = [1, 1, 1]} : vector<2x8x512xbf16> to vector<2x8x64xbf16>
    %137 = vector.extract_strided_slice %25 {offsets = [0, 0, 320], sizes = [2, 8, 64], strides = [1, 1, 1]} : vector<2x8x512xbf16> to vector<2x8x64xbf16>
    %138 = vector.extract_strided_slice %28 {offsets = [0, 0, 320], sizes = [2, 8, 64], strides = [1, 1, 1]} : vector<2x8x512xbf16> to vector<2x8x64xbf16>
    "tpu.trace_start"() <{level = 10 : i32, message = "bnd,bmd->bnm"}> : () -> ()
    %cst_41 = arith.constant dense<0.000000e+00> : vector<2x8x8xf32>
    %139 = tpu.matmul %136, %137, %cst_41 {dimension_numbers = #tpu.dot_dimension_numbers<[2], [2], [1], [1], [0, 0, 0, 1, 1, 1], [0], [0]>} : vector<2x8x64xbf16>, vector<2x8x64xbf16>, vector<2x8x8xf32> -> vector<2x8x8xf32>
    "tpu.trace_stop"() : () -> ()
    %cst_42 = arith.constant dense<0xFF800000> : vector<2x8xf32>
    %140 = vector.multi_reduction <maximumf>, %139, %cst_42 [2] : vector<2x8x8xf32> to vector<2x8xf32>
    %141 = vector.shape_cast %140 : vector<2x8xf32> to vector<2x8x1xf32>
    %142 = vector.broadcast %141 : vector<2x8x1xf32> to vector<2x8x8xf32>
    %143 = arith.subf %139, %142 : vector<2x8x8xf32>
    %144 = math.exp %143 : vector<2x8x8xf32>
    %cst_43 = arith.constant dense<0.000000e+00> : vector<2x8xf32>
    %145 = vector.multi_reduction <add>, %144, %cst_43 [2] : vector<2x8x8xf32> to vector<2x8xf32>
    %146 = vector.shape_cast %145 : vector<2x8xf32> to vector<2x8x1xf32>
    %147 = tpu.reciprocal %146 {approx = true} : vector<2x8x1xf32> -> vector<2x8x1xf32>
    %148 = vector.broadcast %147 : vector<2x8x1xf32> to vector<2x8x8xf32>
    %149 = arith.mulf %144, %148 : vector<2x8x8xf32>
    %150 = arith.truncf %149 : vector<2x8x8xf32> to vector<2x8x8xbf16>
    "tpu.trace_start"() <{level = 10 : i32, message = "bnm,bmd->bnd"}> : () -> ()
    %cst_44 = arith.constant dense<0.000000e+00> : vector<2x8x64xf32>
    %151 = tpu.matmul %150, %138, %cst_44 {dimension_numbers = #tpu.dot_dimension_numbers<[2], [1], [1], [2], [0, 0, 0, 1, 1, 2], [0], [0]>} : vector<2x8x8xbf16>, vector<2x8x64xbf16>, vector<2x8x64xf32> -> vector<2x8x64xf32>
    "tpu.trace_stop"() : () -> ()
    %152 = vector.shape_cast %151 : vector<2x8x64xf32> to vector<16x64xf32>
    %153 = arith.truncf %152 : vector<16x64xf32> to vector<16x64xbf16>
    %154 = vector.extract_strided_slice %29 {offsets = [320, 0], sizes = [64, 32], strides = [1, 1]} : vector<512x32xbf16> to vector<64x32xbf16>
    %cst_45 = arith.constant dense<0.000000e+00> : vector<16x32xf32>
    %155 = tpu.matmul %153, %154, %cst_45 {dimension_numbers = #tpu.dot_dimension_numbers<[1], [0], [0], [1], [0, 0, 1, 1], [], []>} : vector<16x64xbf16>, vector<64x32xbf16>, vector<16x32xf32> -> vector<16x32xf32>
    %156 = arith.addf %135, %155 : vector<16x32xf32>
    %157 = vector.extract_strided_slice %22 {offsets = [0, 0, 384], sizes = [2, 8, 64], strides = [1, 1, 1]} : vector<2x8x512xbf16> to vector<2x8x64xbf16>
    %158 = vector.extract_strided_slice %25 {offsets = [0, 0, 384], sizes = [2, 8, 64], strides = [1, 1, 1]} : vector<2x8x512xbf16> to vector<2x8x64xbf16>
    %159 = vector.extract_strided_slice %28 {offsets = [0, 0, 384], sizes = [2, 8, 64], strides = [1, 1, 1]} : vector<2x8x512xbf16> to vector<2x8x64xbf16>
    "tpu.trace_start"() <{level = 10 : i32, message = "bnd,bmd->bnm"}> : () -> ()
    %cst_46 = arith.constant dense<0.000000e+00> : vector<2x8x8xf32>
    %160 = tpu.matmul %157, %158, %cst_46 {dimension_numbers = #tpu.dot_dimension_numbers<[2], [2], [1], [1], [0, 0, 0, 1, 1, 1], [0], [0]>} : vector<2x8x64xbf16>, vector<2x8x64xbf16>, vector<2x8x8xf32> -> vector<2x8x8xf32>
    "tpu.trace_stop"() : () -> ()
    %cst_47 = arith.constant dense<0xFF800000> : vector<2x8xf32>
    %161 = vector.multi_reduction <maximumf>, %160, %cst_47 [2] : vector<2x8x8xf32> to vector<2x8xf32>
    %162 = vector.shape_cast %161 : vector<2x8xf32> to vector<2x8x1xf32>
    %163 = vector.broadcast %162 : vector<2x8x1xf32> to vector<2x8x8xf32>
    %164 = arith.subf %160, %163 : vector<2x8x8xf32>
    %165 = math.exp %164 : vector<2x8x8xf32>
    %cst_48 = arith.constant dense<0.000000e+00> : vector<2x8xf32>
    %166 = vector.multi_reduction <add>, %165, %cst_48 [2] : vector<2x8x8xf32> to vector<2x8xf32>
    %167 = vector.shape_cast %166 : vector<2x8xf32> to vector<2x8x1xf32>
    %168 = tpu.reciprocal %167 {approx = true} : vector<2x8x1xf32> -> vector<2x8x1xf32>
    %169 = vector.broadcast %168 : vector<2x8x1xf32> to vector<2x8x8xf32>
    %170 = arith.mulf %165, %169 : vector<2x8x8xf32>
    %171 = arith.truncf %170 : vector<2x8x8xf32> to vector<2x8x8xbf16>
    "tpu.trace_start"() <{level = 10 : i32, message = "bnm,bmd->bnd"}> : () -> ()
    %cst_49 = arith.constant dense<0.000000e+00> : vector<2x8x64xf32>
    %172 = tpu.matmul %171, %159, %cst_49 {dimension_numbers = #tpu.dot_dimension_numbers<[2], [1], [1], [2], [0, 0, 0, 1, 1, 2], [0], [0]>} : vector<2x8x8xbf16>, vector<2x8x64xbf16>, vector<2x8x64xf32> -> vector<2x8x64xf32>
    "tpu.trace_stop"() : () -> ()
    %173 = vector.shape_cast %172 : vector<2x8x64xf32> to vector<16x64xf32>
    %174 = arith.truncf %173 : vector<16x64xf32> to vector<16x64xbf16>
    %175 = vector.extract_strided_slice %29 {offsets = [384, 0], sizes = [64, 32], strides = [1, 1]} : vector<512x32xbf16> to vector<64x32xbf16>
    %cst_50 = arith.constant dense<0.000000e+00> : vector<16x32xf32>
    %176 = tpu.matmul %174, %175, %cst_50 {dimension_numbers = #tpu.dot_dimension_numbers<[1], [0], [0], [1], [0, 0, 1, 1], [], []>} : vector<16x64xbf16>, vector<64x32xbf16>, vector<16x32xf32> -> vector<16x32xf32>
    %177 = arith.addf %156, %176 : vector<16x32xf32>
    %178 = vector.extract_strided_slice %22 {offsets = [0, 0, 448], sizes = [2, 8, 64], strides = [1, 1, 1]} : vector<2x8x512xbf16> to vector<2x8x64xbf16>
    %179 = vector.extract_strided_slice %25 {offsets = [0, 0, 448], sizes = [2, 8, 64], strides = [1, 1, 1]} : vector<2x8x512xbf16> to vector<2x8x64xbf16>
    %180 = vector.extract_strided_slice %28 {offsets = [0, 0, 448], sizes = [2, 8, 64], strides = [1, 1, 1]} : vector<2x8x512xbf16> to vector<2x8x64xbf16>
    "tpu.trace_start"() <{level = 10 : i32, message = "bnd,bmd->bnm"}> : () -> ()
    %cst_51 = arith.constant dense<0.000000e+00> : vector<2x8x8xf32>
    %181 = tpu.matmul %178, %179, %cst_51 {dimension_numbers = #tpu.dot_dimension_numbers<[2], [2], [1], [1], [0, 0, 0, 1, 1, 1], [0], [0]>} : vector<2x8x64xbf16>, vector<2x8x64xbf16>, vector<2x8x8xf32> -> vector<2x8x8xf32>
    "tpu.trace_stop"() : () -> ()
    %cst_52 = arith.constant dense<0xFF800000> : vector<2x8xf32>
    %182 = vector.multi_reduction <maximumf>, %181, %cst_52 [2] : vector<2x8x8xf32> to vector<2x8xf32>
    %183 = vector.shape_cast %182 : vector<2x8xf32> to vector<2x8x1xf32>
    %184 = vector.broadcast %183 : vector<2x8x1xf32> to vector<2x8x8xf32>
    %185 = arith.subf %181, %184 : vector<2x8x8xf32>
    %186 = math.exp %185 : vector<2x8x8xf32>
    %cst_53 = arith.constant dense<0.000000e+00> : vector<2x8xf32>
    %187 = vector.multi_reduction <add>, %186, %cst_53 [2] : vector<2x8x8xf32> to vector<2x8xf32>
    %188 = vector.shape_cast %187 : vector<2x8xf32> to vector<2x8x1xf32>
    %189 = tpu.reciprocal %188 {approx = true} : vector<2x8x1xf32> -> vector<2x8x1xf32>
    %190 = vector.broadcast %189 : vector<2x8x1xf32> to vector<2x8x8xf32>
    %191 = arith.mulf %186, %190 : vector<2x8x8xf32>
    %192 = arith.truncf %191 : vector<2x8x8xf32> to vector<2x8x8xbf16>
    "tpu.trace_start"() <{level = 10 : i32, message = "bnm,bmd->bnd"}> : () -> ()
    %cst_54 = arith.constant dense<0.000000e+00> : vector<2x8x64xf32>
    %193 = tpu.matmul %192, %180, %cst_54 {dimension_numbers = #tpu.dot_dimension_numbers<[2], [1], [1], [2], [0, 0, 0, 1, 1, 2], [0], [0]>} : vector<2x8x8xbf16>, vector<2x8x64xbf16>, vector<2x8x64xf32> -> vector<2x8x64xf32>
    "tpu.trace_stop"() : () -> ()
    %194 = vector.shape_cast %193 : vector<2x8x64xf32> to vector<16x64xf32>
    %195 = arith.truncf %194 : vector<16x64xf32> to vector<16x64xbf16>
    %196 = vector.extract_strided_slice %29 {offsets = [448, 0], sizes = [64, 32], strides = [1, 1]} : vector<512x32xbf16> to vector<64x32xbf16>
    %cst_55 = arith.constant dense<0.000000e+00> : vector<16x32xf32>
    %197 = tpu.matmul %195, %196, %cst_55 {dimension_numbers = #tpu.dot_dimension_numbers<[1], [0], [0], [1], [0, 0, 1, 1], [], []>} : vector<16x64xbf16>, vector<64x32xbf16>, vector<16x32xf32> -> vector<16x32xf32>
    %198 = arith.addf %177, %197 : vector<16x32xf32>
    %199 = vector.broadcast %5 : vector<1x32xf32> to vector<16x32xf32>
    %200 = arith.addf %198, %199 : vector<16x32xf32>
    %201 = arith.addf %200, %1 : vector<16x32xf32>
    %cst_56 = arith.constant dense<0.000000e+00> : vector<16xf32>
    %202 = vector.multi_reduction <add>, %201, %cst_56 [1] : vector<16x32xf32> to vector<16xf32>
    %203 = vector.shape_cast %202 : vector<16xf32> to vector<16x1xf32>
    %cst_57 = arith.constant 3.200000e+01 : f32
    %204 = vector.broadcast %cst_57 : f32 to vector<16x1xf32>
    %205 = arith.divf %203, %204 : vector<16x1xf32>
    %206 = vector.broadcast %205 : vector<16x1xf32> to vector<16x32xf32>
    %207 = arith.subf %201, %206 : vector<16x32xf32>
    %208 = arith.mulf %207, %207 : vector<16x32xf32>
    %cst_58 = arith.constant dense<0.000000e+00> : vector<16xf32>
    %209 = vector.multi_reduction <add>, %208, %cst_58 [1] : vector<16x32xf32> to vector<16xf32>
    %210 = vector.shape_cast %209 : vector<16xf32> to vector<16x1xf32>
    %cst_59 = arith.constant 3.200000e+01 : f32
    %211 = vector.broadcast %cst_59 : f32 to vector<16x1xf32>
    %212 = arith.divf %210, %211 : vector<16x1xf32>
    %213 = vector.broadcast %205 : vector<16x1xf32> to vector<16x32xf32>
    %214 = arith.subf %201, %213 : vector<16x32xf32>
    %cst_60 = arith.constant 9.99999974E-6 : f32
    %215 = vector.broadcast %cst_60 : f32 to vector<16x1xf32>
    %216 = arith.addf %212, %215 : vector<16x1xf32>
    %217 = math.rsqrt %216 : vector<16x1xf32>
    %218 = vector.broadcast %217 : vector<16x1xf32> to vector<16x32xf32>
    %219 = arith.mulf %214, %218 : vector<16x32xf32>
    %220 = vector.broadcast %7 : vector<1x32xf32> to vector<16x32xf32>
    %221 = arith.mulf %219, %220 : vector<16x32xf32>
    %222 = vector.broadcast %8 : vector<1x32xf32> to vector<16x32xf32>
    %223 = arith.addf %221, %222 : vector<16x32xf32>
    %cst_61 = arith.constant dense<0.000000e+00> : vector<16xf32>
    %224 = vector.multi_reduction <add>, %223, %cst_61 [1] : vector<16x32xf32> to vector<16xf32>
    %225 = vector.shape_cast %224 : vector<16xf32> to vector<16x1xf32>
    %cst_62 = arith.constant 3.200000e+01 : f32
    %226 = vector.broadcast %cst_62 : f32 to vector<16x1xf32>
    %227 = arith.divf %225, %226 : vector<16x1xf32>
    %228 = vector.broadcast %227 : vector<16x1xf32> to vector<16x32xf32>
    %229 = arith.subf %223, %228 : vector<16x32xf32>
    %230 = arith.mulf %229, %229 : vector<16x32xf32>
    %cst_63 = arith.constant dense<0.000000e+00> : vector<16xf32>
    %231 = vector.multi_reduction <add>, %230, %cst_63 [1] : vector<16x32xf32> to vector<16xf32>
    %232 = vector.shape_cast %231 : vector<16xf32> to vector<16x1xf32>
    %cst_64 = arith.constant 3.200000e+01 : f32
    %233 = vector.broadcast %cst_64 : f32 to vector<16x1xf32>
    %234 = arith.divf %232, %233 : vector<16x1xf32>
    %235 = vector.broadcast %227 : vector<16x1xf32> to vector<16x32xf32>
    %236 = arith.subf %223, %235 : vector<16x32xf32>
    %cst_65 = arith.constant 9.99999974E-6 : f32
    %237 = vector.broadcast %cst_65 : f32 to vector<16x1xf32>
    %238 = arith.addf %234, %237 : vector<16x1xf32>
    %239 = math.rsqrt %238 : vector<16x1xf32>
    %240 = vector.broadcast %239 : vector<16x1xf32> to vector<16x32xf32>
    %241 = arith.mulf %236, %240 : vector<16x32xf32>
    %242 = vector.broadcast %9 : vector<1x32xf32> to vector<16x32xf32>
    %243 = arith.mulf %241, %242 : vector<16x32xf32>
    %244 = vector.broadcast %10 : vector<1x32xf32> to vector<16x32xf32>
    %245 = arith.addf %243, %244 : vector<16x32xf32>
    %246 = arith.truncf %245 : vector<16x32xf32> to vector<16x32xbf16>
    %c0_66 = arith.constant 0 : index
    %c0_67 = arith.constant 0 : index
    %247 = vector.load %arg6[%c0_66, %c0_67] : memref<32x64xbf16, #tpu.memory_space<vmem>>, vector<32x64xbf16>
    %cst_68 = arith.constant dense<0.000000e+00> : vector<16x64xf32>
    %248 = tpu.matmul %246, %247, %cst_68 {dimension_numbers = #tpu.dot_dimension_numbers<[1], [0], [0], [1], [0, 0, 1, 1], [], []>} : vector<16x32xbf16>, vector<32x64xbf16>, vector<16x64xf32> -> vector<16x64xf32>
    %c0_69 = arith.constant 0 : index
    %c0_70 = arith.constant 0 : index
    %249 = vector.load %arg9[%c0_69, %c0_70] : memref<1x64xf32, #tpu.memory_space<vmem>>, vector<1x64xf32>
    %250 = vector.broadcast %249 : vector<1x64xf32> to vector<16x64xf32>
    %251 = arith.addf %248, %250 : vector<16x64xf32>
    %cst_71 = arith.constant 5.000000e-01 : f32
    %252 = vector.broadcast %cst_71 : f32 to vector<16x64xf32>
    %253 = arith.mulf %252, %251 : vector<16x64xf32>
    %cst_72 = arith.constant 0.707106769 : f32
    %254 = vector.broadcast %cst_72 : f32 to vector<16x64xf32>
    %255 = arith.mulf %251, %254 : vector<16x64xf32>
    %256 = math.erf %255 : vector<16x64xf32>
    %cst_73 = arith.constant 1.000000e+00 : f32
    %257 = vector.broadcast %cst_73 : f32 to vector<16x64xf32>
    %258 = arith.addf %257, %256 : vector<16x64xf32>
    %259 = arith.mulf %253, %258 : vector<16x64xf32>
    %260 = arith.truncf %259 : vector<16x64xf32> to vector<16x64xbf16>
    %c0_74 = arith.constant 0 : index
    %c0_75 = arith.constant 0 : index
    %261 = vector.load %arg7[%c0_74, %c0_75] : memref<64x32xbf16, #tpu.memory_space<vmem>>, vector<64x32xbf16>
    %cst_76 = arith.constant dense<0.000000e+00> : vector<16x32xf32>
    %262 = tpu.matmul %260, %261, %cst_76 {dimension_numbers = #tpu.dot_dimension_numbers<[1], [0], [0], [1], [0, 0, 1, 1], [], []>} : vector<16x64xbf16>, vector<64x32xbf16>, vector<16x32xf32> -> vector<16x32xf32>
    %263 = vector.broadcast %6 : vector<1x32xf32> to vector<16x32xf32>
    %264 = arith.addf %262, %263 : vector<16x32xf32>
    %265 = arith.addf %264, %223 : vector<16x32xf32>
    %cst_77 = arith.constant dense<0.000000e+00> : vector<16xf32>
    %266 = vector.multi_reduction <add>, %265, %cst_77 [1] : vector<16x32xf32> to vector<16xf32>
    %267 = vector.shape_cast %266 : vector<16xf32> to vector<16x1xf32>
    %cst_78 = arith.constant 3.200000e+01 : f32
    %268 = vector.broadcast %cst_78 : f32 to vector<16x1xf32>
    %269 = arith.divf %267, %268 : vector<16x1xf32>
    %270 = vector.broadcast %269 : vector<16x1xf32> to vector<16x32xf32>
    %271 = arith.subf %265, %270 : vector<16x32xf32>
    %272 = arith.mulf %271, %271 : vector<16x32xf32>
    %cst_79 = arith.constant dense<0.000000e+00> : vector<16xf32>
    %273 = vector.multi_reduction <add>, %272, %cst_79 [1] : vector<16x32xf32> to vector<16xf32>
    %274 = vector.shape_cast %273 : vector<16xf32> to vector<16x1xf32>
    %cst_80 = arith.constant 3.200000e+01 : f32
    %275 = vector.broadcast %cst_80 : f32 to vector<16x1xf32>
    %276 = arith.divf %274, %275 : vector<16x1xf32>
    %277 = vector.broadcast %269 : vector<16x1xf32> to vector<16x32xf32>
    %278 = arith.subf %265, %277 : vector<16x32xf32>
    %cst_81 = arith.constant 9.99999974E-6 : f32
    %279 = vector.broadcast %cst_81 : f32 to vector<16x1xf32>
    %280 = arith.addf %276, %279 : vector<16x1xf32>
    %281 = math.rsqrt %280 : vector<16x1xf32>
    %282 = vector.broadcast %281 : vector<16x1xf32> to vector<16x32xf32>
    %283 = arith.mulf %278, %282 : vector<16x32xf32>
    %284 = vector.broadcast %11 : vector<1x32xf32> to vector<16x32xf32>
    %285 = arith.mulf %283, %284 : vector<16x32xf32>
    %286 = vector.broadcast %12 : vector<1x32xf32> to vector<16x32xf32>
    %287 = arith.addf %285, %286 : vector<16x32xf32>
    %288 = vector.shape_cast %287 : vector<16x32xf32> to vector<2x8x32xf32>
    %c0_82 = arith.constant 0 : index
    %c0_83 = arith.constant 0 : index
    %c0_84 = arith.constant 0 : index
    %289 = vector.load %arg10[%c0_82, %c0_83, %c0_84] : memref<2x8x32xf32, #tpu.memory_space<vmem>>, vector<2x8x32xf32>
    tpu.vector_store %arg10[%c0_82, %c0_83, %c0_84], %288 {strides = array<i32>} : memref<2x8x32xf32, #tpu.memory_space<vmem>>, vector<2x8x32xf32>,
    return
  }
  func.func @transform_0(%arg0: i32) -> (i32, i32, i32) {
    %c0_i32 = arith.constant 0 : i32
    %c0_i32_0 = arith.constant 0 : i32
    %c0_i32_1 = arith.constant 0 : i32
    return %arg0, %c0_i32, %c0_i32_0 : i32, i32, i32
  }
  func.func @transform_1(%arg0: i32) -> (i32, i32, i32) {
    %c0_i32 = arith.constant 0 : i32
    %c0_i32_0 = arith.constant 0 : i32
    %c0_i32_1 = arith.constant 0 : i32
    return %arg0, %c0_i32, %c0_i32_0 : i32, i32, i32
  }
  func.func @transform_2(%arg0: i32) -> (i32, i32) {
    %c0_i32 = arith.constant 0 : i32
    %c0_i32_0 = arith.constant 0 : i32
    %c0_i32_1 = arith.constant 0 : i32
    return %c0_i32, %c0_i32_0 : i32, i32
  }
  func.func @transform_3(%arg0: i32) -> (i32, i32) {
    %c0_i32 = arith.constant 0 : i32
    %c0_i32_0 = arith.constant 0 : i32
    %c0_i32_1 = arith.constant 0 : i32
    return %c0_i32, %c0_i32_0 : i32, i32
  }
  func.func @transform_4(%arg0: i32) -> (i32, i32) {
    %c0_i32 = arith.constant 0 : i32
    %c0_i32_0 = arith.constant 0 : i32
    %c0_i32_1 = arith.constant 0 : i32
    return %c0_i32, %c0_i32_0 : i32, i32
  }
  func.func @transform_5(%arg0: i32) -> (i32, i32) {
    %c0_i32 = arith.constant 0 : i32
    %c0_i32_0 = arith.constant 0 : i32
    %c0_i32_1 = arith.constant 0 : i32
    return %c0_i32, %c0_i32_0 : i32, i32
  }
  func.func @transform_6(%arg0: i32) -> (i32, i32) {
    %c0_i32 = arith.constant 0 : i32
    %c0_i32_0 = arith.constant 0 : i32
    %c0_i32_1 = arith.constant 0 : i32
    return %c0_i32, %c0_i32_0 : i32, i32
  }
  func.func @transform_7(%arg0: i32) -> (i32, i32) {
    %c0_i32 = arith.constant 0 : i32
    %c0_i32_0 = arith.constant 0 : i32
    %c0_i32_1 = arith.constant 0 : i32
    return %c0_i32, %c0_i32_0 : i32, i32
  }
  func.func @transform_8(%arg0: i32) -> (i32, i32) {
    %c0_i32 = arith.constant 0 : i32
    %c0_i32_0 = arith.constant 0 : i32
    %c0_i32_1 = arith.constant 0 : i32
    return %c0_i32, %c0_i32_0 : i32, i32
  }
  func.func @transform_9(%arg0: i32) -> (i32, i32, i32) {
    %c0_i32 = arith.constant 0 : i32
    %c0_i32_0 = arith.constant 0 : i32
    %c0_i32_1 = arith.constant 0 : i32
    return %arg0, %c0_i32, %c0_i32_0 : i32, i32, i32
  }
}

</mosaic_0001>

<llo_original>
// kernel: tpu_custom_call.1
$region0: #{tpu_custom_call.1}
  #allocation0 [shape = 'u32[]', space=smem, size = 0x4, offset = 0x4, fixed_abs, tag = 'smem constant byte address 0x4 - core index']
  #allocation1 [shape = 'u32[144,128]{1,0:T(1,128)}', space=vmem, size = 0x12000, scoped, tag = 'internal scratch']
  %s0 = inlined_call_operand.vmem [shape: f32[2,8,32], index: 0, kind: input, shape index: {}]
  %s1 = inlined_call_operand.vmem [shape: f32[2,8,32], index: 1, kind: input, shape index: {}]
  %s2 = inlined_call_operand.vmem [shape: bf16[32,512], index: 2, kind: input, shape index: {}]
  %s3 = inlined_call_operand.vmem [shape: bf16[32,1024], index: 3, kind: input, shape index: {}]
  %s4 = inlined_call_operand.vmem [shape: bf16[512,32], index: 4, kind: input, shape index: {}]
  %s5 = inlined_call_operand.vmem [shape: bf16[32,64], index: 5, kind: input, shape index: {}]
  %s6 = inlined_call_operand.vmem [shape: bf16[64,32], index: 6, kind: input, shape index: {}]
  %s7 = inlined_call_operand.vmem [shape: f32[8,32], index: 7, kind: input, shape index: {}]
  %s8 = inlined_call_operand.vmem [shape: f32[1,64], index: 8, kind: input, shape index: {}]
  %s9 = inlined_call_operand.hbm [shape: f32[2,8,32], index: 9, kind: output, shape index: {}]
  %s10 = sld [smem:[#allocation0]]
  $region46: #{tpu_custom_call.1} parent=0
    _
  %s12 = ssub.s32 1, %s10
  %s13 = scalar_select 0, %s12, %s10
  $region1: #{tpu_custom_call.1} parent=0
    #allocation2 [shape = 'u8[8192]{0}', space=vmem, size = 0x2000, scoped, tag = 'output window, operand 0, single buffered']
    #allocation3 [shape = 's32[1]{0}', space=sflag, size = 0x4, scoped, tag = 'scoped memory for tpu_custom_call.1']
    %14 = vsyncpa [#allocation3], 0
    // Predicated region
    $region2: #{tpu_custom_call.1} parent=1 // pred_check
      _
    $region3: #{tpu_custom_call.1} parent=1 // pred_check_branch
      %16 = sbr.rel (0) target = $region5
    $region4: #{tpu_custom_call.1} parent=1 // pred_region
      _
    $region5: #{tpu_custom_call.1} parent=1 // pred_fallthru
      _
    // Predicated region
    $region6: #{tpu_custom_call.1} parent=1 // pred_check
      _
    $region7: #{tpu_custom_call.1} parent=1 // pred_check_branch
      %18 = sbr.rel (0) target = $region9
    $region8: #{tpu_custom_call.1} parent=1 // pred_region
      _
    $region9: #{tpu_custom_call.1} parent=1 // pred_fallthru
      _
    // Predicated region
    $region10: #{tpu_custom_call.1} parent=1 // pred_check
      _
    $region11: #{tpu_custom_call.1} parent=1 // pred_check_branch
      %20 = sbr.rel (0) target = $region13
    $region12: #{tpu_custom_call.1} parent=1 // pred_region
      _
    $region13: #{tpu_custom_call.1} parent=1 // pred_fallthru
      _
    // Predicated region
    $region14: #{tpu_custom_call.1} parent=1 // pred_check
      _
    $region15: #{tpu_custom_call.1} parent=1 // pred_check_branch
      %22 = sbr.rel (0) target = $region17
    $region16: #{tpu_custom_call.1} parent=1 // pred_region
      _
    $region17: #{tpu_custom_call.1} parent=1 // pred_fallthru
      _
    // Predicated region
    $region18: #{tpu_custom_call.1} parent=1 // pred_check
      _
    $region19: #{tpu_custom_call.1} parent=1 // pred_check_branch
      %24 = sbr.rel (0) target = $region21
    $region20: #{tpu_custom_call.1} parent=1 // pred_region
      _
    $region21: #{tpu_custom_call.1} parent=1 // pred_fallthru
      _
    // Predicated region
    $region22: #{tpu_custom_call.1} parent=1 // pred_check
      _
    $region23: #{tpu_custom_call.1} parent=1 // pred_check_branch
      %26 = sbr.rel (0) target = $region25
    $region24: #{tpu_custom_call.1} parent=1 // pred_region
      _
    $region25: #{tpu_custom_call.1} parent=1 // pred_fallthru
      _
    // Predicated region
    $region26: #{tpu_custom_call.1} parent=1 // pred_check
      _
    $region27: #{tpu_custom_call.1} parent=1 // pred_check_branch
      %28 = sbr.rel (0) target = $region29
    $region28: #{tpu_custom_call.1} parent=1 // pred_region
      _
    $region29: #{tpu_custom_call.1} parent=1 // pred_fallthru
      _
    // Predicated region
    $region30: #{tpu_custom_call.1} parent=1 // pred_check
      _
    $region31: #{tpu_custom_call.1} parent=1 // pred_check_branch
      %30 = sbr.rel (0) target = $region33
    $region32: #{tpu_custom_call.1} parent=1 // pred_region
      _
    $region33: #{tpu_custom_call.1} parent=1 // pred_fallthru
      _
    // Predicated region
    $region34: #{tpu_custom_call.1} parent=1 // pred_check
      _
    $region35: #{tpu_custom_call.1} parent=1 // pred_check_branch
      %32 = sbr.rel (0) target = $region37
    $region36: #{tpu_custom_call.1} parent=1 // pred_region
      _
    $region37: #{tpu_custom_call.1} parent=1 // pred_fallthru
      _
    %v34 = vld [vmem:[%s0] sm:$0xff]
    %v35 = vld [vmem:[%s0 + $0x8] sm:$0xff]
    %v36 = vld [vmem:[%s1] sm:$0xff]
    %v37 = vld [vmem:[%s1 + $0x8] sm:$0xff]
    %v38 = vld [vmem:[%s7] sm:$0xff]
    %v39 = vpack.c.bf16 %v35, %v34
    %v40 = vld [vmem:[%s2] sm:$0xff]
    %v41 = vld [vmem:[%s2 + $0x8] sm:$0xff]
    %v42 = vld [vmem:[%s2 + $0x10] sm:$0xff]
    %v43 = vld [vmem:[%s2 + $0x18] sm:$0xff]
    %v44 = vld [vmem:[%s2 + $0x20] sm:$0xff]
    %v45 = vld [vmem:[%s2 + $0x28] sm:$0xff]
    %v46 = vld [vmem:[%s2 + $0x30] sm:$0xff]
    %v47 = vld [vmem:[%s2 + $0x38] sm:$0xff]
    %v56 = vunpack.c.l.b16 %v40
    %v57 = vunpack.c.h.b16 %v40
    %v58 = vunpack.c.l.b16 %v41
    %v59 = vunpack.c.h.b16 %v41
    %v60 = vunpack.c.l.b16 %v42
    %v61 = vunpack.c.h.b16 %v42
    %v62 = vunpack.c.l.b16 %v43
    %v63 = vunpack.c.h.b16 %v43
    %v64 = vunpack.c.l.b16 %v44
    %v65 = vunpack.c.h.b16 %v44
    %v66 = vunpack.c.l.b16 %v45
    %v67 = vunpack.c.h.b16 %v45
    %v68 = vunpack.c.l.b16 %v46
    %v69 = vunpack.c.h.b16 %v46
    %v70 = vunpack.c.l.b16 %v47
    %v71 = vunpack.c.h.b16 %v47
    %v72 = vpack.c.b16 %v60, %v56
    %v73 = vpack.c.b16 %v61, %v57
    %v74 = vpack.c.b16 %v62, %v58
    %v75 = vpack.c.b16 %v63, %v59
    %v76 = vpack.c.b16 %v68, %v64
    %v77 = vpack.c.b16 %v69, %v65
    %v78 = vpack.c.b16 %v70, %v66
    %v79 = vpack.c.b16 %v71, %v67
    %vm88 = vcmask 261120
    %v90 = vsel %vm88, %v39, 0
    %92 = vmatprep.subr.bf16.mxu0 %v73
    %93 = vmatpush1.bf16.msra.mxu0 %v72
    %94 = vmatprep.subr.bf16.mxu0 %v77
    %95 = vmatpush1.bf16.msra.mxu0 %v76
    %96 = vmatprep.subr.bf16.mxu0 0
    %97 = vmatpush1.bf16.msra.mxu0 0
    %98 = vmatprep.subr.bf16.mxu0 0
    %99 = vmatpush1.bf16.msra.mxu0 0
    %100 = vmatprep.subr.bf16.mxu0 0
    %101 = vmatpush1.bf16.msra.mxu0 0
    %102 = vmatprep.subr.bf16.mxu0 0
    %103 = vmatpush1.bf16.msra.mxu0 0
    %104 = vmatprep.subr.bf16.mxu0 0
    %105 = vmatpush1.bf16.msra.mxu0 0
    %106 = vmatprep.subr.bf16.mxu0 0
    %107 = vmatpush1.bf16.msra.mxu0 0
    %108 = vmatprep.subr.bf16.mxu0 0
    %109 = vmatpush1.bf16.msra.mxu0 0
    %110 = vmatprep.subr.bf16.mxu0 0
    %111 = vmatpush1.bf16.msra.mxu0 0
    %112 = vmatprep.subr.bf16.mxu0 0
    %113 = vmatpush1.bf16.msra.mxu0 0
    %114 = vmatprep.subr.bf16.mxu0 0
    %115 = vmatpush1.bf16.msra.mxu0 0
    %116 = vmatprep.subr.bf16.mxu0 0
    %117 = vmatpush1.bf16.msra.mxu0 0
    %118 = vmatprep.subr.bf16.mxu0 0
    %119 = vmatpush1.bf16.msra.mxu0 0
    %120 = vmatprep.subr.bf16.mxu0 0
    %121 = vmatpush1.bf16.msra.mxu0 0
    %122 = vmatprep.subr.bf16.mxu0 0
    %123 = vmatpush1.bf16.msra.mxu0 0
    %124 = vmatprep.mubr.bf16.mxu0 0
    %125 = vmatmul.mubr.bf16.gmra.mrb[0].mxu0 %v90
    %v126 = vpop.f32.mrb[0].mxu0
    %v127 = vadd.f32 0.0, %v126
    %v128 = vpop.f32.mrb[0].mxu0
    %v129 = vadd.f32 0.0, %v128
    %v130 = vpop.f32.mrb[0].mxu0
    %v131 = vadd.f32 0.0, %v130
    %v132 = vpop.f32.mrb[0].mxu0
    %v133 = vadd.f32 0.0, %v132
    %134 = vdwg.mxu0
    %135 = vmatprep.subr.bf16.mxu0 %v75
    %136 = vmatpush1.bf16.msra.mxu0 %v74
    %137 = vmatprep.subr.bf16.mxu0 %v79
    %138 = vmatpush1.bf16.msra.mxu0 %v78
    %139 = vmatprep.subr.bf16.mxu0 0
    %140 = vmatpush1.bf16.msra.mxu0 0
    %141 = vmatprep.subr.bf16.mxu0 0
    %142 = vmatpush1.bf16.msra.mxu0 0
    %143 = vmatprep.subr.bf16.mxu0 0
    %144 = vmatpush1.bf16.msra.mxu0 0
    %145 = vmatprep.subr.bf16.mxu0 0
    %146 = vmatpush1.bf16.msra.mxu0 0
    %147 = vmatprep.subr.bf16.mxu0 0
    %148 = vmatpush1.bf16.msra.mxu0 0
    %149 = vmatprep.subr.bf16.mxu0 0
    %150 = vmatpush1.bf16.msra.mxu0 0
    %151 = vmatprep.subr.bf16.mxu0 0
    %152 = vmatpush1.bf16.msra.mxu0 0
    %153 = vmatprep.subr.bf16.mxu0 0
    %154 = vmatpush1.bf16.msra.mxu0 0
    %155 = vmatprep.subr.bf16.mxu0 0
    %156 = vmatpush1.bf16.msra.mxu0 0
    %157 = vmatprep.subr.bf16.mxu0 0
    %158 = vmatpush1.bf16.msra.mxu0 0
    %159 = vmatprep.subr.bf16.mxu0 0
    %160 = vmatpush1.bf16.msra.mxu0 0
    %161 = vmatprep.subr.bf16.mxu0 0
    %162 = vmatpush1.bf16.msra.mxu0 0
    %163 = vmatprep.subr.bf16.mxu0 0
    %164 = vmatpush1.bf16.msra.mxu0 0
    %165 = vmatprep.subr.bf16.mxu0 0
    %166 = vmatpush1.bf16.msra.mxu0 0
    %167 = vmatprep.mubr.bf16.mxu0 0
    %168 = vmatmul.mubr.bf16.gmra.mrb[0].mxu0 %v90
    %v169 = vpop.f32.mrb[0].mxu0
    %v170 = vadd.f32 0.0, %v169
    %v171 = vpop.f32.mrb[0].mxu0
    %v172 = vadd.f32 0.0, %v171
    %v173 = vpop.f32.mrb[0].mxu0
    %v174 = vadd.f32 0.0, %v173
    %v175 = vpop.f32.mrb[0].mxu0
    %v176 = vadd.f32 0.0, %v175
    %177 = vdwg.mxu0
    %v178 = vpack.c.bf16 %v37, %v36
    %v179 = vld [vmem:[%s3] sm:$0xff]
    %v180 = vld [vmem:[%s3 + $0x8] sm:$0xff]
    %v181 = vld [vmem:[%s3 + $0x10] sm:$0xff]
    %v182 = vld [vmem:[%s3 + $0x18] sm:$0xff]
    %v183 = vld [vmem:[%s3 + $0x20] sm:$0xff]
    %v184 = vld [vmem:[%s3 + $0x28] sm:$0xff]
    %v185 = vld [vmem:[%s3 + $0x30] sm:$0xff]
    %v186 = vld [vmem:[%s3 + $0x38] sm:$0xff]
    %v187 = vld [vmem:[%s3 + $0x40] sm:$0xff]
    %v188 = vld [vmem:[%s3 + $0x48] sm:$0xff]
    %v189 = vld [vmem:[%s3 + $0x50] sm:$0xff]
    %v190 = vld [vmem:[%s3 + $0x58] sm:$0xff]
    %v191 = vld [vmem:[%s3 + $0x60] sm:$0xff]
    %v192 = vld [vmem:[%s3 + $0x68] sm:$0xff]
    %v193 = vld [vmem:[%s3 + $0x70] sm:$0xff]
    %v194 = vld [vmem:[%s3 + $0x78] sm:$0xff]
    %v211 = vunpack.c.l.b16 %v179
    %v212 = vunpack.c.h.b16 %v179
    %v213 = vunpack.c.l.b16 %v180
    %v214 = vunpack.c.h.b16 %v180
    %v215 = vunpack.c.l.b16 %v181
    %v216 = vunpack.c.h.b16 %v181
    %v217 = vunpack.c.l.b16 %v182
    %v218 = vunpack.c.h.b16 %v182
    %v219 = vunpack.c.l.b16 %v183
    %v220 = vunpack.c.h.b16 %v183
    %v221 = vunpack.c.l.b16 %v184
    %v222 = vunpack.c.h.b16 %v184
    %v223 = vunpack.c.l.b16 %v185
    %v224 = vunpack.c.h.b16 %v185
    %v225 = vunpack.c.l.b16 %v186
    %v226 = vunpack.c.h.b16 %v186
    %v227 = vunpack.c.l.b16 %v187
    %v228 = vunpack.c.h.b16 %v187
    %v229 = vunpack.c.l.b16 %v188
    %v230 = vunpack.c.h.b16 %v188
    %v231 = vunpack.c.l.b16 %v189
    %v232 = vunpack.c.h.b16 %v189
    %v233 = vunpack.c.l.b16 %v190
    %v234 = vunpack.c.h.b16 %v190
    %v235 = vunpack.c.l.b16 %v191
    %v236 = vunpack.c.h.b16 %v191
    %v237 = vunpack.c.l.b16 %v192
    %v238 = vunpack.c.h.b16 %v192
    %v239 = vunpack.c.l.b16 %v193
    %v240 = vunpack.c.h.b16 %v193
    %v241 = vunpack.c.l.b16 %v194
    %v242 = vunpack.c.h.b16 %v194
    %v243 = vpack.c.b16 %v219, %v211
    %v244 = vpack.c.b16 %v220, %v212
    %v245 = vpack.c.b16 %v221, %v213
    %v246 = vpack.c.b16 %v222, %v214
    %v247 = vpack.c.b16 %v223, %v215
    %v248 = vpack.c.b16 %v224, %v216
    %v249 = vpack.c.b16 %v225, %v217
    %v250 = vpack.c.b16 %v226, %v218
    %v251 = vpack.c.b16 %v235, %v227
    %v252 = vpack.c.b16 %v236, %v228
    %v253 = vpack.c.b16 %v237, %v229
    %v254 = vpack.c.b16 %v238, %v230
    %v255 = vpack.c.b16 %v239, %v231
    %v256 = vpack.c.b16 %v240, %v232
    %v257 = vpack.c.b16 %v241, %v233
    %v258 = vpack.c.b16 %v242, %v234
    %v276 = vsel %vm88, %v178, 0
    %278 = vmatprep.subr.bf16.mxu0 %v244
    %279 = vmatpush1.bf16.msra.mxu0 %v243
    %280 = vmatprep.subr.bf16.mxu0 %v252
    %281 = vmatpush1.bf16.msra.mxu0 %v251
    %282 = vmatprep.subr.bf16.mxu0 0
    %283 = vmatpush1.bf16.msra.mxu0 0
    %284 = vmatprep.subr.bf16.mxu0 0
    %285 = vmatpush1.bf16.msra.mxu0 0
    %286 = vmatprep.subr.bf16.mxu0 0
    %287 = vmatpush1.bf16.msra.mxu0 0
    %288 = vmatprep.subr.bf16.mxu0 0
    %289 = vmatpush1.bf16.msra.mxu0 0
    %290 = vmatprep.subr.bf16.mxu0 0
    %291 = vmatpush1.bf16.msra.mxu0 0
    %292 = vmatprep.subr.bf16.mxu0 0
    %293 = vmatpush1.bf16.msra.mxu0 0
    %294 = vmatprep.subr.bf16.mxu0 0
    %295 = vmatpush1.bf16.msra.mxu0 0
    %296 = vmatprep.subr.bf16.mxu0 0
    %297 = vmatpush1.bf16.msra.mxu0 0
    %298 = vmatprep.subr.bf16.mxu0 0
    %299 = vmatpush1.bf16.msra.mxu0 0
    %300 = vmatprep.subr.bf16.mxu0 0
    %301 = vmatpush1.bf16.msra.mxu0 0
    %302 = vmatprep.subr.bf16.mxu0 0
    %303 = vmatpush1.bf16.msra.mxu0 0
    %304 = vmatprep.subr.bf16.mxu0 0
    %305 = vmatpush1.bf16.msra.mxu0 0
    %306 = vmatprep.subr.bf16.mxu0 0
    %307 = vmatpush1.bf16.msra.mxu0 0
    %308 = vmatprep.subr.bf16.mxu0 0
    %309 = vmatpush1.bf16.msra.mxu0 0
    %310 = vmatprep.mubr.bf16.mxu0 0
    %311 = vmatmul.mubr.bf16.gmra.mrb[0].mxu0 %v276
    %v312 = vpop.f32.mrb[0].mxu0
    %v313 = vadd.f32 0.0, %v312
    %v314 = vpop.f32.mrb[0].mxu0
    %v315 = vadd.f32 0.0, %v314
    %v316 = vpop.f32.mrb[0].mxu0
    %v317 = vadd.f32 0.0, %v316
    %v318 = vpop.f32.mrb[0].mxu0
    %v319 = vadd.f32 0.0, %v318
    %320 = vdwg.mxu0
    %321 = vmatprep.subr.bf16.mxu0 %v246
    %322 = vmatpush1.bf16.msra.mxu0 %v245
    %323 = vmatprep.subr.bf16.mxu0 %v254
    %324 = vmatpush1.bf16.msra.mxu0 %v253
    %325 = vmatprep.subr.bf16.mxu0 0
    %326 = vmatpush1.bf16.msra.mxu0 0
    %327 = vmatprep.subr.bf16.mxu0 0
    %328 = vmatpush1.bf16.msra.mxu0 0
    %329 = vmatprep.subr.bf16.mxu0 0
    %330 = vmatpush1.bf16.msra.mxu0 0
    %331 = vmatprep.subr.bf16.mxu0 0
    %332 = vmatpush1.bf16.msra.mxu0 0
    %333 = vmatprep.subr.bf16.mxu0 0
    %334 = vmatpush1.bf16.msra.mxu0 0
    %335 = vmatprep.subr.bf16.mxu0 0
    %336 = vmatpush1.bf16.msra.mxu0 0
    %337 = vmatprep.subr.bf16.mxu0 0
    %338 = vmatpush1.bf16.msra.mxu0 0
    %339 = vmatprep.subr.bf16.mxu0 0
    %340 = vmatpush1.bf16.msra.mxu0 0
    %341 = vmatprep.subr.bf16.mxu0 0
    %342 = vmatpush1.bf16.msra.mxu0 0
    %343 = vmatprep.subr.bf16.mxu0 0
    %344 = vmatpush1.bf16.msra.mxu0 0
    %345 = vmatprep.subr.bf16.mxu0 0
    %346 = vmatpush1.bf16.msra.mxu0 0
    %347 = vmatprep.subr.bf16.mxu0 0
    %348 = vmatpush1.bf16.msra.mxu0 0
    %349 = vmatprep.subr.bf16.mxu0 0
    %350 = vmatpush1.bf16.msra.mxu0 0
    %351 = vmatprep.subr.bf16.mxu0 0
    %352 = vmatpush1.bf16.msra.mxu0 0
    %353 = vmatprep.mubr.bf16.mxu0 0
    %354 = vmatmul.mubr.bf16.gmra.mrb[0].mxu0 %v276
    %v355 = vpop.f32.mrb[0].mxu0
    %v356 = vadd.f32 0.0, %v355
    %v357 = vpop.f32.mrb[0].mxu0
    %v358 = vadd.f32 0.0, %v357
    %v359 = vpop.f32.mrb[0].mxu0
    %v360 = vadd.f32 0.0, %v359
    %v361 = vpop.f32.mrb[0].mxu0
    %v362 = vadd.f32 0.0, %v361
    %363 = vdwg.mxu0
    %364 = vmatprep.subr.bf16.mxu0 %v248
    %365 = vmatpush1.bf16.msra.mxu0 %v247
    %366 = vmatprep.subr.bf16.mxu0 %v256
    %367 = vmatpush1.bf16.msra.mxu0 %v255
    %368 = vmatprep.subr.bf16.mxu0 0
    %369 = vmatpush1.bf16.msra.mxu0 0
    %370 = vmatprep.subr.bf16.mxu0 0
    %371 = vmatpush1.bf16.msra.mxu0 0
    %372 = vmatprep.subr.bf16.mxu0 0
    %373 = vmatpush1.bf16.msra.mxu0 0
    %374 = vmatprep.subr.bf16.mxu0 0
    %375 = vmatpush1.bf16.msra.mxu0 0
    %376 = vmatprep.subr.bf16.mxu0 0
    %377 = vmatpush1.bf16.msra.mxu0 0
    %378 = vmatprep.subr.bf16.mxu0 0
    %379 = vmatpush1.bf16.msra.mxu0 0
    %380 = vmatprep.subr.bf16.mxu0 0
    %381 = vmatpush1.bf16.msra.mxu0 0
    %382 = vmatprep.subr.bf16.mxu0 0
    %383 = vmatpush1.bf16.msra.mxu0 0
    %384 = vmatprep.subr.bf16.mxu0 0
    %385 = vmatpush1.bf16.msra.mxu0 0
    %386 = vmatprep.subr.bf16.mxu0 0
    %387 = vmatpush1.bf16.msra.mxu0 0
    %388 = vmatprep.subr.bf16.mxu0 0
    %389 = vmatpush1.bf16.msra.mxu0 0
    %390 = vmatprep.subr.bf16.mxu0 0
    %391 = vmatpush1.bf16.msra.mxu0 0
    %392 = vmatprep.subr.bf16.mxu0 0
    %393 = vmatpush1.bf16.msra.mxu0 0
    %394 = vmatprep.subr.bf16.mxu0 0
    %395 = vmatpush1.bf16.msra.mxu0 0
    %396 = vmatprep.mubr.bf16.mxu0 0
    %397 = vmatmul.mubr.bf16.gmra.mrb[0].mxu0 %v276
    %v398 = vpop.f32.mrb[0].mxu0
    %v399 = vadd.f32 0.0, %v398
    %v400 = vpop.f32.mrb[0].mxu0
    %v401 = vadd.f32 0.0, %v400
    %v402 = vpop.f32.mrb[0].mxu0
    %v403 = vadd.f32 0.0, %v402
    %v404 = vpop.f32.mrb[0].mxu0
    %v405 = vadd.f32 0.0, %v404
    %406 = vdwg.mxu0
    %407 = vmatprep.subr.bf16.mxu0 %v250
    %408 = vmatpush1.bf16.msra.mxu0 %v249
    %409 = vmatprep.subr.bf16.mxu0 %v258
    %410 = vmatpush1.bf16.msra.mxu0 %v257
    %411 = vmatprep.subr.bf16.mxu0 0
    %412 = vmatpush1.bf16.msra.mxu0 0
    %413 = vmatprep.subr.bf16.mxu0 0
    %414 = vmatpush1.bf16.msra.mxu0 0
    %415 = vmatprep.subr.bf16.mxu0 0
    %416 = vmatpush1.bf16.msra.mxu0 0
    %417 = vmatprep.subr.bf16.mxu0 0
    %418 = vmatpush1.bf16.msra.mxu0 0
    %419 = vmatprep.subr.bf16.mxu0 0
    %420 = vmatpush1.bf16.msra.mxu0 0
    %421 = vmatprep.subr.bf16.mxu0 0
    %422 = vmatpush1.bf16.msra.mxu0 0
    %423 = vmatprep.subr.bf16.mxu0 0
    %424 = vmatpush1.bf16.msra.mxu0 0
    %425 = vmatprep.subr.bf16.mxu0 0
    %426 = vmatpush1.bf16.msra.mxu0 0
    %427 = vmatprep.subr.bf16.mxu0 0
    %428 = vmatpush1.bf16.msra.mxu0 0
    %429 = vmatprep.subr.bf16.mxu0 0
    %430 = vmatpush1.bf16.msra.mxu0 0
    %431 = vmatprep.subr.bf16.mxu0 0
    %432 = vmatpush1.bf16.msra.mxu0 0
    %433 = vmatprep.subr.bf16.mxu0 0
    %434 = vmatpush1.bf16.msra.mxu0 0
    %435 = vmatprep.subr.bf16.mxu0 0
    %436 = vmatpush1.bf16.msra.mxu0 0
    %437 = vmatprep.subr.bf16.mxu0 0
    %438 = vmatpush1.bf16.msra.mxu0 0
    %439 = vmatprep.mubr.bf16.mxu0 0
    %440 = vmatmul.mubr.bf16.gmra.mrb[0].mxu0 %v276
    %v441 = vpop.f32.mrb[0].mxu0
    %v442 = vadd.f32 0.0, %v441
    %v443 = vpop.f32.mrb[0].mxu0
    %v444 = vadd.f32 0.0, %v443
    %v445 = vpop.f32.mrb[0].mxu0
    %v446 = vadd.f32 0.0, %v445
    %v447 = vpop.f32.mrb[0].mxu0
    %v448 = vadd.f32 0.0, %v447
    %449 = vdwg.mxu0
    %v450 = vmul.f32 %v127, 0.125
    %v451 = vmul.f32 %v129, 0.125
    %v452 = vmul.f32 %v170, 0.125
    %v453 = vmul.f32 %v172, 0.125
    %v454 = vmul.f32 %v131, 0.125
    %v455 = vmul.f32 %v133, 0.125
    %v456 = vmul.f32 %v174, 0.125
    %v457 = vmul.f32 %v176, 0.125
    %v458 = vpack.c.bf16 %v450, %v450
    %v459 = vpack.c.bf16 %v451, %v451
    %v460 = vpack.c.bf16 %v452, %v452
    %v461 = vpack.c.bf16 %v453, %v453
    %v462 = vpack.c.bf16 %v454, %v454
    %v463 = vpack.c.bf16 %v455, %v455
    %v464 = vpack.c.bf16 %v456, %v456
    %v465 = vpack.c.bf16 %v457, %v457
    %v466 = vpack.c.bf16 %v313, %v313
    %v467 = vpack.c.bf16 %v315, %v315
    %v468 = vpack.c.bf16 %v356, %v356
    %v469 = vpack.c.bf16 %v358, %v358
    %v470 = vpack.c.bf16 %v317, %v317
    %v471 = vpack.c.bf16 %v319, %v319
    %v472 = vpack.c.bf16 %v360, %v360
    %v473 = vpack.c.bf16 %v362, %v362
    %v474 = vpack.c.bf16 %v399, %v399
    %v475 = vpack.c.bf16 %v401, %v401
    %v476 = vpack.c.bf16 %v442, %v442
    %v477 = vpack.c.bf16 %v444, %v444
    %v478 = vpack.c.bf16 %v403, %v403
    %v479 = vpack.c.bf16 %v405, %v405
    %v480 = vpack.c.bf16 %v446, %v446
    %v481 = vpack.c.bf16 %v448, %v448
    %v482 = vld [vmem:[%s4] sm:$0xf]
    %v483 = vld [vmem:[%s4 + $0x4] sm:$0xf]
    %v484 = vld [vmem:[%s4 + $0x8] sm:$0xf]
    %v485 = vld [vmem:[%s4 + $0xc] sm:$0xf]
    %v486 = vld [vmem:[%s4 + $0x10] sm:$0xf]
    %v487 = vld [vmem:[%s4 + $0x14] sm:$0xf]
    %v488 = vld [vmem:[%s4 + $0x18] sm:$0xf]
    %v489 = vld [vmem:[%s4 + $0x1c] sm:$0xf]
    %v490 = vld [vmem:[%s4 + $0x20] sm:$0xf]
    %v491 = vld [vmem:[%s4 + $0x24] sm:$0xf]
    %v492 = vld [vmem:[%s4 + $0x28] sm:$0xf]
    %v493 = vld [vmem:[%s4 + $0x2c] sm:$0xf]
    %v494 = vld [vmem:[%s4 + $0x30] sm:$0xf]
    %v495 = vld [vmem:[%s4 + $0x34] sm:$0xf]
    %v496 = vld [vmem:[%s4 + $0x38] sm:$0xf]
    %v497 = vld [vmem:[%s4 + $0x3c] sm:$0xf]
    %v498 = vld [vmem:[%s4 + $0x40] sm:$0xf]
    %v499 = vld [vmem:[%s4 + $0x44] sm:$0xf]
    %v500 = vld [vmem:[%s4 + $0x48] sm:$0xf]
    %v501 = vld [vmem:[%s4 + $0x4c] sm:$0xf]
    %v502 = vld [vmem:[%s4 + $0x50] sm:$0xf]
    %v503 = vld [vmem:[%s4 + $0x54] sm:$0xf]
    %v504 = vld [vmem:[%s4 + $0x58] sm:$0xf]
    %v505 = vld [vmem:[%s4 + $0x5c] sm:$0xf]
    %v506 = vld [vmem:[%s4 + $0x60] sm:$0xf]
    %v507 = vld [vmem:[%s4 + $0x64] sm:$0xf]
    %v508 = vld [vmem:[%s4 + $0x68] sm:$0xf]
    %v509 = vld [vmem:[%s4 + $0x6c] sm:$0xf]
    %v510 = vld [vmem:[%s4 + $0x70] sm:$0xf]
    %v511 = vld [vmem:[%s4 + $0x74] sm:$0xf]
    %v512 = vld [vmem:[%s4 + $0x78] sm:$0xf]
    %v513 = vld [vmem:[%s4 + $0x7c] sm:$0xf]
    %v514 = vld [vmem:[%s4 + $0x80] sm:$0xf]
    %v515 = vld [vmem:[%s4 + $0x84] sm:$0xf]
    %v516 = vld [vmem:[%s4 + $0x88] sm:$0xf]
    %v517 = vld [vmem:[%s4 + $0x8c] sm:$0xf]
    %v518 = vld [vmem:[%s4 + $0x90] sm:$0xf]
    %v519 = vld [vmem:[%s4 + $0x94] sm:$0xf]
    %v520 = vld [vmem:[%s4 + $0x98] sm:$0xf]
    %v521 = vld [vmem:[%s4 + $0x9c] sm:$0xf]
    %v522 = vld [vmem:[%s4 + $0xa0] sm:$0xf]
    %v523 = vld [vmem:[%s4 + $0xa4] sm:$0xf]
    %v524 = vld [vmem:[%s4 + $0xa8] sm:$0xf]
    %v525 = vld [vmem:[%s4 + $0xac] sm:$0xf]
    %v526 = vld [vmem:[%s4 + $0xb0] sm:$0xf]
    %v527 = vld [vmem:[%s4 + $0xb4] sm:$0xf]
    %v528 = vld [vmem:[%s4 + $0xb8] sm:$0xf]
    %v529 = vld [vmem:[%s4 + $0xbc] sm:$0xf]
    %v530 = vld [vmem:[%s4 + $0xc0] sm:$0xf]
    %v531 = vld [vmem:[%s4 + $0xc4] sm:$0xf]
    %v532 = vld [vmem:[%s4 + $0xc8] sm:$0xf]
    %v533 = vld [vmem:[%s4 + $0xcc] sm:$0xf]
    %v534 = vld [vmem:[%s4 + $0xd0] sm:$0xf]
    %v535 = vld [vmem:[%s4 + $0xd4] sm:$0xf]
    %v536 = vld [vmem:[%s4 + $0xd8] sm:$0xf]
    %v537 = vld [vmem:[%s4 + $0xdc] sm:$0xf]
    %v538 = vld [vmem:[%s4 + $0xe0] sm:$0xf]
    %v539 = vld [vmem:[%s4 + $0xe4] sm:$0xf]
    %v540 = vld [vmem:[%s4 + $0xe8] sm:$0xf]
    %v541 = vld [vmem:[%s4 + $0xec] sm:$0xf]
    %v542 = vld [vmem:[%s4 + $0xf0] sm:$0xf]
    %v543 = vld [vmem:[%s4 + $0xf4] sm:$0xf]
    %v544 = vld [vmem:[%s4 + $0xf8] sm:$0xf]
    %v545 = vld [vmem:[%s4 + $0xfc] sm:$0xf]
    %vm546 = vcmask 523264
    %v548 = vsel %vm546, %v458, 0
    %v551 = vsel %vm546, %v466, 0
    %553 = vmatprep.subr.bf16.mxu0 0
    %554 = vmatpush1.bf16.xpose.msra.mxu0 %v551
    %555 = vmatprep.subr.bf16.mxu0 0
    %556 = vmatpush1.bf16.xpose.msra.mxu0 0
    %557 = vmatprep.subr.bf16.mxu0 0
    %558 = vmatpush1.bf16.xpose.msra.mxu0 0
    %559 = vmatprep.subr.bf16.mxu0 0
    %560 = vmatpush1.bf16.xpose.msra.mxu0 0
    %561 = vmatprep.subr.bf16.mxu0 0
    %562 = vmatpush1.bf16.xpose.msra.mxu0 0
    %563 = vmatprep.subr.bf16.mxu0 0
    %564 = vmatpush1.bf16.xpose.msra.mxu0 0
    %565 = vmatprep.subr.bf16.mxu0 0
    %566 = vmatpush1.bf16.xpose.msra.mxu0 0
    %567 = vmatprep.subr.bf16.mxu0 0
    %568 = vmatpush1.bf16.xpose.msra.mxu0 0
    %569 = vmatprep.subr.bf16.mxu0 0
    %570 = vmatpush1.bf16.xpose.msra.mxu0 0
    %571 = vmatprep.subr.bf16.mxu0 0
    %572 = vmatpush1.bf16.xpose.msra.mxu0 0
    %573 = vmatprep.subr.bf16.mxu0 0
    %574 = vmatpush1.bf16.xpose.msra.mxu0 0
    %575 = vmatprep.subr.bf16.mxu0 0
    %576 = vmatpush1.bf16.xpose.msra.mxu0 0
    %577 = vmatprep.subr.bf16.mxu0 0
    %578 = vmatpush1.bf16.xpose.msra.mxu0 0
    %579 = vmatprep.subr.bf16.mxu0 0
    %580 = vmatpush1.bf16.xpose.msra.mxu0 0
    %581 = vmatprep.subr.bf16.mxu0 0
    %582 = vmatpush1.bf16.xpose.msra.mxu0 0
    %583 = vmatprep.subr.bf16.mxu0 0
    %584 = vmatpush1.bf16.xpose.msra.mxu0 0
    %585 = vmatprep.mubr.bf16.mxu0 0
    %586 = vmatmul.mubr.bf16.gmra.mrb[0].mxu0 %v548
    %v587 = vpop.f32.mrb[0].mxu0
    %v588 = vadd.f32 0.0, %v587
    %v589 = vpop.f32.mrb[0].mxu0
    %v590 = vpop.f32.mrb[0].mxu0
    %v591 = vpop.f32.mrb[0].mxu0
    %592 = vdwg.mxu0
    %v594 = vsel %vm546, %v462, 0
    %v597 = vsel %vm546, %v470, 0
    %599 = vmatprep.subr.bf16.mxu0 0
    %600 = vmatpush1.bf16.xpose.msra.mxu0 %v597
    %601 = vmatprep.subr.bf16.mxu0 0
    %602 = vmatpush1.bf16.xpose.msra.mxu0 0
    %603 = vmatprep.subr.bf16.mxu0 0
    %604 = vmatpush1.bf16.xpose.msra.mxu0 0
    %605 = vmatprep.subr.bf16.mxu0 0
    %606 = vmatpush1.bf16.xpose.msra.mxu0 0
    %607 = vmatprep.subr.bf16.mxu0 0
    %608 = vmatpush1.bf16.xpose.msra.mxu0 0
    %609 = vmatprep.subr.bf16.mxu0 0
    %610 = vmatpush1.bf16.xpose.msra.mxu0 0
    %611 = vmatprep.subr.bf16.mxu0 0
    %612 = vmatpush1.bf16.xpose.msra.mxu0 0
    %613 = vmatprep.subr.bf16.mxu0 0
    %614 = vmatpush1.bf16.xpose.msra.mxu0 0
    %615 = vmatprep.subr.bf16.mxu0 0
    %616 = vmatpush1.bf16.xpose.msra.mxu0 0
    %617 = vmatprep.subr.bf16.mxu0 0
    %618 = vmatpush1.bf16.xpose.msra.mxu0 0
    %619 = vmatprep.subr.bf16.mxu0 0
    %620 = vmatpush1.bf16.xpose.msra.mxu0 0
    %621 = vmatprep.subr.bf16.mxu0 0
    %622 = vmatpush1.bf16.xpose.msra.mxu0 0
    %623 = vmatprep.subr.bf16.mxu0 0
    %624 = vmatpush1.bf16.xpose.msra.mxu0 0
    %625 = vmatprep.subr.bf16.mxu0 0
    %626 = vmatpush1.bf16.xpose.msra.mxu0 0
    %627 = vmatprep.subr.bf16.mxu0 0
    %628 = vmatpush1.bf16.xpose.msra.mxu0 0
    %629 = vmatprep.subr.bf16.mxu0 0
    %630 = vmatpush1.bf16.xpose.msra.mxu0 0
    %631 = vmatprep.mubr.bf16.mxu0 0
    %632 = vmatmul.mubr.bf16.gmra.mrb[0].mxu0 %v594
    %v633 = vpop.f32.mrb[0].mxu0
    %v634 = vadd.f32 0.0, %v633
    %v635 = vpop.f32.mrb[0].mxu0
    %v636 = vpop.f32.mrb[0].mxu0
    %v637 = vpop.f32.mrb[0].mxu0
    %638 = vdwg.mxu0
    %vm639 = vcmask 64512
    %v640 = vsel %vm639, %v588, -inf
    %641 = vmax.xlane.f32.xlu0 %v640
    %v642 = vpop.xlane.xlu0 %641
    %v643 = vsel %vm639, %v634, -inf
    %644 = vmax.xlane.f32.xlu0 %v643
    %v645 = vpop.xlane.xlu0 %644
    %v646 = vsub.f32 %v588, %v642
    %v647 = vsub.f32 %v634, %v645
    %v648 = vmul.f32 %v646, 1.442695
    %v649 = vpow.pop %v648
    %v650 = vmul.f32 %v647, 1.442695
    %v651 = vpow.pop %v650
    %v652 = vsel %vm639, %v649, 0.0
    %653 = vadd.xlane.f32.xlu0 %v652
    %v654 = vpop.xlane.xlu0 %653
    %v655 = vsel %vm639, %v651, 0.0
    %656 = vadd.xlane.f32.xlu0 %v655
    %v657 = vpop.xlane.xlu0 %656
    %v658 = vrcp.pop %v654
    %v659 = vrcp.pop %v657
    %v660 = vmul.f32 %v649, %v658
    %v661 = vmul.f32 %v651, %v659
    %v662 = vpack.c.bf16 %v660, %v660
    %v663 = vpack.c.bf16 %v661, %v661
    %v665 = vsel %vm639, %v662, 0
    %vm667 = vcmask 1043456
    %v669 = vsel %vm667, %v474, 0
    %671 = vmatprep.subr.bf16.mxu0 0
    %672 = vmatpush1.bf16.msra.mxu0 %v669
    %673 = vmatprep.subr.bf16.mxu0 0
    %674 = vmatpush1.bf16.msra.mxu0 0
    %675 = vmatprep.subr.bf16.mxu0 0
    %676 = vmatpush1.bf16.msra.mxu0 0
    %677 = vmatprep.subr.bf16.mxu0 0
    %678 = vmatpush1.bf16.msra.mxu0 0
    %679 = vmatprep.subr.bf16.mxu0 0
    %680 = vmatpush1.bf16.msra.mxu0 0
    %681 = vmatprep.subr.bf16.mxu0 0
    %682 = vmatpush1.bf16.msra.mxu0 0
    %683 = vmatprep.subr.bf16.mxu0 0
    %684 = vmatpush1.bf16.msra.mxu0 0
    %685 = vmatprep.subr.bf16.mxu0 0
    %686 = vmatpush1.bf16.msra.mxu0 0
    %687 = vmatprep.subr.bf16.mxu0 0
    %688 = vmatpush1.bf16.msra.mxu0 0
    %689 = vmatprep.subr.bf16.mxu0 0
    %690 = vmatpush1.bf16.msra.mxu0 0
    %691 = vmatprep.subr.bf16.mxu0 0
    %692 = vmatpush1.bf16.msra.mxu0 0
    %693 = vmatprep.subr.bf16.mxu0 0
    %694 = vmatpush1.bf16.msra.mxu0 0
    %695 = vmatprep.subr.bf16.mxu0 0
    %696 = vmatpush1.bf16.msra.mxu0 0
    %697 = vmatprep.subr.bf16.mxu0 0
    %698 = vmatpush1.bf16.msra.mxu0 0
    %699 = vmatprep.subr.bf16.mxu0 0
    %700 = vmatpush1.bf16.msra.mxu0 0
    %701 = vmatprep.subr.bf16.mxu0 0
    %702 = vmatpush1.bf16.msra.mxu0 0
    %703 = vmatprep.mubr.bf16.mxu0 0
    %704 = vmatmul.mubr.bf16.gmra.mrb[0].mxu0 %v665
    %v705 = vpop.f32.mrb[0].mxu0
    %v706 = vadd.f32 0.0, %v705
    %v707 = vpop.f32.mrb[0].mxu0
    %v708 = vpop.f32.mrb[0].mxu0
    %v709 = vpop.f32.mrb[0].mxu0
    %710 = vdwg.mxu0
    %v712 = vsel %vm639, %v663, 0
    %v715 = vsel %vm667, %v478, 0
    %717 = vmatprep.subr.bf16.mxu0 0
    %718 = vmatpush1.bf16.msra.mxu0 %v715
    %719 = vmatprep.subr.bf16.mxu0 0
    %720 = vmatpush1.bf16.msra.mxu0 0
    %721 = vmatprep.subr.bf16.mxu0 0
    %722 = vmatpush1.bf16.msra.mxu0 0
    %723 = vmatprep.subr.bf16.mxu0 0
    %724 = vmatpush1.bf16.msra.mxu0 0
    %725 = vmatprep.subr.bf16.mxu0 0
    %726 = vmatpush1.bf16.msra.mxu0 0
    %727 = vmatprep.subr.bf16.mxu0 0
    %728 = vmatpush1.bf16.msra.mxu0 0
    %729 = vmatprep.subr.bf16.mxu0 0
    %730 = vmatpush1.bf16.msra.mxu0 0
    %731 = vmatprep.subr.bf16.mxu0 0
    %732 = vmatpush1.bf16.msra.mxu0 0
    %733 = vmatprep.subr.bf16.mxu0 0
    %734 = vmatpush1.bf16.msra.mxu0 0
    %735 = vmatprep.subr.bf16.mxu0 0
    %736 = vmatpush1.bf16.msra.mxu0 0
    %737 = vmatprep.subr.bf16.mxu0 0
    %738 = vmatpush1.bf16.msra.mxu0 0
    %739 = vmatprep.subr.bf16.mxu0 0
    %740 = vmatpush1.bf16.msra.mxu0 0
    %741 = vmatprep.subr.bf16.mxu0 0
    %742 = vmatpush1.bf16.msra.mxu0 0
    %743 = vmatprep.subr.bf16.mxu0 0
    %744 = vmatpush1.bf16.msra.mxu0 0
    %745 = vmatprep.subr.bf16.mxu0 0
    %746 = vmatpush1.bf16.msra.mxu0 0
    %747 = vmatprep.subr.bf16.mxu0 0
    %748 = vmatpush1.bf16.msra.mxu0 0
    %749 = vmatprep.mubr.bf16.mxu0 0
    %750 = vmatmul.mubr.bf16.gmra.mrb[0].mxu0 %v712
    %v751 = vpop.f32.mrb[0].mxu0
    %v752 = vadd.f32 0.0, %v751
    %v753 = vpop.f32.mrb[0].mxu0
    %v754 = vpop.f32.mrb[0].mxu0
    %v755 = vpop.f32.mrb[0].mxu0
    %756 = vdwg.mxu0
    %v757 = vpack.c.bf16 %v752, %v706
    %759 = vrot.lane.b32.xlu0 %v458, 64
    %v760 = vpop.permute.xlu0 %759
    %762 = vrot.lane.b32.xlu0 %v466, 64
    %v763 = vpop.permute.xlu0 %762
    %v765 = vsel %vm546, %v760, 0
    %v768 = vsel %vm546, %v763, 0
    %770 = vmatprep.subr.bf16.mxu0 0
    %771 = vmatpush1.bf16.xpose.msra.mxu0 %v768
    %772 = vmatprep.subr.bf16.mxu0 0
    %773 = vmatpush1.bf16.xpose.msra.mxu0 0
    %774 = vmatprep.subr.bf16.mxu0 0
    %775 = vmatpush1.bf16.xpose.msra.mxu0 0
    %776 = vmatprep.subr.bf16.mxu0 0
    %777 = vmatpush1.bf16.xpose.msra.mxu0 0
    %778 = vmatprep.subr.bf16.mxu0 0
    %779 = vmatpush1.bf16.xpose.msra.mxu0 0
    %780 = vmatprep.subr.bf16.mxu0 0
    %781 = vmatpush1.bf16.xpose.msra.mxu0 0
    %782 = vmatprep.subr.bf16.mxu0 0
    %783 = vmatpush1.bf16.xpose.msra.mxu0 0
    %784 = vmatprep.subr.bf16.mxu0 0
    %785 = vmatpush1.bf16.xpose.msra.mxu0 0
    %786 = vmatprep.subr.bf16.mxu0 0
    %787 = vmatpush1.bf16.xpose.msra.mxu0 0
    %788 = vmatprep.subr.bf16.mxu0 0
    %789 = vmatpush1.bf16.xpose.msra.mxu0 0
    %790 = vmatprep.subr.bf16.mxu0 0
    %791 = vmatpush1.bf16.xpose.msra.mxu0 0
    %792 = vmatprep.subr.bf16.mxu0 0
    %793 = vmatpush1.bf16.xpose.msra.mxu0 0
    %794 = vmatprep.subr.bf16.mxu0 0
    %795 = vmatpush1.bf16.xpose.msra.mxu0 0
    %796 = vmatprep.subr.bf16.mxu0 0
    %797 = vmatpush1.bf16.xpose.msra.mxu0 0
    %798 = vmatprep.subr.bf16.mxu0 0
    %799 = vmatpush1.bf16.xpose.msra.mxu0 0
    %800 = vmatprep.subr.bf16.mxu0 0
    %801 = vmatpush1.bf16.xpose.msra.mxu0 0
    %802 = vmatprep.mubr.bf16.mxu0 0
    %803 = vmatmul.mubr.bf16.gmra.mrb[0].mxu0 %v765
    %v804 = vpop.f32.mrb[0].mxu0
    %v805 = vadd.f32 0.0, %v804
    %v806 = vpop.f32.mrb[0].mxu0
    %v807 = vpop.f32.mrb[0].mxu0
    %v808 = vpop.f32.mrb[0].mxu0
    %809 = vdwg.mxu0
    %811 = vrot.lane.b32.xlu0 %v462, 64
    %v812 = vpop.permute.xlu0 %811
    %814 = vrot.lane.b32.xlu0 %v470, 64
    %v815 = vpop.permute.xlu0 %814
    %v817 = vsel %vm546, %v812, 0
    %v820 = vsel %vm546, %v815, 0
    %822 = vmatprep.subr.bf16.mxu0 0
    %823 = vmatpush1.bf16.xpose.msra.mxu0 %v820
    %824 = vmatprep.subr.bf16.mxu0 0
    %825 = vmatpush1.bf16.xpose.msra.mxu0 0
    %826 = vmatprep.subr.bf16.mxu0 0
    %827 = vmatpush1.bf16.xpose.msra.mxu0 0
    %828 = vmatprep.subr.bf16.mxu0 0
    %829 = vmatpush1.bf16.xpose.msra.mxu0 0
    %830 = vmatprep.subr.bf16.mxu0 0
    %831 = vmatpush1.bf16.xpose.msra.mxu0 0
    %832 = vmatprep.subr.bf16.mxu0 0
    %833 = vmatpush1.bf16.xpose.msra.mxu0 0
    %834 = vmatprep.subr.bf16.mxu0 0
    %835 = vmatpush1.bf16.xpose.msra.mxu0 0
    %836 = vmatprep.subr.bf16.mxu0 0
    %837 = vmatpush1.bf16.xpose.msra.mxu0 0
    %838 = vmatprep.subr.bf16.mxu0 0
    %839 = vmatpush1.bf16.xpose.msra.mxu0 0
    %840 = vmatprep.subr.bf16.mxu0 0
    %841 = vmatpush1.bf16.xpose.msra.mxu0 0
    %842 = vmatprep.subr.bf16.mxu0 0
    %843 = vmatpush1.bf16.xpose.msra.mxu0 0
    %844 = vmatprep.subr.bf16.mxu0 0
    %845 = vmatpush1.bf16.xpose.msra.mxu0 0
    %846 = vmatprep.subr.bf16.mxu0 0
    %847 = vmatpush1.bf16.xpose.msra.mxu0 0
    %848 = vmatprep.subr.bf16.mxu0 0
    %849 = vmatpush1.bf16.xpose.msra.mxu0 0
    %850 = vmatprep.subr.bf16.mxu0 0
    %851 = vmatpush1.bf16.xpose.msra.mxu0 0
    %852 = vmatprep.subr.bf16.mxu0 0
    %853 = vmatpush1.bf16.xpose.msra.mxu0 0
    %854 = vmatprep.mubr.bf16.mxu0 0
    %855 = vmatmul.mubr.bf16.gmra.mrb[0].mxu0 %v817
    %v856 = vpop.f32.mrb[0].mxu0
    %v857 = vadd.f32 0.0, %v856
    %v858 = vpop.f32.mrb[0].mxu0
    %v859 = vpop.f32.mrb[0].mxu0
    %v860 = vpop.f32.mrb[0].mxu0
    %861 = vdwg.mxu0
    %v862 = vsel %vm639, %v805, -inf
    %863 = vmax.xlane.f32.xlu0 %v862
    %v864 = vpop.xlane.xlu0 %863
    %v865 = vsel %vm639, %v857, -inf
    %866 = vmax.xlane.f32.xlu0 %v865
    %v867 = vpop.xlane.xlu0 %866
    %v868 = vsub.f32 %v805, %v864
    %v869 = vsub.f32 %v857, %v867
    %v870 = vmul.f32 %v868, 1.442695
    %v871 = vpow.pop %v870
    %v872 = vmul.f32 %v869, 1.442695
    %v873 = vpow.pop %v872
    %v874 = vsel %vm639, %v871, 0.0
    %875 = vadd.xlane.f32.xlu0 %v874
    %v876 = vpop.xlane.xlu0 %875
    %v877 = vsel %vm639, %v873, 0.0
    %878 = vadd.xlane.f32.xlu0 %v877
    %v879 = vpop.xlane.xlu0 %878
    %v880 = vrcp.pop %v876
    %v881 = vrcp.pop %v879
    %v882 = vmul.f32 %v871, %v880
    %v883 = vmul.f32 %v873, %v881
    %v884 = vpack.c.bf16 %v882, %v882
    %v885 = vpack.c.bf16 %v883, %v883
    %887 = vrot.lane.b32.xlu0 %v474, 64
    %v888 = vpop.permute.xlu0 %887
    %v890 = vsel %vm639, %v884, 0
    %v893 = vsel %vm667, %v888, 0
    %895 = vmatprep.subr.bf16.mxu0 0
    %896 = vmatpush1.bf16.msra.mxu0 %v893
    %897 = vmatprep.subr.bf16.mxu0 0
    %898 = vmatpush1.bf16.msra.mxu0 0
    %899 = vmatprep.subr.bf16.mxu0 0
    %900 = vmatpush1.bf16.msra.mxu0 0
    %901 = vmatprep.subr.bf16.mxu0 0
    %902 = vmatpush1.bf16.msra.mxu0 0
    %903 = vmatprep.subr.bf16.mxu0 0
    %904 = vmatpush1.bf16.msra.mxu0 0
    %905 = vmatprep.subr.bf16.mxu0 0
    %906 = vmatpush1.bf16.msra.mxu0 0
    %907 = vmatprep.subr.bf16.mxu0 0
    %908 = vmatpush1.bf16.msra.mxu0 0
    %909 = vmatprep.subr.bf16.mxu0 0
    %910 = vmatpush1.bf16.msra.mxu0 0
    %911 = vmatprep.subr.bf16.mxu0 0
    %912 = vmatpush1.bf16.msra.mxu0 0
    %913 = vmatprep.subr.bf16.mxu0 0
    %914 = vmatpush1.bf16.msra.mxu0 0
    %915 = vmatprep.subr.bf16.mxu0 0
    %916 = vmatpush1.bf16.msra.mxu0 0
    %917 = vmatprep.subr.bf16.mxu0 0
    %918 = vmatpush1.bf16.msra.mxu0 0
    %919 = vmatprep.subr.bf16.mxu0 0
    %920 = vmatpush1.bf16.msra.mxu0 0
    %921 = vmatprep.subr.bf16.mxu0 0
    %922 = vmatpush1.bf16.msra.mxu0 0
    %923 = vmatprep.subr.bf16.mxu0 0
    %924 = vmatpush1.bf16.msra.mxu0 0
    %925 = vmatprep.subr.bf16.mxu0 0
    %926 = vmatpush1.bf16.msra.mxu0 0
    %927 = vmatprep.mubr.bf16.mxu0 0
    %928 = vmatmul.mubr.bf16.gmra.mrb[0].mxu0 %v890
    %v929 = vpop.f32.mrb[0].mxu0
    %v930 = vadd.f32 0.0, %v929
    %v931 = vpop.f32.mrb[0].mxu0
    %v932 = vpop.f32.mrb[0].mxu0
    %v933 = vpop.f32.mrb[0].mxu0
    %934 = vdwg.mxu0
    %936 = vrot.lane.b32.xlu0 %v478, 64
    %v937 = vpop.permute.xlu0 %936
    %v939 = vsel %vm639, %v885, 0
    %v942 = vsel %vm667, %v937, 0
    %944 = vmatprep.subr.bf16.mxu0 0
    %945 = vmatpush1.bf16.msra.mxu0 %v942
    %946 = vmatprep.subr.bf16.mxu0 0
    %947 = vmatpush1.bf16.msra.mxu0 0
    %948 = vmatprep.subr.bf16.mxu0 0
    %949 = vmatpush1.bf16.msra.mxu0 0
    %950 = vmatprep.subr.bf16.mxu0 0
    %951 = vmatpush1.bf16.msra.mxu0 0
    %952 = vmatprep.subr.bf16.mxu0 0
    %953 = vmatpush1.bf16.msra.mxu0 0
    %954 = vmatprep.subr.bf16.mxu0 0
    %955 = vmatpush1.bf16.msra.mxu0 0
    %956 = vmatprep.subr.bf16.mxu0 0
    %957 = vmatpush1.bf16.msra.mxu0 0
    %958 = vmatprep.subr.bf16.mxu0 0
    %959 = vmatpush1.bf16.msra.mxu0 0
    %960 = vmatprep.subr.bf16.mxu0 0
    %961 = vmatpush1.bf16.msra.mxu0 0
    %962 = vmatprep.subr.bf16.mxu0 0
    %963 = vmatpush1.bf16.msra.mxu0 0
    %964 = vmatprep.subr.bf16.mxu0 0
    %965 = vmatpush1.bf16.msra.mxu0 0
    %966 = vmatprep.subr.bf16.mxu0 0
    %967 = vmatpush1.bf16.msra.mxu0 0
    %968 = vmatprep.subr.bf16.mxu0 0
    %969 = vmatpush1.bf16.msra.mxu0 0
    %970 = vmatprep.subr.bf16.mxu0 0
    %971 = vmatpush1.bf16.msra.mxu0 0
    %972 = vmatprep.subr.bf16.mxu0 0
    %973 = vmatpush1.bf16.msra.mxu0 0
    %974 = vmatprep.subr.bf16.mxu0 0
    %975 = vmatpush1.bf16.msra.mxu0 0
    %976 = vmatprep.mubr.bf16.mxu0 0
    %977 = vmatmul.mubr.bf16.gmra.mrb[0].mxu0 %v939
    %v978 = vpop.f32.mrb[0].mxu0
    %v979 = vadd.f32 0.0, %v978
    %v980 = vpop.f32.mrb[0].mxu0
    %v981 = vpop.f32.mrb[0].mxu0
    %v982 = vpop.f32.mrb[0].mxu0
    %983 = vdwg.mxu0
    %v984 = vpack.c.bf16 %v979, %v930
    %v993 = vunpack.c.l.b16 %v490
    %v994 = vunpack.c.l.b16 %v491
    %v995 = vunpack.c.l.b16 %v492
    %v996 = vunpack.c.l.b16 %v493
    %v997 = vunpack.c.l.b16 %v494
    %v998 = vunpack.c.l.b16 %v495
    %v999 = vunpack.c.l.b16 %v496
    %v1000 = vunpack.c.l.b16 %v497
    %v1001 = vpack.c.b16 %v994, %v993
    %v1002 = vpack.c.b16 %v996, %v995
    %v1003 = vpack.c.b16 %v998, %v997
    %v1004 = vpack.c.b16 %v1000, %v999
    %v1010 = vsel %vm546, %v984, 0
    %1012 = vmatprep.subr.bf16.mxu0 0
    %1013 = vmatpush1.bf16.msra.mxu0 %v1001
    %1014 = vmatprep.subr.bf16.mxu0 0
    %1015 = vmatpush1.bf16.msra.mxu0 %v1002
    %1016 = vmatprep.subr.bf16.mxu0 0
    %1017 = vmatpush1.bf16.msra.mxu0 %v1003
    %1018 = vmatprep.subr.bf16.mxu0 0
    %1019 = vmatpush1.bf16.msra.mxu0 %v1004
    %1020 = vmatprep.subr.bf16.mxu0 0
    %1021 = vmatpush1.bf16.msra.mxu0 0
    %1022 = vmatprep.subr.bf16.mxu0 0
    %1023 = vmatpush1.bf16.msra.mxu0 0
    %1024 = vmatprep.subr.bf16.mxu0 0
    %1025 = vmatpush1.bf16.msra.mxu0 0
    %1026 = vmatprep.subr.bf16.mxu0 0
    %1027 = vmatpush1.bf16.msra.mxu0 0
    %1028 = vmatprep.subr.bf16.mxu0 0
    %1029 = vmatpush1.bf16.msra.mxu0 0
    %1030 = vmatprep.subr.bf16.mxu0 0
    %1031 = vmatpush1.bf16.msra.mxu0 0
    %1032 = vmatprep.subr.bf16.mxu0 0
    %1033 = vmatpush1.bf16.msra.mxu0 0
    %1034 = vmatprep.subr.bf16.mxu0 0
    %1035 = vmatpush1.bf16.msra.mxu0 0
    %1036 = vmatprep.subr.bf16.mxu0 0
    %1037 = vmatpush1.bf16.msra.mxu0 0
    %1038 = vmatprep.subr.bf16.mxu0 0
    %1039 = vmatpush1.bf16.msra.mxu0 0
    %1040 = vmatprep.subr.bf16.mxu0 0
    %1041 = vmatpush1.bf16.msra.mxu0 0
    %1042 = vmatprep.subr.bf16.mxu0 0
    %1043 = vmatpush1.bf16.msra.mxu0 0
    %1044 = vmatprep.mubr.bf16.mxu0 0
    %1045 = vmatmul.mubr.bf16.gmra.mrb[0].mxu0 %v1010
    %v1046 = vpop.f32.mrb[0].mxu0
    %v1047 = vadd.f32 0.0, %v1046
    %v1048 = vpop.f32.mrb[0].mxu0
    %v1049 = vpop.f32.mrb[0].mxu0
    %v1050 = vadd.f32 0.0, %v1049
    %v1051 = vpop.f32.mrb[0].mxu0
    %1052 = vdwg.mxu0
    %v1061 = vunpack.c.l.b16 %v482
    %v1062 = vunpack.c.l.b16 %v483
    %v1063 = vunpack.c.l.b16 %v484
    %v1064 = vunpack.c.l.b16 %v485
    %v1065 = vunpack.c.l.b16 %v486
    %v1066 = vunpack.c.l.b16 %v487
    %v1067 = vunpack.c.l.b16 %v488
    %v1068 = vunpack.c.l.b16 %v489
    %v1069 = vpack.c.b16 %v1062, %v1061
    %v1070 = vpack.c.b16 %v1064, %v1063
    %v1071 = vpack.c.b16 %v1066, %v1065
    %v1072 = vpack.c.b16 %v1068, %v1067
    %v1078 = vsel %vm546, %v757, 0
    %1080 = vmatprep.subr.bf16.mxu0 0
    %1081 = vmatpush1.bf16.msra.mxu0 %v1069
    %1082 = vmatprep.subr.bf16.mxu0 0
    %1083 = vmatpush1.bf16.msra.mxu0 %v1070
    %1084 = vmatprep.subr.bf16.mxu0 0
    %1085 = vmatpush1.bf16.msra.mxu0 %v1071
    %1086 = vmatprep.subr.bf16.mxu0 0
    %1087 = vmatpush1.bf16.msra.mxu0 %v1072
    %1088 = vmatprep.subr.bf16.mxu0 0
    %1089 = vmatpush1.bf16.msra.mxu0 0
    %1090 = vmatprep.subr.bf16.mxu0 0
    %1091 = vmatpush1.bf16.msra.mxu0 0
    %1092 = vmatprep.subr.bf16.mxu0 0
    %1093 = vmatpush1.bf16.msra.mxu0 0
    %1094 = vmatprep.subr.bf16.mxu0 0
    %1095 = vmatpush1.bf16.msra.mxu0 0
    %1096 = vmatprep.subr.bf16.mxu0 0
    %1097 = vmatpush1.bf16.msra.mxu0 0
    %1098 = vmatprep.subr.bf16.mxu0 0
    %1099 = vmatpush1.bf16.msra.mxu0 0
    %1100 = vmatprep.subr.bf16.mxu0 0
    %1101 = vmatpush1.bf16.msra.mxu0 0
    %1102 = vmatprep.subr.bf16.mxu0 0
    %1103 = vmatpush1.bf16.msra.mxu0 0
    %1104 = vmatprep.subr.bf16.mxu0 0
    %1105 = vmatpush1.bf16.msra.mxu0 0
    %1106 = vmatprep.subr.bf16.mxu0 0
    %1107 = vmatpush1.bf16.msra.mxu0 0
    %1108 = vmatprep.subr.bf16.mxu0 0
    %1109 = vmatpush1.bf16.msra.mxu0 0
    %1110 = vmatprep.subr.bf16.mxu0 0
    %1111 = vmatpush1.bf16.msra.mxu0 0
    %1112 = vmatprep.mubr.bf16.mxu0 0
    %1113 = vmatmul.mubr.bf16.gmra.mrb[0].mxu0 %v1078
    %v1114 = vpop.f32.mrb[0].mxu0
    %v1115 = vadd.f32 %v1047, %v1114
    %v1116 = vpop.f32.mrb[0].mxu0
    %v1117 = vpop.f32.mrb[0].mxu0
    %v1118 = vadd.f32 %v1050, %v1117
    %v1119 = vpop.f32.mrb[0].mxu0
    %1120 = vdwg.mxu0
    %v1122 = vsel %vm546, %v459, 0
    %v1125 = vsel %vm546, %v467, 0
    %1127 = vmatprep.subr.bf16.mxu0 0
    %1128 = vmatpush1.bf16.xpose.msra.mxu0 %v1125
    %1129 = vmatprep.subr.bf16.mxu0 0
    %1130 = vmatpush1.bf16.xpose.msra.mxu0 0
    %1131 = vmatprep.subr.bf16.mxu0 0
    %1132 = vmatpush1.bf16.xpose.msra.mxu0 0
    %1133 = vmatprep.subr.bf16.mxu0 0
    %1134 = vmatpush1.bf16.xpose.msra.mxu0 0
    %1135 = vmatprep.subr.bf16.mxu0 0
    %1136 = vmatpush1.bf16.xpose.msra.mxu0 0
    %1137 = vmatprep.subr.bf16.mxu0 0
    %1138 = vmatpush1.bf16.xpose.msra.mxu0 0
    %1139 = vmatprep.subr.bf16.mxu0 0
    %1140 = vmatpush1.bf16.xpose.msra.mxu0 0
    %1141 = vmatprep.subr.bf16.mxu0 0
    %1142 = vmatpush1.bf16.xpose.msra.mxu0 0
    %1143 = vmatprep.subr.bf16.mxu0 0
    %1144 = vmatpush1.bf16.xpose.msra.mxu0 0
    %1145 = vmatprep.subr.bf16.mxu0 0
    %1146 = vmatpush1.bf16.xpose.msra.mxu0 0
    %1147 = vmatprep.subr.bf16.mxu0 0
    %1148 = vmatpush1.bf16.xpose.msra.mxu0 0
    %1149 = vmatprep.subr.bf16.mxu0 0
    %1150 = vmatpush1.bf16.xpose.msra.mxu0 0
    %1151 = vmatprep.subr.bf16.mxu0 0
    %1152 = vmatpush1.bf16.xpose.msra.mxu0 0
    %1153 = vmatprep.subr.bf16.mxu0 0
    %1154 = vmatpush1.bf16.xpose.msra.mxu0 0
    %1155 = vmatprep.subr.bf16.mxu0 0
    %1156 = vmatpush1.bf16.xpose.msra.mxu0 0
    %1157 = vmatprep.subr.bf16.mxu0 0
    %1158 = vmatpush1.bf16.xpose.msra.mxu0 0
    %1159 = vmatprep.mubr.bf16.mxu0 0
    %1160 = vmatmul.mubr.bf16.gmra.mrb[0].mxu0 %v1122
    %v1161 = vpop.f32.mrb[0].mxu0
    %v1162 = vadd.f32 0.0, %v1161
    %v1163 = vpop.f32.mrb[0].mxu0
    %v1164 = vpop.f32.mrb[0].mxu0
    %v1165 = vpop.f32.mrb[0].mxu0
    %1166 = vdwg.mxu0
    %v1168 = vsel %vm546, %v463, 0
    %v1171 = vsel %vm546, %v471, 0
    %1173 = vmatprep.subr.bf16.mxu0 0
    %1174 = vmatpush1.bf16.xpose.msra.mxu0 %v1171
    %1175 = vmatprep.subr.bf16.mxu0 0
    %1176 = vmatpush1.bf16.xpose.msra.mxu0 0
    %1177 = vmatprep.subr.bf16.mxu0 0
    %1178 = vmatpush1.bf16.xpose.msra.mxu0 0
    %1179 = vmatprep.subr.bf16.mxu0 0
    %1180 = vmatpush1.bf16.xpose.msra.mxu0 0
    %1181 = vmatprep.subr.bf16.mxu0 0
    %1182 = vmatpush1.bf16.xpose.msra.mxu0 0
    %1183 = vmatprep.subr.bf16.mxu0 0
    %1184 = vmatpush1.bf16.xpose.msra.mxu0 0
    %1185 = vmatprep.subr.bf16.mxu0 0
    %1186 = vmatpush1.bf16.xpose.msra.mxu0 0
    %1187 = vmatprep.subr.bf16.mxu0 0
    %1188 = vmatpush1.bf16.xpose.msra.mxu0 0
    %1189 = vmatprep.subr.bf16.mxu0 0
    %1190 = vmatpush1.bf16.xpose.msra.mxu0 0
    %1191 = vmatprep.subr.bf16.mxu0 0
    %1192 = vmatpush1.bf16.xpose.msra.mxu0 0
    %1193 = vmatprep.subr.bf16.mxu0 0
    %1194 = vmatpush1.bf16.xpose.msra.mxu0 0
    %1195 = vmatprep.subr.bf16.mxu0 0
    %1196 = vmatpush1.bf16.xpose.msra.mxu0 0
    %1197 = vmatprep.subr.bf16.mxu0 0
    %1198 = vmatpush1.bf16.xpose.msra.mxu0 0
    %1199 = vmatprep.subr.bf16.mxu0 0
    %1200 = vmatpush1.bf16.xpose.msra.mxu0 0
    %1201 = vmatprep.subr.bf16.mxu0 0
    %1202 = vmatpush1.bf16.xpose.msra.mxu0 0
    %1203 = vmatprep.subr.bf16.mxu0 0
    %1204 = vmatpush1.bf16.xpose.msra.mxu0 0
    %1205 = vmatprep.mubr.bf16.mxu0 0
    %1206 = vmatmul.mubr.bf16.gmra.mrb[0].mxu0 %v1168
    %v1207 = vpop.f32.mrb[0].mxu0
    %v1208 = vadd.f32 0.0, %v1207
    %v1209 = vpop.f32.mrb[0].mxu0
    %v1210 = vpop.f32.mrb[0].mxu0
    %v1211 = vpop.f32.mrb[0].mxu0
    %1212 = vdwg.mxu0
    %v1213 = vsel %vm639, %v1162, -inf
    %1214 = vmax.xlane.f32.xlu0 %v1213
    %v1215 = vpop.xlane.xlu0 %1214
    %v1216 = vsel %vm639, %v1208, -inf
    %1217 = vmax.xlane.f32.xlu0 %v1216
    %v1218 = vpop.xlane.xlu0 %1217
    %v1219 = vsub.f32 %v1162, %v1215
    %v1220 = vsub.f32 %v1208, %v1218
    %v1221 = vmul.f32 %v1219, 1.442695
    %v1222 = vpow.pop %v1221
    %v1223 = vmul.f32 %v1220, 1.442695
    %v1224 = vpow.pop %v1223
    %v1225 = vsel %vm639, %v1222, 0.0
    %1226 = vadd.xlane.f32.xlu0 %v1225
    %v1227 = vpop.xlane.xlu0 %1226
    %v1228 = vsel %vm639, %v1224, 0.0
    %1229 = vadd.xlane.f32.xlu0 %v1228
    %v1230 = vpop.xlane.xlu0 %1229
    %v1231 = vrcp.pop %v1227
    %v1232 = vrcp.pop %v1230
    %v1233 = vmul.f32 %v1222, %v1231
    %v1234 = vmul.f32 %v1224, %v1232
    %v1235 = vpack.c.bf16 %v1233, %v1233
    %v1236 = vpack.c.bf16 %v1234, %v1234
    %v1238 = vsel %vm639, %v1235, 0
    %v1241 = vsel %vm667, %v475, 0
    %1243 = vmatprep.subr.bf16.mxu0 0
    %1244 = vmatpush1.bf16.msra.mxu0 %v1241
    %1245 = vmatprep.subr.bf16.mxu0 0
    %1246 = vmatpush1.bf16.msra.mxu0 0
    %1247 = vmatprep.subr.bf16.mxu0 0
    %1248 = vmatpush1.bf16.msra.mxu0 0
    %1249 = vmatprep.subr.bf16.mxu0 0
    %1250 = vmatpush1.bf16.msra.mxu0 0
    %1251 = vmatprep.subr.bf16.mxu0 0
    %1252 = vmatpush1.bf16.msra.mxu0 0
    %1253 = vmatprep.subr.bf16.mxu0 0
    %1254 = vmatpush1.bf16.msra.mxu0 0
    %1255 = vmatprep.subr.bf16.mxu0 0
    %1256 = vmatpush1.bf16.msra.mxu0 0
    %1257 = vmatprep.subr.bf16.mxu0 0
    %1258 = vmatpush1.bf16.msra.mxu0 0
    %1259 = vmatprep.subr.bf16.mxu0 0
    %1260 = vmatpush1.bf16.msra.mxu0 0
    %1261 = vmatprep.subr.bf16.mxu0 0
    %1262 = vmatpush1.bf16.msra.mxu0 0
    %1263 = vmatprep.subr.bf16.mxu0 0
    %1264 = vmatpush1.bf16.msra.mxu0 0
    %1265 = vmatprep.subr.bf16.mxu0 0
    %1266 = vmatpush1.bf16.msra.mxu0 0
    %1267 = vmatprep.subr.bf16.mxu0 0
    %1268 = vmatpush1.bf16.msra.mxu0 0
    %1269 = vmatprep.subr.bf16.mxu0 0
    %1270 = vmatpush1.bf16.msra.mxu0 0
    %1271 = vmatprep.subr.bf16.mxu0 0
    %1272 = vmatpush1.bf16.msra.mxu0 0
    %1273 = vmatprep.subr.bf16.mxu0 0
    %1274 = vmatpush1.bf16.msra.mxu0 0
    %1275 = vmatprep.mubr.bf16.mxu0 0
    %1276 = vmatmul.mubr.bf16.gmra.mrb[0].mxu0 %v1238
    %v1277 = vpop.f32.mrb[0].mxu0
    %v1278 = vadd.f32 0.0, %v1277
    %v1279 = vpop.f32.mrb[0].mxu0
    %v1280 = vpop.f32.mrb[0].mxu0
    %v1281 = vpop.f32.mrb[0].mxu0
    %1282 = vdwg.mxu0
    %v1284 = vsel %vm639, %v1236, 0
    %v1287 = vsel %vm667, %v479, 0
    %1289 = vmatprep.subr.bf16.mxu0 0
    %1290 = vmatpush1.bf16.msra.mxu0 %v1287
    %1291 = vmatprep.subr.bf16.mxu0 0
    %1292 = vmatpush1.bf16.msra.mxu0 0
    %1293 = vmatprep.subr.bf16.mxu0 0
    %1294 = vmatpush1.bf16.msra.mxu0 0
    %1295 = vmatprep.subr.bf16.mxu0 0
    %1296 = vmatpush1.bf16.msra.mxu0 0
    %1297 = vmatprep.subr.bf16.mxu0 0
    %1298 = vmatpush1.bf16.msra.mxu0 0
    %1299 = vmatprep.subr.bf16.mxu0 0
    %1300 = vmatpush1.bf16.msra.mxu0 0
    %1301 = vmatprep.subr.bf16.mxu0 0
    %1302 = vmatpush1.bf16.msra.mxu0 0
    %1303 = vmatprep.subr.bf16.mxu0 0
    %1304 = vmatpush1.bf16.msra.mxu0 0
    %1305 = vmatprep.subr.bf16.mxu0 0
    %1306 = vmatpush1.bf16.msra.mxu0 0
    %1307 = vmatprep.subr.bf16.mxu0 0
    %1308 = vmatpush1.bf16.msra.mxu0 0
    %1309 = vmatprep.subr.bf16.mxu0 0
    %1310 = vmatpush1.bf16.msra.mxu0 0
    %1311 = vmatprep.subr.bf16.mxu0 0
    %1312 = vmatpush1.bf16.msra.mxu0 0
    %1313 = vmatprep.subr.bf16.mxu0 0
    %1314 = vmatpush1.bf16.msra.mxu0 0
    %1315 = vmatprep.subr.bf16.mxu0 0
    %1316 = vmatpush1.bf16.msra.mxu0 0
    %1317 = vmatprep.subr.bf16.mxu0 0
    %1318 = vmatpush1.bf16.msra.mxu0 0
    %1319 = vmatprep.subr.bf16.mxu0 0
    %1320 = vmatpush1.bf16.msra.mxu0 0
    %1321 = vmatprep.mubr.bf16.mxu0 0
    %1322 = vmatmul.mubr.bf16.gmra.mrb[0].mxu0 %v1284
    %v1323 = vpop.f32.mrb[0].mxu0
    %v1324 = vadd.f32 0.0, %v1323
    %v1325 = vpop.f32.mrb[0].mxu0
    %v1326 = vpop.f32.mrb[0].mxu0
    %v1327 = vpop.f32.mrb[0].mxu0
    %1328 = vdwg.mxu0
    %v1329 = vpack.c.bf16 %v1324, %v1278
    %v1338 = vunpack.c.l.b16 %v498
    %v1339 = vunpack.c.l.b16 %v499
    %v1340 = vunpack.c.l.b16 %v500
    %v1341 = vunpack.c.l.b16 %v501
    %v1342 = vunpack.c.l.b16 %v502
    %v1343 = vunpack.c.l.b16 %v503
    %v1344 = vunpack.c.l.b16 %v504
    %v1345 = vunpack.c.l.b16 %v505
    %v1346 = vpack.c.b16 %v1339, %v1338
    %v1347 = vpack.c.b16 %v1341, %v1340
    %v1348 = vpack.c.b16 %v1343, %v1342
    %v1349 = vpack.c.b16 %v1345, %v1344
    %v1355 = vsel %vm546, %v1329, 0
    %1357 = vmatprep.subr.bf16.mxu0 0
    %1358 = vmatpush1.bf16.msra.mxu0 %v1346
    %1359 = vmatprep.subr.bf16.mxu0 0
    %1360 = vmatpush1.bf16.msra.mxu0 %v1347
    %1361 = vmatprep.subr.bf16.mxu0 0
    %1362 = vmatpush1.bf16.msra.mxu0 %v1348
    %1363 = vmatprep.subr.bf16.mxu0 0
    %1364 = vmatpush1.bf16.msra.mxu0 %v1349
    %1365 = vmatprep.subr.bf16.mxu0 0
    %1366 = vmatpush1.bf16.msra.mxu0 0
    %1367 = vmatprep.subr.bf16.mxu0 0
    %1368 = vmatpush1.bf16.msra.mxu0 0
    %1369 = vmatprep.subr.bf16.mxu0 0
    %1370 = vmatpush1.bf16.msra.mxu0 0
    %1371 = vmatprep.subr.bf16.mxu0 0
    %1372 = vmatpush1.bf16.msra.mxu0 0
    %1373 = vmatprep.subr.bf16.mxu0 0
    %1374 = vmatpush1.bf16.msra.mxu0 0
    %1375 = vmatprep.subr.bf16.mxu0 0
    %1376 = vmatpush1.bf16.msra.mxu0 0
    %1377 = vmatprep.subr.bf16.mxu0 0
    %1378 = vmatpush1.bf16.msra.mxu0 0
    %1379 = vmatprep.subr.bf16.mxu0 0
    %1380 = vmatpush1.bf16.msra.mxu0 0
    %1381 = vmatprep.subr.bf16.mxu0 0
    %1382 = vmatpush1.bf16.msra.mxu0 0
    %1383 = vmatprep.subr.bf16.mxu0 0
    %1384 = vmatpush1.bf16.msra.mxu0 0
    %1385 = vmatprep.subr.bf16.mxu0 0
    %1386 = vmatpush1.bf16.msra.mxu0 0
    %1387 = vmatprep.subr.bf16.mxu0 0
    %1388 = vmatpush1.bf16.msra.mxu0 0
    %1389 = vmatprep.mubr.bf16.mxu0 0
    %1390 = vmatmul.mubr.bf16.gmra.mrb[0].mxu0 %v1355
    %v1391 = vpop.f32.mrb[0].mxu0
    %v1392 = vadd.f32 0.0, %v1391
    %v1393 = vpop.f32.mrb[0].mxu0
    %v1394 = vpop.f32.mrb[0].mxu0
    %v1395 = vadd.f32 0.0, %v1394
    %v1396 = vpop.f32.mrb[0].mxu0
    %1397 = vdwg.mxu0
    %v1398 = vadd.f32 %v1115, %v1392
    %v1399 = vadd.f32 %v1118, %v1395
    %1401 = vrot.lane.b32.xlu0 %v459, 64
    %v1402 = vpop.permute.xlu0 %1401
    %1404 = vrot.lane.b32.xlu0 %v467, 64
    %v1405 = vpop.permute.xlu0 %1404
    %v1407 = vsel %vm546, %v1402, 0
    %v1410 = vsel %vm546, %v1405, 0
    %1412 = vmatprep.subr.bf16.mxu0 0
    %1413 = vmatpush1.bf16.xpose.msra.mxu0 %v1410
    %1414 = vmatprep.subr.bf16.mxu0 0
    %1415 = vmatpush1.bf16.xpose.msra.mxu0 0
    %1416 = vmatprep.subr.bf16.mxu0 0
    %1417 = vmatpush1.bf16.xpose.msra.mxu0 0
    %1418 = vmatprep.subr.bf16.mxu0 0
    %1419 = vmatpush1.bf16.xpose.msra.mxu0 0
    %1420 = vmatprep.subr.bf16.mxu0 0
    %1421 = vmatpush1.bf16.xpose.msra.mxu0 0
    %1422 = vmatprep.subr.bf16.mxu0 0
    %1423 = vmatpush1.bf16.xpose.msra.mxu0 0
    %1424 = vmatprep.subr.bf16.mxu0 0
    %1425 = vmatpush1.bf16.xpose.msra.mxu0 0
    %1426 = vmatprep.subr.bf16.mxu0 0
    %1427 = vmatpush1.bf16.xpose.msra.mxu0 0
    %1428 = vmatprep.subr.bf16.mxu0 0
    %1429 = vmatpush1.bf16.xpose.msra.mxu0 0
    %1430 = vmatprep.subr.bf16.mxu0 0
    %1431 = vmatpush1.bf16.xpose.msra.mxu0 0
    %1432 = vmatprep.subr.bf16.mxu0 0
    %1433 = vmatpush1.bf16.xpose.msra.mxu0 0
    %1434 = vmatprep.subr.bf16.mxu0 0
    %1435 = vmatpush1.bf16.xpose.msra.mxu0 0
    %1436 = vmatprep.subr.bf16.mxu0 0
    %1437 = vmatpush1.bf16.xpose.msra.mxu0 0
    %1438 = vmatprep.subr.bf16.mxu0 0
    %1439 = vmatpush1.bf16.xpose.msra.mxu0 0
    %1440 = vmatprep.subr.bf16.mxu0 0
    %1441 = vmatpush1.bf16.xpose.msra.mxu0 0
    %1442 = vmatprep.subr.bf16.mxu0 0
    %1443 = vmatpush1.bf16.xpose.msra.mxu0 0
    %1444 = vmatprep.mubr.bf16.mxu0 0
    %1445 = vmatmul.mubr.bf16.gmra.mrb[0].mxu0 %v1407
    %v1446 = vpop.f32.mrb[0].mxu0
    %v1447 = vadd.f32 0.0, %v1446
    %v1448 = vpop.f32.mrb[0].mxu0
    %v1449 = vpop.f32.mrb[0].mxu0
    %v1450 = vpop.f32.mrb[0].mxu0
    %1451 = vdwg.mxu0
    %1453 = vrot.lane.b32.xlu0 %v463, 64
    %v1454 = vpop.permute.xlu0 %1453
    %1456 = vrot.lane.b32.xlu0 %v471, 64
    %v1457 = vpop.permute.xlu0 %1456
    %v1459 = vsel %vm546, %v1454, 0
    %v1462 = vsel %vm546, %v1457, 0
    %1464 = vmatprep.subr.bf16.mxu0 0
    %1465 = vmatpush1.bf16.xpose.msra.mxu0 %v1462
    %1466 = vmatprep.subr.bf16.mxu0 0
    %1467 = vmatpush1.bf16.xpose.msra.mxu0 0
    %1468 = vmatprep.subr.bf16.mxu0 0
    %1469 = vmatpush1.bf16.xpose.msra.mxu0 0
    %1470 = vmatprep.subr.bf16.mxu0 0
    %1471 = vmatpush1.bf16.xpose.msra.mxu0 0
    %1472 = vmatprep.subr.bf16.mxu0 0
    %1473 = vmatpush1.bf16.xpose.msra.mxu0 0
    %1474 = vmatprep.subr.bf16.mxu0 0
    %1475 = vmatpush1.bf16.xpose.msra.mxu0 0
    %1476 = vmatprep.subr.bf16.mxu0 0
    %1477 = vmatpush1.bf16.xpose.msra.mxu0 0
    %1478 = vmatprep.subr.bf16.mxu0 0
    %1479 = vmatpush1.bf16.xpose.msra.mxu0 0
    %1480 = vmatprep.subr.bf16.mxu0 0
    %1481 = vmatpush1.bf16.xpose.msra.mxu0 0
    %1482 = vmatprep.subr.bf16.mxu0 0
    %1483 = vmatpush1.bf16.xpose.msra.mxu0 0
    %1484 = vmatprep.subr.bf16.mxu0 0
    %1485 = vmatpush1.bf16.xpose.msra.mxu0 0
    %1486 = vmatprep.subr.bf16.mxu0 0
    %1487 = vmatpush1.bf16.xpose.msra.mxu0 0
    %1488 = vmatprep.subr.bf16.mxu0 0
    %1489 = vmatpush1.bf16.xpose.msra.mxu0 0
    %1490 = vmatprep.subr.bf16.mxu0 0
    %1491 = vmatpush1.bf16.xpose.msra.mxu0 0
    %1492 = vmatprep.subr.bf16.mxu0 0
    %1493 = vmatpush1.bf16.xpose.msra.mxu0 0
    %1494 = vmatprep.subr.bf16.mxu0 0
    %1495 = vmatpush1.bf16.xpose.msra.mxu0 0
    %1496 = vmatprep.mubr.bf16.mxu0 0
    %1497 = vmatmul.mubr.bf16.gmra.mrb[0].mxu0 %v1459
    %v1498 = vpop.f32.mrb[0].mxu0
    %v1499 = vadd.f32 0.0, %v1498
    %v1500 = vpop.f32.mrb[0].mxu0
    %v1501 = vpop.f32.mrb[0].mxu0
    %v1502 = vpop.f32.mrb[0].mxu0
    %1503 = vdwg.mxu0
    %v1504 = vsel %vm639, %v1447, -inf
    %1505 = vmax.xlane.f32.xlu0 %v1504
    %v1506 = vpop.xlane.xlu0 %1505
    %v1507 = vsel %vm639, %v1499, -inf
    %1508 = vmax.xlane.f32.xlu0 %v1507
    %v1509 = vpop.xlane.xlu0 %1508
    %v1510 = vsub.f32 %v1447, %v1506
    %v1511 = vsub.f32 %v1499, %v1509
    %v1512 = vmul.f32 %v1510, 1.442695
    %v1513 = vpow.pop %v1512
    %v1514 = vmul.f32 %v1511, 1.442695
    %v1515 = vpow.pop %v1514
    %v1516 = vsel %vm639, %v1513, 0.0
    %1517 = vadd.xlane.f32.xlu0 %v1516
    %v1518 = vpop.xlane.xlu0 %1517
    %v1519 = vsel %vm639, %v1515, 0.0
    %1520 = vadd.xlane.f32.xlu0 %v1519
    %v1521 = vpop.xlane.xlu0 %1520
    %v1522 = vrcp.pop %v1518
    %v1523 = vrcp.pop %v1521
    %v1524 = vmul.f32 %v1513, %v1522
    %v1525 = vmul.f32 %v1515, %v1523
    %v1526 = vpack.c.bf16 %v1524, %v1524
    %v1527 = vpack.c.bf16 %v1525, %v1525
    %1529 = vrot.lane.b32.xlu0 %v475, 64
    %v1530 = vpop.permute.xlu0 %1529
    %v1532 = vsel %vm639, %v1526, 0
    %v1535 = vsel %vm667, %v1530, 0
    %1537 = vmatprep.subr.bf16.mxu0 0
    %1538 = vmatpush1.bf16.msra.mxu0 %v1535
    %1539 = vmatprep.subr.bf16.mxu0 0
    %1540 = vmatpush1.bf16.msra.mxu0 0
    %1541 = vmatprep.subr.bf16.mxu0 0
    %1542 = vmatpush1.bf16.msra.mxu0 0
    %1543 = vmatprep.subr.bf16.mxu0 0
    %1544 = vmatpush1.bf16.msra.mxu0 0
    %1545 = vmatprep.subr.bf16.mxu0 0
    %1546 = vmatpush1.bf16.msra.mxu0 0
    %1547 = vmatprep.subr.bf16.mxu0 0
    %1548 = vmatpush1.bf16.msra.mxu0 0
    %1549 = vmatprep.subr.bf16.mxu0 0
    %1550 = vmatpush1.bf16.msra.mxu0 0
    %1551 = vmatprep.subr.bf16.mxu0 0
    %1552 = vmatpush1.bf16.msra.mxu0 0
    %1553 = vmatprep.subr.bf16.mxu0 0
    %1554 = vmatpush1.bf16.msra.mxu0 0
    %1555 = vmatprep.subr.bf16.mxu0 0
    %1556 = vmatpush1.bf16.msra.mxu0 0
    %1557 = vmatprep.subr.bf16.mxu0 0
    %1558 = vmatpush1.bf16.msra.mxu0 0
    %1559 = vmatprep.subr.bf16.mxu0 0
    %1560 = vmatpush1.bf16.msra.mxu0 0
    %1561 = vmatprep.subr.bf16.mxu0 0
    %1562 = vmatpush1.bf16.msra.mxu0 0
    %1563 = vmatprep.subr.bf16.mxu0 0
    %1564 = vmatpush1.bf16.msra.mxu0 0
    %1565 = vmatprep.subr.bf16.mxu0 0
    %1566 = vmatpush1.bf16.msra.mxu0 0
    %1567 = vmatprep.subr.bf16.mxu0 0
    %1568 = vmatpush1.bf16.msra.mxu0 0
    %1569 = vmatprep.mubr.bf16.mxu0 0
    %1570 = vmatmul.mubr.bf16.gmra.mrb[0].mxu0 %v1532
    %v1571 = vpop.f32.mrb[0].mxu0
    %v1572 = vadd.f32 0.0, %v1571
    %v1573 = vpop.f32.mrb[0].mxu0
    %v1574 = vpop.f32.mrb[0].mxu0
    %v1575 = vpop.f32.mrb[0].mxu0
    %1576 = vdwg.mxu0
    %1578 = vrot.lane.b32.xlu0 %v479, 64
    %v1579 = vpop.permute.xlu0 %1578
    %v1581 = vsel %vm639, %v1527, 0
    %v1584 = vsel %vm667, %v1579, 0
    %1586 = vmatprep.subr.bf16.mxu0 0
    %1587 = vmatpush1.bf16.msra.mxu0 %v1584
    %1588 = vmatprep.subr.bf16.mxu0 0
    %1589 = vmatpush1.bf16.msra.mxu0 0
    %1590 = vmatprep.subr.bf16.mxu0 0
    %1591 = vmatpush1.bf16.msra.mxu0 0
    %1592 = vmatprep.subr.bf16.mxu0 0
    %1593 = vmatpush1.bf16.msra.mxu0 0
    %1594 = vmatprep.subr.bf16.mxu0 0
    %1595 = vmatpush1.bf16.msra.mxu0 0
    %1596 = vmatprep.subr.bf16.mxu0 0
    %1597 = vmatpush1.bf16.msra.mxu0 0
    %1598 = vmatprep.subr.bf16.mxu0 0
    %1599 = vmatpush1.bf16.msra.mxu0 0
    %1600 = vmatprep.subr.bf16.mxu0 0
    %1601 = vmatpush1.bf16.msra.mxu0 0
    %1602 = vmatprep.subr.bf16.mxu0 0
    %1603 = vmatpush1.bf16.msra.mxu0 0
    %1604 = vmatprep.subr.bf16.mxu0 0
    %1605 = vmatpush1.bf16.msra.mxu0 0
    %1606 = vmatprep.subr.bf16.mxu0 0
    %1607 = vmatpush1.bf16.msra.mxu0 0
    %1608 = vmatprep.subr.bf16.mxu0 0
    %1609 = vmatpush1.bf16.msra.mxu0 0
    %1610 = vmatprep.subr.bf16.mxu0 0
    %1611 = vmatpush1.bf16.msra.mxu0 0
    %1612 = vmatprep.subr.bf16.mxu0 0
    %1613 = vmatpush1.bf16.msra.mxu0 0
    %1614 = vmatprep.subr.bf16.mxu0 0
    %1615 = vmatpush1.bf16.msra.mxu0 0
    %1616 = vmatprep.subr.bf16.mxu0 0
    %1617 = vmatpush1.bf16.msra.mxu0 0
    %1618 = vmatprep.mubr.bf16.mxu0 0
    %1619 = vmatmul.mubr.bf16.gmra.mrb[0].mxu0 %v1581
    %v1620 = vpop.f32.mrb[0].mxu0
    %v1621 = vadd.f32 0.0, %v1620
    %v1622 = vpop.f32.mrb[0].mxu0
    %v1623 = vpop.f32.mrb[0].mxu0
    %v1624 = vpop.f32.mrb[0].mxu0
    %1625 = vdwg.mxu0
    %v1626 = vpack.c.bf16 %v1621, %v1572
    %v1635 = vunpack.c.l.b16 %v506
    %v1636 = vunpack.c.l.b16 %v507
    %v1637 = vunpack.c.l.b16 %v508
    %v1638 = vunpack.c.l.b16 %v509
    %v1639 = vunpack.c.l.b16 %v510
    %v1640 = vunpack.c.l.b16 %v511
    %v1641 = vunpack.c.l.b16 %v512
    %v1642 = vunpack.c.l.b16 %v513
    %v1643 = vpack.c.b16 %v1636, %v1635
    %v1644 = vpack.c.b16 %v1638, %v1637
    %v1645 = vpack.c.b16 %v1640, %v1639
    %v1646 = vpack.c.b16 %v1642, %v1641
    %v1652 = vsel %vm546, %v1626, 0
    %1654 = vmatprep.subr.bf16.mxu0 0
    %1655 = vmatpush1.bf16.msra.mxu0 %v1643
    %1656 = vmatprep.subr.bf16.mxu0 0
    %1657 = vmatpush1.bf16.msra.mxu0 %v1644
    %1658 = vmatprep.subr.bf16.mxu0 0
    %1659 = vmatpush1.bf16.msra.mxu0 %v1645
    %1660 = vmatprep.subr.bf16.mxu0 0
    %1661 = vmatpush1.bf16.msra.mxu0 %v1646
    %1662 = vmatprep.subr.bf16.mxu0 0
    %1663 = vmatpush1.bf16.msra.mxu0 0
    %1664 = vmatprep.subr.bf16.mxu0 0
    %1665 = vmatpush1.bf16.msra.mxu0 0
    %1666 = vmatprep.subr.bf16.mxu0 0
    %1667 = vmatpush1.bf16.msra.mxu0 0
    %1668 = vmatprep.subr.bf16.mxu0 0
    %1669 = vmatpush1.bf16.msra.mxu0 0
    %1670 = vmatprep.subr.bf16.mxu0 0
    %1671 = vmatpush1.bf16.msra.mxu0 0
    %1672 = vmatprep.subr.bf16.mxu0 0
    %1673 = vmatpush1.bf16.msra.mxu0 0
    %1674 = vmatprep.subr.bf16.mxu0 0
    %1675 = vmatpush1.bf16.msra.mxu0 0
    %1676 = vmatprep.subr.bf16.mxu0 0
    %1677 = vmatpush1.bf16.msra.mxu0 0
    %1678 = vmatprep.subr.bf16.mxu0 0
    %1679 = vmatpush1.bf16.msra.mxu0 0
    %1680 = vmatprep.subr.bf16.mxu0 0
    %1681 = vmatpush1.bf16.msra.mxu0 0
    %1682 = vmatprep.subr.bf16.mxu0 0
    %1683 = vmatpush1.bf16.msra.mxu0 0
    %1684 = vmatprep.subr.bf16.mxu0 0
    %1685 = vmatpush1.bf16.msra.mxu0 0
    %1686 = vmatprep.mubr.bf16.mxu0 0
    %1687 = vmatmul.mubr.bf16.gmra.mrb[0].mxu0 %v1652
    %v1688 = vpop.f32.mrb[0].mxu0
    %v1689 = vadd.f32 0.0, %v1688
    %v1690 = vpop.f32.mrb[0].mxu0
    %v1691 = vpop.f32.mrb[0].mxu0
    %v1692 = vadd.f32 0.0, %v1691
    %v1693 = vpop.f32.mrb[0].mxu0
    %1694 = vdwg.mxu0
    %v1695 = vadd.f32 %v1398, %v1689
    %v1696 = vadd.f32 %v1399, %v1692
    %v1698 = vsel %vm546, %v460, 0
    %v1701 = vsel %vm546, %v468, 0
    %1703 = vmatprep.subr.bf16.mxu0 0
    %1704 = vmatpush1.bf16.xpose.msra.mxu0 %v1701
    %1705 = vmatprep.subr.bf16.mxu0 0
    %1706 = vmatpush1.bf16.xpose.msra.mxu0 0
    %1707 = vmatprep.subr.bf16.mxu0 0
    %1708 = vmatpush1.bf16.xpose.msra.mxu0 0
    %1709 = vmatprep.subr.bf16.mxu0 0
    %1710 = vmatpush1.bf16.xpose.msra.mxu0 0
    %1711 = vmatprep.subr.bf16.mxu0 0
    %1712 = vmatpush1.bf16.xpose.msra.mxu0 0
    %1713 = vmatprep.subr.bf16.mxu0 0
    %1714 = vmatpush1.bf16.xpose.msra.mxu0 0
    %1715 = vmatprep.subr.bf16.mxu0 0
    %1716 = vmatpush1.bf16.xpose.msra.mxu0 0
    %1717 = vmatprep.subr.bf16.mxu0 0
    %1718 = vmatpush1.bf16.xpose.msra.mxu0 0
    %1719 = vmatprep.subr.bf16.mxu0 0
    %1720 = vmatpush1.bf16.xpose.msra.mxu0 0
    %1721 = vmatprep.subr.bf16.mxu0 0
    %1722 = vmatpush1.bf16.xpose.msra.mxu0 0
    %1723 = vmatprep.subr.bf16.mxu0 0
    %1724 = vmatpush1.bf16.xpose.msra.mxu0 0
    %1725 = vmatprep.subr.bf16.mxu0 0
    %1726 = vmatpush1.bf16.xpose.msra.mxu0 0
    %1727 = vmatprep.subr.bf16.mxu0 0
    %1728 = vmatpush1.bf16.xpose.msra.mxu0 0
    %1729 = vmatprep.subr.bf16.mxu0 0
    %1730 = vmatpush1.bf16.xpose.msra.mxu0 0
    %1731 = vmatprep.subr.bf16.mxu0 0
    %1732 = vmatpush1.bf16.xpose.msra.mxu0 0
    %1733 = vmatprep.subr.bf16.mxu0 0
    %1734 = vmatpush1.bf16.xpose.msra.mxu0 0
    %1735 = vmatprep.mubr.bf16.mxu0 0
    %1736 = vmatmul.mubr.bf16.gmra.mrb[0].mxu0 %v1698
    %v1737 = vpop.f32.mrb[0].mxu0
    %v1738 = vadd.f32 0.0, %v1737
    %v1739 = vpop.f32.mrb[0].mxu0
    %v1740 = vpop.f32.mrb[0].mxu0
    %v1741 = vpop.f32.mrb[0].mxu0
    %1742 = vdwg.mxu0
    %v1744 = vsel %vm546, %v464, 0
    %v1747 = vsel %vm546, %v472, 0
    %1749 = vmatprep.subr.bf16.mxu0 0
    %1750 = vmatpush1.bf16.xpose.msra.mxu0 %v1747
    %1751 = vmatprep.subr.bf16.mxu0 0
    %1752 = vmatpush1.bf16.xpose.msra.mxu0 0
    %1753 = vmatprep.subr.bf16.mxu0 0
    %1754 = vmatpush1.bf16.xpose.msra.mxu0 0
    %1755 = vmatprep.subr.bf16.mxu0 0
    %1756 = vmatpush1.bf16.xpose.msra.mxu0 0
    %1757 = vmatprep.subr.bf16.mxu0 0
    %1758 = vmatpush1.bf16.xpose.msra.mxu0 0
    %1759 = vmatprep.subr.bf16.mxu0 0
    %1760 = vmatpush1.bf16.xpose.msra.mxu0 0
    %1761 = vmatprep.subr.bf16.mxu0 0
    %1762 = vmatpush1.bf16.xpose.msra.mxu0 0
    %1763 = vmatprep.subr.bf16.mxu0 0
    %1764 = vmatpush1.bf16.xpose.msra.mxu0 0
    %1765 = vmatprep.subr.bf16.mxu0 0
    %1766 = vmatpush1.bf16.xpose.msra.mxu0 0
    %1767 = vmatprep.subr.bf16.mxu0 0
    %1768 = vmatpush1.bf16.xpose.msra.mxu0 0
    %1769 = vmatprep.subr.bf16.mxu0 0
    %1770 = vmatpush1.bf16.xpose.msra.mxu0 0
    %1771 = vmatprep.subr.bf16.mxu0 0
    %1772 = vmatpush1.bf16.xpose.msra.mxu0 0
    %1773 = vmatprep.subr.bf16.mxu0 0
    %1774 = vmatpush1.bf16.xpose.msra.mxu0 0
    %1775 = vmatprep.subr.bf16.mxu0 0
    %1776 = vmatpush1.bf16.xpose.msra.mxu0 0
    %1777 = vmatprep.subr.bf16.mxu0 0
    %1778 = vmatpush1.bf16.xpose.msra.mxu0 0
    %1779 = vmatprep.subr.bf16.mxu0 0
    %1780 = vmatpush1.bf16.xpose.msra.mxu0 0
    %1781 = vmatprep.mubr.bf16.mxu0 0
    %1782 = vmatmul.mubr.bf16.gmra.mrb[0].mxu0 %v1744
    %v1783 = vpop.f32.mrb[0].mxu0
    %v1784 = vadd.f32 0.0, %v1783
    %v1785 = vpop.f32.mrb[0].mxu0
    %v1786 = vpop.f32.mrb[0].mxu0
    %v1787 = vpop.f32.mrb[0].mxu0
    %1788 = vdwg.mxu0
    %v1789 = vsel %vm639, %v1738, -inf
    %1790 = vmax.xlane.f32.xlu0 %v1789
    %v1791 = vpop.xlane.xlu0 %1790
    %v1792 = vsel %vm639, %v1784, -inf
    %1793 = vmax.xlane.f32.xlu0 %v1792
    %v1794 = vpop.xlane.xlu0 %1793
    %v1795 = vsub.f32 %v1738, %v1791
    %v1796 = vsub.f32 %v1784, %v1794
    %v1797 = vmul.f32 %v1795, 1.442695
    %v1798 = vpow.pop %v1797
    %v1799 = vmul.f32 %v1796, 1.442695
    %v1800 = vpow.pop %v1799
    %v1801 = vsel %vm639, %v1798, 0.0
    %1802 = vadd.xlane.f32.xlu0 %v1801
    %v1803 = vpop.xlane.xlu0 %1802
    %v1804 = vsel %vm639, %v1800, 0.0
    %1805 = vadd.xlane.f32.xlu0 %v1804
    %v1806 = vpop.xlane.xlu0 %1805
    %v1807 = vrcp.pop %v1803
    %v1808 = vrcp.pop %v1806
    %v1809 = vmul.f32 %v1798, %v1807
    %v1810 = vmul.f32 %v1800, %v1808
    %v1811 = vpack.c.bf16 %v1809, %v1809
    %v1812 = vpack.c.bf16 %v1810, %v1810
    %v1814 = vsel %vm639, %v1811, 0
    %v1817 = vsel %vm667, %v476, 0
    %1819 = vmatprep.subr.bf16.mxu0 0
    %1820 = vmatpush1.bf16.msra.mxu0 %v1817
    %1821 = vmatprep.subr.bf16.mxu0 0
    %1822 = vmatpush1.bf16.msra.mxu0 0
    %1823 = vmatprep.subr.bf16.mxu0 0
    %1824 = vmatpush1.bf16.msra.mxu0 0
    %1825 = vmatprep.subr.bf16.mxu0 0
    %1826 = vmatpush1.bf16.msra.mxu0 0
    %1827 = vmatprep.subr.bf16.mxu0 0
    %1828 = vmatpush1.bf16.msra.mxu0 0
    %1829 = vmatprep.subr.bf16.mxu0 0
    %1830 = vmatpush1.bf16.msra.mxu0 0
    %1831 = vmatprep.subr.bf16.mxu0 0
    %1832 = vmatpush1.bf16.msra.mxu0 0
    %1833 = vmatprep.subr.bf16.mxu0 0
    %1834 = vmatpush1.bf16.msra.mxu0 0
    %1835 = vmatprep.subr.bf16.mxu0 0
    %1836 = vmatpush1.bf16.msra.mxu0 0
    %1837 = vmatprep.subr.bf16.mxu0 0
    %1838 = vmatpush1.bf16.msra.mxu0 0
    %1839 = vmatprep.subr.bf16.mxu0 0
    %1840 = vmatpush1.bf16.msra.mxu0 0
    %1841 = vmatprep.subr.bf16.mxu0 0
    %1842 = vmatpush1.bf16.msra.mxu0 0
    %1843 = vmatprep.subr.bf16.mxu0 0
    %1844 = vmatpush1.bf16.msra.mxu0 0
    %1845 = vmatprep.subr.bf16.mxu0 0
    %1846 = vmatpush1.bf16.msra.mxu0 0
    %1847 = vmatprep.subr.bf16.mxu0 0
    %1848 = vmatpush1.bf16.msra.mxu0 0
    %1849 = vmatprep.subr.bf16.mxu0 0
    %1850 = vmatpush1.bf16.msra.mxu0 0
    %1851 = vmatprep.mubr.bf16.mxu0 0
    %1852 = vmatmul.mubr.bf16.gmra.mrb[0].mxu0 %v1814
    %v1853 = vpop.f32.mrb[0].mxu0
    %v1854 = vadd.f32 0.0, %v1853
    %v1855 = vpop.f32.mrb[0].mxu0
    %v1856 = vpop.f32.mrb[0].mxu0
    %v1857 = vpop.f32.mrb[0].mxu0
    %1858 = vdwg.mxu0
    %v1860 = vsel %vm639, %v1812, 0
    %v1863 = vsel %vm667, %v480, 0
    %1865 = vmatprep.subr.bf16.mxu0 0
    %1866 = vmatpush1.bf16.msra.mxu0 %v1863
    %1867 = vmatprep.subr.bf16.mxu0 0
    %1868 = vmatpush1.bf16.msra.mxu0 0
    %1869 = vmatprep.subr.bf16.mxu0 0
    %1870 = vmatpush1.bf16.msra.mxu0 0
    %1871 = vmatprep.subr.bf16.mxu0 0
    %1872 = vmatpush1.bf16.msra.mxu0 0
    %1873 = vmatprep.subr.bf16.mxu0 0
    %1874 = vmatpush1.bf16.msra.mxu0 0
    %1875 = vmatprep.subr.bf16.mxu0 0
    %1876 = vmatpush1.bf16.msra.mxu0 0
    %1877 = vmatprep.subr.bf16.mxu0 0
    %1878 = vmatpush1.bf16.msra.mxu0 0
    %1879 = vmatprep.subr.bf16.mxu0 0
    %1880 = vmatpush1.bf16.msra.mxu0 0
    %1881 = vmatprep.subr.bf16.mxu0 0
    %1882 = vmatpush1.bf16.msra.mxu0 0
    %1883 = vmatprep.subr.bf16.mxu0 0
    %1884 = vmatpush1.bf16.msra.mxu0 0
    %1885 = vmatprep.subr.bf16.mxu0 0
    %1886 = vmatpush1.bf16.msra.mxu0 0
    %1887 = vmatprep.subr.bf16.mxu0 0
    %1888 = vmatpush1.bf16.msra.mxu0 0
    %1889 = vmatprep.subr.bf16.mxu0 0
    %1890 = vmatpush1.bf16.msra.mxu0 0
    %1891 = vmatprep.subr.bf16.mxu0 0
    %1892 = vmatpush1.bf16.msra.mxu0 0
    %1893 = vmatprep.subr.bf16.mxu0 0
    %1894 = vmatpush1.bf16.msra.mxu0 0
    %1895 = vmatprep.subr.bf16.mxu0 0
    %1896 = vmatpush1.bf16.msra.mxu0 0
    %1897 = vmatprep.mubr.bf16.mxu0 0
    %1898 = vmatmul.mubr.bf16.gmra.mrb[0].mxu0 %v1860
    %v1899 = vpop.f32.mrb[0].mxu0
    %v1900 = vadd.f32 0.0, %v1899
    %v1901 = vpop.f32.mrb[0].mxu0
    %v1902 = vpop.f32.mrb[0].mxu0
    %v1903 = vpop.f32.mrb[0].mxu0
    %1904 = vdwg.mxu0
    %v1905 = vpack.c.bf16 %v1900, %v1854
    %v1914 = vunpack.c.l.b16 %v514
    %v1915 = vunpack.c.l.b16 %v515
    %v1916 = vunpack.c.l.b16 %v516
    %v1917 = vunpack.c.l.b16 %v517
    %v1918 = vunpack.c.l.b16 %v518
    %v1919 = vunpack.c.l.b16 %v519
    %v1920 = vunpack.c.l.b16 %v520
    %v1921 = vunpack.c.l.b16 %v521
    %v1922 = vpack.c.b16 %v1915, %v1914
    %v1923 = vpack.c.b16 %v1917, %v1916
    %v1924 = vpack.c.b16 %v1919, %v1918
    %v1925 = vpack.c.b16 %v1921, %v1920
    %v1931 = vsel %vm546, %v1905, 0
    %1933 = vmatprep.subr.bf16.mxu0 0
    %1934 = vmatpush1.bf16.msra.mxu0 %v1922
    %1935 = vmatprep.subr.bf16.mxu0 0
    %1936 = vmatpush1.bf16.msra.mxu0 %v1923
    %1937 = vmatprep.subr.bf16.mxu0 0
    %1938 = vmatpush1.bf16.msra.mxu0 %v1924
    %1939 = vmatprep.subr.bf16.mxu0 0
    %1940 = vmatpush1.bf16.msra.mxu0 %v1925
    %1941 = vmatprep.subr.bf16.mxu0 0
    %1942 = vmatpush1.bf16.msra.mxu0 0
    %1943 = vmatprep.subr.bf16.mxu0 0
    %1944 = vmatpush1.bf16.msra.mxu0 0
    %1945 = vmatprep.subr.bf16.mxu0 0
    %1946 = vmatpush1.bf16.msra.mxu0 0
    %1947 = vmatprep.subr.bf16.mxu0 0
    %1948 = vmatpush1.bf16.msra.mxu0 0
    %1949 = vmatprep.subr.bf16.mxu0 0
    %1950 = vmatpush1.bf16.msra.mxu0 0
    %1951 = vmatprep.subr.bf16.mxu0 0
    %1952 = vmatpush1.bf16.msra.mxu0 0
    %1953 = vmatprep.subr.bf16.mxu0 0
    %1954 = vmatpush1.bf16.msra.mxu0 0
    %1955 = vmatprep.subr.bf16.mxu0 0
    %1956 = vmatpush1.bf16.msra.mxu0 0
    %1957 = vmatprep.subr.bf16.mxu0 0
    %1958 = vmatpush1.bf16.msra.mxu0 0
    %1959 = vmatprep.subr.bf16.mxu0 0
    %1960 = vmatpush1.bf16.msra.mxu0 0
    %1961 = vmatprep.subr.bf16.mxu0 0
    %1962 = vmatpush1.bf16.msra.mxu0 0
    %1963 = vmatprep.subr.bf16.mxu0 0
    %1964 = vmatpush1.bf16.msra.mxu0 0
    %1965 = vmatprep.mubr.bf16.mxu0 0
    %1966 = vmatmul.mubr.bf16.gmra.mrb[0].mxu0 %v1931
    %v1967 = vpop.f32.mrb[0].mxu0
    %v1968 = vadd.f32 0.0, %v1967
    %v1969 = vpop.f32.mrb[0].mxu0
    %v1970 = vpop.f32.mrb[0].mxu0
    %v1971 = vadd.f32 0.0, %v1970
    %v1972 = vpop.f32.mrb[0].mxu0
    %1973 = vdwg.mxu0
    %v1974 = vadd.f32 %v1695, %v1968
    %v1975 = vadd.f32 %v1696, %v1971
    %1977 = vrot.lane.b32.xlu0 %v460, 64
    %v1978 = vpop.permute.xlu0 %1977
    %1980 = vrot.lane.b32.xlu0 %v468, 64
    %v1981 = vpop.permute.xlu0 %1980
    %v1983 = vsel %vm546, %v1978, 0
    %v1986 = vsel %vm546, %v1981, 0
    %1988 = vmatprep.subr.bf16.mxu0 0
    %1989 = vmatpush1.bf16.xpose.msra.mxu0 %v1986
    %1990 = vmatprep.subr.bf16.mxu0 0
    %1991 = vmatpush1.bf16.xpose.msra.mxu0 0
    %1992 = vmatprep.subr.bf16.mxu0 0
    %1993 = vmatpush1.bf16.xpose.msra.mxu0 0
    %1994 = vmatprep.subr.bf16.mxu0 0
    %1995 = vmatpush1.bf16.xpose.msra.mxu0 0
    %1996 = vmatprep.subr.bf16.mxu0 0
    %1997 = vmatpush1.bf16.xpose.msra.mxu0 0
    %1998 = vmatprep.subr.bf16.mxu0 0
    %1999 = vmatpush1.bf16.xpose.msra.mxu0 0
    %2000 = vmatprep.subr.bf16.mxu0 0
    %2001 = vmatpush1.bf16.xpose.msra.mxu0 0
    %2002 = vmatprep.subr.bf16.mxu0 0
    %2003 = vmatpush1.bf16.xpose.msra.mxu0 0
    %2004 = vmatprep.subr.bf16.mxu0 0
    %2005 = vmatpush1.bf16.xpose.msra.mxu0 0
    %2006 = vmatprep.subr.bf16.mxu0 0
    %2007 = vmatpush1.bf16.xpose.msra.mxu0 0
    %2008 = vmatprep.subr.bf16.mxu0 0
    %2009 = vmatpush1.bf16.xpose.msra.mxu0 0
    %2010 = vmatprep.subr.bf16.mxu0 0
    %2011 = vmatpush1.bf16.xpose.msra.mxu0 0
    %2012 = vmatprep.subr.bf16.mxu0 0
    %2013 = vmatpush1.bf16.xpose.msra.mxu0 0
    %2014 = vmatprep.subr.bf16.mxu0 0
    %2015 = vmatpush1.bf16.xpose.msra.mxu0 0
    %2016 = vmatprep.subr.bf16.mxu0 0
    %2017 = vmatpush1.bf16.xpose.msra.mxu0 0
    %2018 = vmatprep.subr.bf16.mxu0 0
    %2019 = vmatpush1.bf16.xpose.msra.mxu0 0
    %2020 = vmatprep.mubr.bf16.mxu0 0
    %2021 = vmatmul.mubr.bf16.gmra.mrb[0].mxu0 %v1983
    %v2022 = vpop.f32.mrb[0].mxu0
    %v2023 = vadd.f32 0.0, %v2022
    %v2024 = vpop.f32.mrb[0].mxu0
    %v2025 = vpop.f32.mrb[0].mxu0
    %v2026 = vpop.f32.mrb[0].mxu0
    %2027 = vdwg.mxu0
    %2029 = vrot.lane.b32.xlu0 %v464, 64
    %v2030 = vpop.permute.xlu0 %2029
    %2032 = vrot.lane.b32.xlu0 %v472, 64
    %v2033 = vpop.permute.xlu0 %2032
    %v2035 = vsel %vm546, %v2030, 0
    %v2038 = vsel %vm546, %v2033, 0
    %2040 = vmatprep.subr.bf16.mxu0 0
    %2041 = vmatpush1.bf16.xpose.msra.mxu0 %v2038
    %2042 = vmatprep.subr.bf16.mxu0 0
    %2043 = vmatpush1.bf16.xpose.msra.mxu0 0
    %2044 = vmatprep.subr.bf16.mxu0 0
    %2045 = vmatpush1.bf16.xpose.msra.mxu0 0
    %2046 = vmatprep.subr.bf16.mxu0 0
    %2047 = vmatpush1.bf16.xpose.msra.mxu0 0
    %2048 = vmatprep.subr.bf16.mxu0 0
    %2049 = vmatpush1.bf16.xpose.msra.mxu0 0
    %2050 = vmatprep.subr.bf16.mxu0 0
    %2051 = vmatpush1.bf16.xpose.msra.mxu0 0
    %2052 = vmatprep.subr.bf16.mxu0 0
    %2053 = vmatpush1.bf16.xpose.msra.mxu0 0
    %2054 = vmatprep.subr.bf16.mxu0 0
    %2055 = vmatpush1.bf16.xpose.msra.mxu0 0
    %2056 = vmatprep.subr.bf16.mxu0 0
    %2057 = vmatpush1.bf16.xpose.msra.mxu0 0
    %2058 = vmatprep.subr.bf16.mxu0 0
    %2059 = vmatpush1.bf16.xpose.msra.mxu0 0
    %2060 = vmatprep.subr.bf16.mxu0 0
    %2061 = vmatpush1.bf16.xpose.msra.mxu0 0
    %2062 = vmatprep.subr.bf16.mxu0 0
    %2063 = vmatpush1.bf16.xpose.msra.mxu0 0
    %2064 = vmatprep.subr.bf16.mxu0 0
    %2065 = vmatpush1.bf16.xpose.msra.mxu0 0
    %2066 = vmatprep.subr.bf16.mxu0 0
    %2067 = vmatpush1.bf16.xpose.msra.mxu0 0
    %2068 = vmatprep.subr.bf16.mxu0 0
    %2069 = vmatpush1.bf16.xpose.msra.mxu0 0
    %2070 = vmatprep.subr.bf16.mxu0 0
    %2071 = vmatpush1.bf16.xpose.msra.mxu0 0
    %2072 = vmatprep.mubr.bf16.mxu0 0
    %2073 = vmatmul.mubr.bf16.gmra.mrb[0].mxu0 %v2035
    %v2074 = vpop.f32.mrb[0].mxu0
    %v2075 = vadd.f32 0.0, %v2074
    %v2076 = vpop.f32.mrb[0].mxu0
    %v2077 = vpop.f32.mrb[0].mxu0
    %v2078 = vpop.f32.mrb[0].mxu0
    %2079 = vdwg.mxu0
    %v2080 = vsel %vm639, %v2023, -inf
    %2081 = vmax.xlane.f32.xlu0 %v2080
    %v2082 = vpop.xlane.xlu0 %2081
    %v2083 = vsel %vm639, %v2075, -inf
    %2084 = vmax.xlane.f32.xlu0 %v2083
    %v2085 = vpop.xlane.xlu0 %2084
    %v2086 = vsub.f32 %v2023, %v2082
    %v2087 = vsub.f32 %v2075, %v2085
    %v2088 = vmul.f32 %v2086, 1.442695
    %v2089 = vpow.pop %v2088
    %v2090 = vmul.f32 %v2087, 1.442695
    %v2091 = vpow.pop %v2090
    %v2092 = vsel %vm639, %v2089, 0.0
    %2093 = vadd.xlane.f32.xlu0 %v2092
    %v2094 = vpop.xlane.xlu0 %2093
    %v2095 = vsel %vm639, %v2091, 0.0
    %2096 = vadd.xlane.f32.xlu0 %v2095
    %v2097 = vpop.xlane.xlu0 %2096
    %v2098 = vrcp.pop %v2094
    %v2099 = vrcp.pop %v2097
    %v2100 = vmul.f32 %v2089, %v2098
    %v2101 = vmul.f32 %v2091, %v2099
    %v2102 = vpack.c.bf16 %v2100, %v2100
    %v2103 = vpack.c.bf16 %v2101, %v2101
    %2105 = vrot.lane.b32.xlu0 %v476, 64
    %v2106 = vpop.permute.xlu0 %2105
    %v2108 = vsel %vm639, %v2102, 0
    %v2111 = vsel %vm667, %v2106, 0
    %2113 = vmatprep.subr.bf16.mxu0 0
    %2114 = vmatpush1.bf16.msra.mxu0 %v2111
    %2115 = vmatprep.subr.bf16.mxu0 0
    %2116 = vmatpush1.bf16.msra.mxu0 0
    %2117 = vmatprep.subr.bf16.mxu0 0
    %2118 = vmatpush1.bf16.msra.mxu0 0
    %2119 = vmatprep.subr.bf16.mxu0 0
    %2120 = vmatpush1.bf16.msra.mxu0 0
    %2121 = vmatprep.subr.bf16.mxu0 0
    %2122 = vmatpush1.bf16.msra.mxu0 0
    %2123 = vmatprep.subr.bf16.mxu0 0
    %2124 = vmatpush1.bf16.msra.mxu0 0
    %2125 = vmatprep.subr.bf16.mxu0 0
    %2126 = vmatpush1.bf16.msra.mxu0 0
    %2127 = vmatprep.subr.bf16.mxu0 0
    %2128 = vmatpush1.bf16.msra.mxu0 0
    %2129 = vmatprep.subr.bf16.mxu0 0
    %2130 = vmatpush1.bf16.msra.mxu0 0
    %2131 = vmatprep.subr.bf16.mxu0 0
    %2132 = vmatpush1.bf16.msra.mxu0 0
    %2133 = vmatprep.subr.bf16.mxu0 0
    %2134 = vmatpush1.bf16.msra.mxu0 0
    %2135 = vmatprep.subr.bf16.mxu0 0
    %2136 = vmatpush1.bf16.msra.mxu0 0
    %2137 = vmatprep.subr.bf16.mxu0 0
    %2138 = vmatpush1.bf16.msra.mxu0 0
    %2139 = vmatprep.subr.bf16.mxu0 0
    %2140 = vmatpush1.bf16.msra.mxu0 0
    %2141 = vmatprep.subr.bf16.mxu0 0
    %2142 = vmatpush1.bf16.msra.mxu0 0
    %2143 = vmatprep.subr.bf16.mxu0 0
    %2144 = vmatpush1.bf16.msra.mxu0 0
    %2145 = vmatprep.mubr.bf16.mxu0 0
    %2146 = vmatmul.mubr.bf16.gmra.mrb[0].mxu0 %v2108
    %v2147 = vpop.f32.mrb[0].mxu0
    %v2148 = vadd.f32 0.0, %v2147
    %v2149 = vpop.f32.mrb[0].mxu0
    %v2150 = vpop.f32.mrb[0].mxu0
    %v2151 = vpop.f32.mrb[0].mxu0
    %2152 = vdwg.mxu0
    %2154 = vrot.lane.b32.xlu0 %v480, 64
    %v2155 = vpop.permute.xlu0 %2154
    %v2157 = vsel %vm639, %v2103, 0
    %v2160 = vsel %vm667, %v2155, 0
    %2162 = vmatprep.subr.bf16.mxu0 0
    %2163 = vmatpush1.bf16.msra.mxu0 %v2160
    %2164 = vmatprep.subr.bf16.mxu0 0
    %2165 = vmatpush1.bf16.msra.mxu0 0
    %2166 = vmatprep.subr.bf16.mxu0 0
    %2167 = vmatpush1.bf16.msra.mxu0 0
    %2168 = vmatprep.subr.bf16.mxu0 0
    %2169 = vmatpush1.bf16.msra.mxu0 0
    %2170 = vmatprep.subr.bf16.mxu0 0
    %2171 = vmatpush1.bf16.msra.mxu0 0
    %2172 = vmatprep.subr.bf16.mxu0 0
    %2173 = vmatpush1.bf16.msra.mxu0 0
    %2174 = vmatprep.subr.bf16.mxu0 0
    %2175 = vmatpush1.bf16.msra.mxu0 0
    %2176 = vmatprep.subr.bf16.mxu0 0
    %2177 = vmatpush1.bf16.msra.mxu0 0
    %2178 = vmatprep.subr.bf16.mxu0 0
    %2179 = vmatpush1.bf16.msra.mxu0 0
    %2180 = vmatprep.subr.bf16.mxu0 0
    %2181 = vmatpush1.bf16.msra.mxu0 0
    %2182 = vmatprep.subr.bf16.mxu0 0
    %2183 = vmatpush1.bf16.msra.mxu0 0
    %2184 = vmatprep.subr.bf16.mxu0 0
    %2185 = vmatpush1.bf16.msra.mxu0 0
    %2186 = vmatprep.subr.bf16.mxu0 0
    %2187 = vmatpush1.bf16.msra.mxu0 0
    %2188 = vmatprep.subr.bf16.mxu0 0
    %2189 = vmatpush1.bf16.msra.mxu0 0
    %2190 = vmatprep.subr.bf16.mxu0 0
    %2191 = vmatpush1.bf16.msra.mxu0 0
    %2192 = vmatprep.subr.bf16.mxu0 0
    %2193 = vmatpush1.bf16.msra.mxu0 0
    %2194 = vmatprep.mubr.bf16.mxu0 0
    %2195 = vmatmul.mubr.bf16.gmra.mrb[0].mxu0 %v2157
    %v2196 = vpop.f32.mrb[0].mxu0
    %v2197 = vadd.f32 0.0, %v2196
    %v2198 = vpop.f32.mrb[0].mxu0
    %v2199 = vpop.f32.mrb[0].mxu0
    %v2200 = vpop.f32.mrb[0].mxu0
    %2201 = vdwg.mxu0
    %v2202 = vpack.c.bf16 %v2197, %v2148
    %v2211 = vunpack.c.l.b16 %v522
    %v2212 = vunpack.c.l.b16 %v523
    %v2213 = vunpack.c.l.b16 %v524
    %v2214 = vunpack.c.l.b16 %v525
    %v2215 = vunpack.c.l.b16 %v526
    %v2216 = vunpack.c.l.b16 %v527
    %v2217 = vunpack.c.l.b16 %v528
    %v2218 = vunpack.c.l.b16 %v529
    %v2219 = vpack.c.b16 %v2212, %v2211
    %v2220 = vpack.c.b16 %v2214, %v2213
    %v2221 = vpack.c.b16 %v2216, %v2215
    %v2222 = vpack.c.b16 %v2218, %v2217
    %v2228 = vsel %vm546, %v2202, 0
    %2230 = vmatprep.subr.bf16.mxu0 0
    %2231 = vmatpush1.bf16.msra.mxu0 %v2219
    %2232 = vmatprep.subr.bf16.mxu0 0
    %2233 = vmatpush1.bf16.msra.mxu0 %v2220
    %2234 = vmatprep.subr.bf16.mxu0 0
    %2235 = vmatpush1.bf16.msra.mxu0 %v2221
    %2236 = vmatprep.subr.bf16.mxu0 0
    %2237 = vmatpush1.bf16.msra.mxu0 %v2222
    %2238 = vmatprep.subr.bf16.mxu0 0
    %2239 = vmatpush1.bf16.msra.mxu0 0
    %2240 = vmatprep.subr.bf16.mxu0 0
    %2241 = vmatpush1.bf16.msra.mxu0 0
    %2242 = vmatprep.subr.bf16.mxu0 0
    %2243 = vmatpush1.bf16.msra.mxu0 0
    %2244 = vmatprep.subr.bf16.mxu0 0
    %2245 = vmatpush1.bf16.msra.mxu0 0
    %2246 = vmatprep.subr.bf16.mxu0 0
    %2247 = vmatpush1.bf16.msra.mxu0 0
    %2248 = vmatprep.subr.bf16.mxu0 0
    %2249 = vmatpush1.bf16.msra.mxu0 0
    %2250 = vmatprep.subr.bf16.mxu0 0
    %2251 = vmatpush1.bf16.msra.mxu0 0
    %2252 = vmatprep.subr.bf16.mxu0 0
    %2253 = vmatpush1.bf16.msra.mxu0 0
    %2254 = vmatprep.subr.bf16.mxu0 0
    %2255 = vmatpush1.bf16.msra.mxu0 0
    %2256 = vmatprep.subr.bf16.mxu0 0
    %2257 = vmatpush1.bf16.msra.mxu0 0
    %2258 = vmatprep.subr.bf16.mxu0 0
    %2259 = vmatpush1.bf16.msra.mxu0 0
    %2260 = vmatprep.subr.bf16.mxu0 0
    %2261 = vmatpush1.bf16.msra.mxu0 0
    %2262 = vmatprep.mubr.bf16.mxu0 0
    %2263 = vmatmul.mubr.bf16.gmra.mrb[0].mxu0 %v2228
    %v2264 = vpop.f32.mrb[0].mxu0
    %v2265 = vadd.f32 0.0, %v2264
    %v2266 = vpop.f32.mrb[0].mxu0
    %v2267 = vpop.f32.mrb[0].mxu0
    %v2268 = vadd.f32 0.0, %v2267
    %v2269 = vpop.f32.mrb[0].mxu0
    %2270 = vdwg.mxu0
    %v2271 = vadd.f32 %v1974, %v2265
    %v2272 = vadd.f32 %v1975, %v2268
    %v2274 = vsel %vm546, %v461, 0
    %v2277 = vsel %vm546, %v469, 0
    %2279 = vmatprep.subr.bf16.mxu0 0
    %2280 = vmatpush1.bf16.xpose.msra.mxu0 %v2277
    %2281 = vmatprep.subr.bf16.mxu0 0
    %2282 = vmatpush1.bf16.xpose.msra.mxu0 0
    %2283 = vmatprep.subr.bf16.mxu0 0
    %2284 = vmatpush1.bf16.xpose.msra.mxu0 0
    %2285 = vmatprep.subr.bf16.mxu0 0
    %2286 = vmatpush1.bf16.xpose.msra.mxu0 0
    %2287 = vmatprep.subr.bf16.mxu0 0
    %2288 = vmatpush1.bf16.xpose.msra.mxu0 0
    %2289 = vmatprep.subr.bf16.mxu0 0
    %2290 = vmatpush1.bf16.xpose.msra.mxu0 0
    %2291 = vmatprep.subr.bf16.mxu0 0
    %2292 = vmatpush1.bf16.xpose.msra.mxu0 0
    %2293 = vmatprep.subr.bf16.mxu0 0
    %2294 = vmatpush1.bf16.xpose.msra.mxu0 0
    %2295 = vmatprep.subr.bf16.mxu0 0
    %2296 = vmatpush1.bf16.xpose.msra.mxu0 0
    %2297 = vmatprep.subr.bf16.mxu0 0
    %2298 = vmatpush1.bf16.xpose.msra.mxu0 0
    %2299 = vmatprep.subr.bf16.mxu0 0
    %2300 = vmatpush1.bf16.xpose.msra.mxu0 0
    %2301 = vmatprep.subr.bf16.mxu0 0
    %2302 = vmatpush1.bf16.xpose.msra.mxu0 0
    %2303 = vmatprep.subr.bf16.mxu0 0
    %2304 = vmatpush1.bf16.xpose.msra.mxu0 0
    %2305 = vmatprep.subr.bf16.mxu0 0
    %2306 = vmatpush1.bf16.xpose.msra.mxu0 0
    %2307 = vmatprep.subr.bf16.mxu0 0
    %2308 = vmatpush1.bf16.xpose.msra.mxu0 0
    %2309 = vmatprep.subr.bf16.mxu0 0
    %2310 = vmatpush1.bf16.xpose.msra.mxu0 0
    %2311 = vmatprep.mubr.bf16.mxu0 0
    %2312 = vmatmul.mubr.bf16.gmra.mrb[0].mxu0 %v2274
    %v2313 = vpop.f32.mrb[0].mxu0
    %v2314 = vadd.f32 0.0, %v2313
    %v2315 = vpop.f32.mrb[0].mxu0
    %v2316 = vpop.f32.mrb[0].mxu0
    %v2317 = vpop.f32.mrb[0].mxu0
    %2318 = vdwg.mxu0
    %v2320 = vsel %vm546, %v465, 0
    %v2323 = vsel %vm546, %v473, 0
    %2325 = vmatprep.subr.bf16.mxu0 0
    %2326 = vmatpush1.bf16.xpose.msra.mxu0 %v2323
    %2327 = vmatprep.subr.bf16.mxu0 0
    %2328 = vmatpush1.bf16.xpose.msra.mxu0 0
    %2329 = vmatprep.subr.bf16.mxu0 0
    %2330 = vmatpush1.bf16.xpose.msra.mxu0 0
    %2331 = vmatprep.subr.bf16.mxu0 0
    %2332 = vmatpush1.bf16.xpose.msra.mxu0 0
    %2333 = vmatprep.subr.bf16.mxu0 0
    %2334 = vmatpush1.bf16.xpose.msra.mxu0 0
    %2335 = vmatprep.subr.bf16.mxu0 0
    %2336 = vmatpush1.bf16.xpose.msra.mxu0 0
    %2337 = vmatprep.subr.bf16.mxu0 0
    %2338 = vmatpush1.bf16.xpose.msra.mxu0 0
    %2339 = vmatprep.subr.bf16.mxu0 0
    %2340 = vmatpush1.bf16.xpose.msra.mxu0 0
    %2341 = vmatprep.subr.bf16.mxu0 0
    %2342 = vmatpush1.bf16.xpose.msra.mxu0 0
    %2343 = vmatprep.subr.bf16.mxu0 0
    %2344 = vmatpush1.bf16.xpose.msra.mxu0 0
    %2345 = vmatprep.subr.bf16.mxu0 0
    %2346 = vmatpush1.bf16.xpose.msra.mxu0 0
    %2347 = vmatprep.subr.bf16.mxu0 0
    %2348 = vmatpush1.bf16.xpose.msra.mxu0 0
    %2349 = vmatprep.subr.bf16.mxu0 0
    %2350 = vmatpush1.bf16.xpose.msra.mxu0 0
    %2351 = vmatprep.subr.bf16.mxu0 0
    %2352 = vmatpush1.bf16.xpose.msra.mxu0 0
    %2353 = vmatprep.subr.bf16.mxu0 0
    %2354 = vmatpush1.bf16.xpose.msra.mxu0 0
    %2355 = vmatprep.subr.bf16.mxu0 0
    %2356 = vmatpush1.bf16.xpose.msra.mxu0 0
    %2357 = vmatprep.mubr.bf16.mxu0 0
    %2358 = vmatmul.mubr.bf16.gmra.mrb[0].mxu0 %v2320
    %v2359 = vpop.f32.mrb[0].mxu0
    %v2360 = vadd.f32 0.0, %v2359
    %v2361 = vpop.f32.mrb[0].mxu0
    %v2362 = vpop.f32.mrb[0].mxu0
    %v2363 = vpop.f32.mrb[0].mxu0
    %2364 = vdwg.mxu0
    %v2365 = vsel %vm639, %v2314, -inf
    %2366 = vmax.xlane.f32.xlu0 %v2365
    %v2367 = vpop.xlane.xlu0 %2366
    %v2368 = vsel %vm639, %v2360, -inf
    %2369 = vmax.xlane.f32.xlu0 %v2368
    %v2370 = vpop.xlane.xlu0 %2369
    %v2371 = vsub.f32 %v2314, %v2367
    %v2372 = vsub.f32 %v2360, %v2370
    %v2373 = vmul.f32 %v2371, 1.442695
    %v2374 = vpow.pop %v2373
    %v2375 = vmul.f32 %v2372, 1.442695
    %v2376 = vpow.pop %v2375
    %v2377 = vsel %vm639, %v2374, 0.0
    %2378 = vadd.xlane.f32.xlu0 %v2377
    %v2379 = vpop.xlane.xlu0 %2378
    %v2380 = vsel %vm639, %v2376, 0.0
    %2381 = vadd.xlane.f32.xlu0 %v2380
    %v2382 = vpop.xlane.xlu0 %2381
    %v2383 = vrcp.pop %v2379
    %v2384 = vrcp.pop %v2382
    %v2385 = vmul.f32 %v2374, %v2383
    %v2386 = vmul.f32 %v2376, %v2384
    %v2387 = vpack.c.bf16 %v2385, %v2385
    %v2388 = vpack.c.bf16 %v2386, %v2386
    %v2390 = vsel %vm639, %v2387, 0
    %v2393 = vsel %vm667, %v477, 0
    %2395 = vmatprep.subr.bf16.mxu0 0
    %2396 = vmatpush1.bf16.msra.mxu0 %v2393
    %2397 = vmatprep.subr.bf16.mxu0 0
    %2398 = vmatpush1.bf16.msra.mxu0 0
    %2399 = vmatprep.subr.bf16.mxu0 0
    %2400 = vmatpush1.bf16.msra.mxu0 0
    %2401 = vmatprep.subr.bf16.mxu0 0
    %2402 = vmatpush1.bf16.msra.mxu0 0
    %2403 = vmatprep.subr.bf16.mxu0 0
    %2404 = vmatpush1.bf16.msra.mxu0 0
    %2405 = vmatprep.subr.bf16.mxu0 0
    %2406 = vmatpush1.bf16.msra.mxu0 0
    %2407 = vmatprep.subr.bf16.mxu0 0
    %2408 = vmatpush1.bf16.msra.mxu0 0
    %2409 = vmatprep.subr.bf16.mxu0 0
    %2410 = vmatpush1.bf16.msra.mxu0 0
    %2411 = vmatprep.subr.bf16.mxu0 0
    %2412 = vmatpush1.bf16.msra.mxu0 0
    %2413 = vmatprep.subr.bf16.mxu0 0
    %2414 = vmatpush1.bf16.msra.mxu0 0
    %2415 = vmatprep.subr.bf16.mxu0 0
    %2416 = vmatpush1.bf16.msra.mxu0 0
    %2417 = vmatprep.subr.bf16.mxu0 0
    %2418 = vmatpush1.bf16.msra.mxu0 0
    %2419 = vmatprep.subr.bf16.mxu0 0
    %2420 = vmatpush1.bf16.msra.mxu0 0
    %2421 = vmatprep.subr.bf16.mxu0 0
    %2422 = vmatpush1.bf16.msra.mxu0 0
    %2423 = vmatprep.subr.bf16.mxu0 0
    %2424 = vmatpush1.bf16.msra.mxu0 0
    %2425 = vmatprep.subr.bf16.mxu0 0
    %2426 = vmatpush1.bf16.msra.mxu0 0
    %2427 = vmatprep.mubr.bf16.mxu0 0
    %2428 = vmatmul.mubr.bf16.gmra.mrb[0].mxu0 %v2390
    %v2429 = vpop.f32.mrb[0].mxu0
    %v2430 = vadd.f32 0.0, %v2429
    %v2431 = vpop.f32.mrb[0].mxu0
    %v2432 = vpop.f32.mrb[0].mxu0
    %v2433 = vpop.f32.mrb[0].mxu0
    %2434 = vdwg.mxu0
    %v2436 = vsel %vm639, %v2388, 0
    %v2439 = vsel %vm667, %v481, 0
    %2441 = vmatprep.subr.bf16.mxu0 0
    %2442 = vmatpush1.bf16.msra.mxu0 %v2439
    %2443 = vmatprep.subr.bf16.mxu0 0
    %2444 = vmatpush1.bf16.msra.mxu0 0
    %2445 = vmatprep.subr.bf16.mxu0 0
    %2446 = vmatpush1.bf16.msra.mxu0 0
    %2447 = vmatprep.subr.bf16.mxu0 0
    %2448 = vmatpush1.bf16.msra.mxu0 0
    %2449 = vmatprep.subr.bf16.mxu0 0
    %2450 = vmatpush1.bf16.msra.mxu0 0
    %2451 = vmatprep.subr.bf16.mxu0 0
    %2452 = vmatpush1.bf16.msra.mxu0 0
    %2453 = vmatprep.subr.bf16.mxu0 0
    %2454 = vmatpush1.bf16.msra.mxu0 0
    %2455 = vmatprep.subr.bf16.mxu0 0
    %2456 = vmatpush1.bf16.msra.mxu0 0
    %2457 = vmatprep.subr.bf16.mxu0 0
    %2458 = vmatpush1.bf16.msra.mxu0 0
    %2459 = vmatprep.subr.bf16.mxu0 0
    %2460 = vmatpush1.bf16.msra.mxu0 0
    %2461 = vmatprep.subr.bf16.mxu0 0
    %2462 = vmatpush1.bf16.msra.mxu0 0
    %2463 = vmatprep.subr.bf16.mxu0 0
    %2464 = vmatpush1.bf16.msra.mxu0 0
    %2465 = vmatprep.subr.bf16.mxu0 0
    %2466 = vmatpush1.bf16.msra.mxu0 0
    %2467 = vmatprep.subr.bf16.mxu0 0
    %2468 = vmatpush1.bf16.msra.mxu0 0
    %2469 = vmatprep.subr.bf16.mxu0 0
    %2470 = vmatpush1.bf16.msra.mxu0 0
    %2471 = vmatprep.subr.bf16.mxu0 0
    %2472 = vmatpush1.bf16.msra.mxu0 0
    %2473 = vmatprep.mubr.bf16.mxu0 0
    %2474 = vmatmul.mubr.bf16.gmra.mrb[0].mxu0 %v2436
    %v2475 = vpop.f32.mrb[0].mxu0
    %v2476 = vadd.f32 0.0, %v2475
    %v2477 = vpop.f32.mrb[0].mxu0
    %v2478 = vpop.f32.mrb[0].mxu0
    %v2479 = vpop.f32.mrb[0].mxu0
    %2480 = vdwg.mxu0
    %v2481 = vpack.c.bf16 %v2476, %v2430
    %v2490 = vunpack.c.l.b16 %v530
    %v2491 = vunpack.c.l.b16 %v531
    %v2492 = vunpack.c.l.b16 %v532
    %v2493 = vunpack.c.l.b16 %v533
    %v2494 = vunpack.c.l.b16 %v534
    %v2495 = vunpack.c.l.b16 %v535
    %v2496 = vunpack.c.l.b16 %v536
    %v2497 = vunpack.c.l.b16 %v537
    %v2498 = vpack.c.b16 %v2491, %v2490
    %v2499 = vpack.c.b16 %v2493, %v2492
    %v2500 = vpack.c.b16 %v2495, %v2494
    %v2501 = vpack.c.b16 %v2497, %v2496
    %v2507 = vsel %vm546, %v2481, 0
    %2509 = vmatprep.subr.bf16.mxu0 0
    %2510 = vmatpush1.bf16.msra.mxu0 %v2498
    %2511 = vmatprep.subr.bf16.mxu0 0
    %2512 = vmatpush1.bf16.msra.mxu0 %v2499
    %2513 = vmatprep.subr.bf16.mxu0 0
    %2514 = vmatpush1.bf16.msra.mxu0 %v2500
    %2515 = vmatprep.subr.bf16.mxu0 0
    %2516 = vmatpush1.bf16.msra.mxu0 %v2501
    %2517 = vmatprep.subr.bf16.mxu0 0
    %2518 = vmatpush1.bf16.msra.mxu0 0
    %2519 = vmatprep.subr.bf16.mxu0 0
    %2520 = vmatpush1.bf16.msra.mxu0 0
    %2521 = vmatprep.subr.bf16.mxu0 0
    %2522 = vmatpush1.bf16.msra.mxu0 0
    %2523 = vmatprep.subr.bf16.mxu0 0
    %2524 = vmatpush1.bf16.msra.mxu0 0
    %2525 = vmatprep.subr.bf16.mxu0 0
    %2526 = vmatpush1.bf16.msra.mxu0 0
    %2527 = vmatprep.subr.bf16.mxu0 0
    %2528 = vmatpush1.bf16.msra.mxu0 0
    %2529 = vmatprep.subr.bf16.mxu0 0
    %2530 = vmatpush1.bf16.msra.mxu0 0
    %2531 = vmatprep.subr.bf16.mxu0 0
    %2532 = vmatpush1.bf16.msra.mxu0 0
    %2533 = vmatprep.subr.bf16.mxu0 0
    %2534 = vmatpush1.bf16.msra.mxu0 0
    %2535 = vmatprep.subr.bf16.mxu0 0
    %2536 = vmatpush1.bf16.msra.mxu0 0
    %2537 = vmatprep.subr.bf16.mxu0 0
    %2538 = vmatpush1.bf16.msra.mxu0 0
    %2539 = vmatprep.subr.bf16.mxu0 0
    %2540 = vmatpush1.bf16.msra.mxu0 0
    %2541 = vmatprep.mubr.bf16.mxu0 0
    %2542 = vmatmul.mubr.bf16.gmra.mrb[0].mxu0 %v2507
    %v2543 = vpop.f32.mrb[0].mxu0
    %v2544 = vadd.f32 0.0, %v2543
    %v2545 = vpop.f32.mrb[0].mxu0
    %v2546 = vpop.f32.mrb[0].mxu0
    %v2547 = vadd.f32 0.0, %v2546
    %v2548 = vpop.f32.mrb[0].mxu0
    %2549 = vdwg.mxu0
    %v2550 = vadd.f32 %v2271, %v2544
    %v2551 = vadd.f32 %v2272, %v2547
    %2553 = vrot.lane.b32.xlu0 %v461, 64
    %v2554 = vpop.permute.xlu0 %2553
    %2556 = vrot.lane.b32.xlu0 %v469, 64
    %v2557 = vpop.permute.xlu0 %2556
    %v2559 = vsel %vm546, %v2554, 0
    %v2562 = vsel %vm546, %v2557, 0
    %2564 = vmatprep.subr.bf16.mxu0 0
    %2565 = vmatpush1.bf16.xpose.msra.mxu0 %v2562
    %2566 = vmatprep.subr.bf16.mxu0 0
    %2567 = vmatpush1.bf16.xpose.msra.mxu0 0
    %2568 = vmatprep.subr.bf16.mxu0 0
    %2569 = vmatpush1.bf16.xpose.msra.mxu0 0
    %2570 = vmatprep.subr.bf16.mxu0 0
    %2571 = vmatpush1.bf16.xpose.msra.mxu0 0
    %2572 = vmatprep.subr.bf16.mxu0 0
    %2573 = vmatpush1.bf16.xpose.msra.mxu0 0
    %2574 = vmatprep.subr.bf16.mxu0 0
    %2575 = vmatpush1.bf16.xpose.msra.mxu0 0
    %2576 = vmatprep.subr.bf16.mxu0 0
    %2577 = vmatpush1.bf16.xpose.msra.mxu0 0
    %2578 = vmatprep.subr.bf16.mxu0 0
    %2579 = vmatpush1.bf16.xpose.msra.mxu0 0
    %2580 = vmatprep.subr.bf16.mxu0 0
    %2581 = vmatpush1.bf16.xpose.msra.mxu0 0
    %2582 = vmatprep.subr.bf16.mxu0 0
    %2583 = vmatpush1.bf16.xpose.msra.mxu0 0
    %2584 = vmatprep.subr.bf16.mxu0 0
    %2585 = vmatpush1.bf16.xpose.msra.mxu0 0
    %2586 = vmatprep.subr.bf16.mxu0 0
    %2587 = vmatpush1.bf16.xpose.msra.mxu0 0
    %2588 = vmatprep.subr.bf16.mxu0 0
    %2589 = vmatpush1.bf16.xpose.msra.mxu0 0
    %2590 = vmatprep.subr.bf16.mxu0 0
    %2591 = vmatpush1.bf16.xpose.msra.mxu0 0
    %2592 = vmatprep.subr.bf16.mxu0 0
    %2593 = vmatpush1.bf16.xpose.msra.mxu0 0
    %2594 = vmatprep.subr.bf16.mxu0 0
    %2595 = vmatpush1.bf16.xpose.msra.mxu0 0
    %2596 = vmatprep.mubr.bf16.mxu0 0
    %2597 = vmatmul.mubr.bf16.gmra.mrb[0].mxu0 %v2559
    %v2598 = vpop.f32.mrb[0].mxu0
    %v2599 = vadd.f32 0.0, %v2598
    %v2600 = vpop.f32.mrb[0].mxu0
    %v2601 = vpop.f32.mrb[0].mxu0
    %v2602 = vpop.f32.mrb[0].mxu0
    %2603 = vdwg.mxu0
    %2605 = vrot.lane.b32.xlu0 %v465, 64
    %v2606 = vpop.permute.xlu0 %2605
    %2608 = vrot.lane.b32.xlu0 %v473, 64
    %v2609 = vpop.permute.xlu0 %2608
    %v2611 = vsel %vm546, %v2606, 0
    %v2614 = vsel %vm546, %v2609, 0
    %2616 = vmatprep.subr.bf16.mxu0 0
    %2617 = vmatpush1.bf16.xpose.msra.mxu0 %v2614
    %2618 = vmatprep.subr.bf16.mxu0 0
    %2619 = vmatpush1.bf16.xpose.msra.mxu0 0
    %2620 = vmatprep.subr.bf16.mxu0 0
    %2621 = vmatpush1.bf16.xpose.msra.mxu0 0
    %2622 = vmatprep.subr.bf16.mxu0 0
    %2623 = vmatpush1.bf16.xpose.msra.mxu0 0
    %2624 = vmatprep.subr.bf16.mxu0 0
    %2625 = vmatpush1.bf16.xpose.msra.mxu0 0
    %2626 = vmatprep.subr.bf16.mxu0 0
    %2627 = vmatpush1.bf16.xpose.msra.mxu0 0
    %2628 = vmatprep.subr.bf16.mxu0 0
    %2629 = vmatpush1.bf16.xpose.msra.mxu0 0
    %2630 = vmatprep.subr.bf16.mxu0 0
    %2631 = vmatpush1.bf16.xpose.msra.mxu0 0
    %2632 = vmatprep.subr.bf16.mxu0 0
    %2633 = vmatpush1.bf16.xpose.msra.mxu0 0
    %2634 = vmatprep.subr.bf16.mxu0 0
    %2635 = vmatpush1.bf16.xpose.msra.mxu0 0
    %2636 = vmatprep.subr.bf16.mxu0 0
    %2637 = vmatpush1.bf16.xpose.msra.mxu0 0
    %2638 = vmatprep.subr.bf16.mxu0 0
    %2639 = vmatpush1.bf16.xpose.msra.mxu0 0
    %2640 = vmatprep.subr.bf16.mxu0 0
    %2641 = vmatpush1.bf16.xpose.msra.mxu0 0
    %2642 = vmatprep.subr.bf16.mxu0 0
    %2643 = vmatpush1.bf16.xpose.msra.mxu0 0
    %2644 = vmatprep.subr.bf16.mxu0 0
    %2645 = vmatpush1.bf16.xpose.msra.mxu0 0
    %2646 = vmatprep.subr.bf16.mxu0 0
    %2647 = vmatpush1.bf16.xpose.msra.mxu0 0
    %2648 = vmatprep.mubr.bf16.mxu0 0
    %2649 = vmatmul.mubr.bf16.gmra.mrb[0].mxu0 %v2611
    %v2650 = vpop.f32.mrb[0].mxu0
    %v2651 = vadd.f32 0.0, %v2650
    %v2652 = vpop.f32.mrb[0].mxu0
    %v2653 = vpop.f32.mrb[0].mxu0
    %v2654 = vpop.f32.mrb[0].mxu0
    %2655 = vdwg.mxu0
    %v2656 = vsel %vm639, %v2599, -inf
    %2657 = vmax.xlane.f32.xlu0 %v2656
    %v2658 = vpop.xlane.xlu0 %2657
    %v2659 = vsel %vm639, %v2651, -inf
    %2660 = vmax.xlane.f32.xlu0 %v2659
    %v2661 = vpop.xlane.xlu0 %2660
    %v2662 = vsub.f32 %v2599, %v2658
    %v2663 = vsub.f32 %v2651, %v2661
    %v2664 = vmul.f32 %v2662, 1.442695
    %v2665 = vpow.pop %v2664
    %v2666 = vmul.f32 %v2663, 1.442695
    %v2667 = vpow.pop %v2666
    %v2668 = vsel %vm639, %v2665, 0.0
    %2669 = vadd.xlane.f32.xlu0 %v2668
    %v2670 = vpop.xlane.xlu0 %2669
    %v2671 = vsel %vm639, %v2667, 0.0
    %2672 = vadd.xlane.f32.xlu0 %v2671
    %v2673 = vpop.xlane.xlu0 %2672
    %v2674 = vrcp.pop %v2670
    %v2675 = vrcp.pop %v2673
    %v2676 = vmul.f32 %v2665, %v2674
    %v2677 = vmul.f32 %v2667, %v2675
    %v2678 = vpack.c.bf16 %v2676, %v2676
    %v2679 = vpack.c.bf16 %v2677, %v2677
    %2681 = vrot.lane.b32.xlu0 %v477, 64
    %v2682 = vpop.permute.xlu0 %2681
    %v2684 = vsel %vm639, %v2678, 0
    %v2687 = vsel %vm667, %v2682, 0
    %2689 = vmatprep.subr.bf16.mxu0 0
    %2690 = vmatpush1.bf16.msra.mxu0 %v2687
    %2691 = vmatprep.subr.bf16.mxu0 0
    %2692 = vmatpush1.bf16.msra.mxu0 0
    %2693 = vmatprep.subr.bf16.mxu0 0
    %2694 = vmatpush1.bf16.msra.mxu0 0
    %2695 = vmatprep.subr.bf16.mxu0 0
    %2696 = vmatpush1.bf16.msra.mxu0 0
    %2697 = vmatprep.subr.bf16.mxu0 0
    %2698 = vmatpush1.bf16.msra.mxu0 0
    %2699 = vmatprep.subr.bf16.mxu0 0
    %2700 = vmatpush1.bf16.msra.mxu0 0
    %2701 = vmatprep.subr.bf16.mxu0 0
    %2702 = vmatpush1.bf16.msra.mxu0 0
    %2703 = vmatprep.subr.bf16.mxu0 0
    %2704 = vmatpush1.bf16.msra.mxu0 0
    %2705 = vmatprep.subr.bf16.mxu0 0
    %2706 = vmatpush1.bf16.msra.mxu0 0
    %2707 = vmatprep.subr.bf16.mxu0 0
    %2708 = vmatpush1.bf16.msra.mxu0 0
    %2709 = vmatprep.subr.bf16.mxu0 0
    %2710 = vmatpush1.bf16.msra.mxu0 0
    %2711 = vmatprep.subr.bf16.mxu0 0
    %2712 = vmatpush1.bf16.msra.mxu0 0
    %2713 = vmatprep.subr.bf16.mxu0 0
    %2714 = vmatpush1.bf16.msra.mxu0 0
    %2715 = vmatprep.subr.bf16.mxu0 0
    %2716 = vmatpush1.bf16.msra.mxu0 0
    %2717 = vmatprep.subr.bf16.mxu0 0
    %2718 = vmatpush1.bf16.msra.mxu0 0
    %2719 = vmatprep.subr.bf16.mxu0 0
    %2720 = vmatpush1.bf16.msra.mxu0 0
    %2721 = vmatprep.mubr.bf16.mxu0 0
    %2722 = vmatmul.mubr.bf16.gmra.mrb[0].mxu0 %v2684
    %v2723 = vpop.f32.mrb[0].mxu0
    %v2724 = vadd.f32 0.0, %v2723
    %v2725 = vpop.f32.mrb[0].mxu0
    %v2726 = vpop.f32.mrb[0].mxu0
    %v2727 = vpop.f32.mrb[0].mxu0
    %2728 = vdwg.mxu0
    %2730 = vrot.lane.b32.xlu0 %v481, 64
    %v2731 = vpop.permute.xlu0 %2730
    %v2733 = vsel %vm639, %v2679, 0
    %v2736 = vsel %vm667, %v2731, 0
    %2738 = vmatprep.subr.bf16.mxu0 0
    %2739 = vmatpush1.bf16.msra.mxu0 %v2736
    %2740 = vmatprep.subr.bf16.mxu0 0
    %2741 = vmatpush1.bf16.msra.mxu0 0
    %2742 = vmatprep.subr.bf16.mxu0 0
    %2743 = vmatpush1.bf16.msra.mxu0 0
    %2744 = vmatprep.subr.bf16.mxu0 0
    %2745 = vmatpush1.bf16.msra.mxu0 0
    %2746 = vmatprep.subr.bf16.mxu0 0
    %2747 = vmatpush1.bf16.msra.mxu0 0
    %2748 = vmatprep.subr.bf16.mxu0 0
    %2749 = vmatpush1.bf16.msra.mxu0 0
    %2750 = vmatprep.subr.bf16.mxu0 0
    %2751 = vmatpush1.bf16.msra.mxu0 0
    %2752 = vmatprep.subr.bf16.mxu0 0
    %2753 = vmatpush1.bf16.msra.mxu0 0
    %2754 = vmatprep.subr.bf16.mxu0 0
    %2755 = vmatpush1.bf16.msra.mxu0 0
    %2756 = vmatprep.subr.bf16.mxu0 0
    %2757 = vmatpush1.bf16.msra.mxu0 0
    %2758 = vmatprep.subr.bf16.mxu0 0
    %2759 = vmatpush1.bf16.msra.mxu0 0
    %2760 = vmatprep.subr.bf16.mxu0 0
    %2761 = vmatpush1.bf16.msra.mxu0 0
    %2762 = vmatprep.subr.bf16.mxu0 0
    %2763 = vmatpush1.bf16.msra.mxu0 0
    %2764 = vmatprep.subr.bf16.mxu0 0
    %2765 = vmatpush1.bf16.msra.mxu0 0
    %2766 = vmatprep.subr.bf16.mxu0 0
    %2767 = vmatpush1.bf16.msra.mxu0 0
    %2768 = vmatprep.subr.bf16.mxu0 0
    %2769 = vmatpush1.bf16.msra.mxu0 0
    %2770 = vmatprep.mubr.bf16.mxu0 0
    %2771 = vmatmul.mubr.bf16.gmra.mrb[0].mxu0 %v2733
    %v2772 = vpop.f32.mrb[0].mxu0
    %v2773 = vadd.f32 0.0, %v2772
    %v2774 = vpop.f32.mrb[0].mxu0
    %v2775 = vpop.f32.mrb[0].mxu0
    %v2776 = vpop.f32.mrb[0].mxu0
    %2777 = vdwg.mxu0
    %v2778 = vpack.c.bf16 %v2773, %v2724
    %v2787 = vunpack.c.l.b16 %v538
    %v2788 = vunpack.c.l.b16 %v539
    %v2789 = vunpack.c.l.b16 %v540
    %v2790 = vunpack.c.l.b16 %v541
    %v2791 = vunpack.c.l.b16 %v542
    %v2792 = vunpack.c.l.b16 %v543
    %v2793 = vunpack.c.l.b16 %v544
    %v2794 = vunpack.c.l.b16 %v545
    %v2795 = vpack.c.b16 %v2788, %v2787
    %v2796 = vpack.c.b16 %v2790, %v2789
    %v2797 = vpack.c.b16 %v2792, %v2791
    %v2798 = vpack.c.b16 %v2794, %v2793
    %v2804 = vsel %vm546, %v2778, 0
    %2806 = vmatprep.subr.bf16.mxu0 0
    %2807 = vmatpush1.bf16.msra.mxu0 %v2795
    %2808 = vmatprep.subr.bf16.mxu0 0
    %2809 = vmatpush1.bf16.msra.mxu0 %v2796
    %2810 = vmatprep.subr.bf16.mxu0 0
    %2811 = vmatpush1.bf16.msra.mxu0 %v2797
    %2812 = vmatprep.subr.bf16.mxu0 0
    %2813 = vmatpush1.bf16.msra.mxu0 %v2798
    %2814 = vmatprep.subr.bf16.mxu0 0
    %2815 = vmatpush1.bf16.msra.mxu0 0
    %2816 = vmatprep.subr.bf16.mxu0 0
    %2817 = vmatpush1.bf16.msra.mxu0 0
    %2818 = vmatprep.subr.bf16.mxu0 0
    %2819 = vmatpush1.bf16.msra.mxu0 0
    %2820 = vmatprep.subr.bf16.mxu0 0
    %2821 = vmatpush1.bf16.msra.mxu0 0
    %2822 = vmatprep.subr.bf16.mxu0 0
    %2823 = vmatpush1.bf16.msra.mxu0 0
    %2824 = vmatprep.subr.bf16.mxu0 0
    %2825 = vmatpush1.bf16.msra.mxu0 0
    %2826 = vmatprep.subr.bf16.mxu0 0
    %2827 = vmatpush1.bf16.msra.mxu0 0
    %2828 = vmatprep.subr.bf16.mxu0 0
    %2829 = vmatpush1.bf16.msra.mxu0 0
    %2830 = vmatprep.subr.bf16.mxu0 0
    %2831 = vmatpush1.bf16.msra.mxu0 0
    %2832 = vmatprep.subr.bf16.mxu0 0
    %2833 = vmatpush1.bf16.msra.mxu0 0
    %2834 = vmatprep.subr.bf16.mxu0 0
    %2835 = vmatpush1.bf16.msra.mxu0 0
    %2836 = vmatprep.subr.bf16.mxu0 0
    %2837 = vmatpush1.bf16.msra.mxu0 0
    %2838 = vmatprep.mubr.bf16.mxu0 0
    %2839 = vmatmul.mubr.bf16.gmra.mrb[0].mxu0 %v2804
    %v2840 = vpop.f32.mrb[0].mxu0
    %v2841 = vadd.f32 0.0, %v2840
    %v2842 = vpop.f32.mrb[0].mxu0
    %v2843 = vpop.f32.mrb[0].mxu0
    %v2844 = vadd.f32 0.0, %v2843
    %v2845 = vpop.f32.mrb[0].mxu0
    %2846 = vdwg.mxu0
    %v2847 = vadd.f32 %v2550, %v2841
    %v2848 = vadd.f32 %v2551, %v2844
    %v2849 = vlaneseq
    %v2850 = vshrl.u32 %v2849, 7
    %v2851 = vsub.s32 0, %v2850
    %v2852 = vrot.slane %v38, %v2851
    %v2853 = vadd.f32 %v2847, %v2852
    %v2854 = vadd.f32 %v2848, %v2852
    %v2855 = vadd.f32 %v2853, %v34
    %v2856 = vadd.f32 %v2854, %v35
    %v2857 = vsel %vm88, %v2855, 0.0
    %2858 = vadd.xlane.f32.xlu0 %v2857
    %v2859 = vpop.xlane.xlu0 %2858
    %v2860 = vsel %vm88, %v2856, 0.0
    %2861 = vadd.xlane.f32.xlu0 %v2860
    %v2862 = vpop.xlane.xlu0 %2861
    %v2863 = vrcp.pop 32.0
    %v2864 = vmul.f32 %v2859, %v2863
    %v2865 = vmul.f32 %v2862, %v2863
    %v2866 = vsub.f32 %v2855, %v2864
    %v2867 = vsub.f32 %v2856, %v2865
    %v2868 = vmul.f32 %v2866, %v2866
    %v2869 = vmul.f32 %v2867, %v2867
    %v2870 = vsel %vm88, %v2868, 0.0
    %2871 = vadd.xlane.f32.xlu0 %v2870
    %v2872 = vpop.xlane.xlu0 %2871
    %v2873 = vsel %vm88, %v2869, 0.0
    %2874 = vadd.xlane.f32.xlu0 %v2873
    %v2875 = vpop.xlane.xlu0 %2874
    %v2876 = vmul.f32 %v2872, %v2863
    %v2877 = vmul.f32 %v2875, %v2863
    %v2878 = vadd.f32 %v2876, 1e-05
    %v2879 = vadd.f32 %v2877, 1e-05
    %v2880 = vrsqrt.pop %v2878
    %v2881 = vrsqrt.pop %v2879
    %v2882 = vmul.f32 %v2866, %v2880
    %v2883 = vmul.f32 %v2867, %v2881
    %v2884 = vlaneseq
    %v2885 = vshrl.u32 %v2884, 7
    %v2886 = vsub.s32 2, %v2885
    %v2887 = vrot.slane %v38, %v2886
    %v2888 = vmul.f32 %v2882, %v2887
    %v2889 = vmul.f32 %v2883, %v2887
    %v2890 = vlaneseq
    %v2891 = vshrl.u32 %v2890, 7
    %v2892 = vsub.s32 3, %v2891
    %v2893 = vrot.slane %v38, %v2892
    %v2894 = vadd.f32 %v2888, %v2893
    %v2895 = vadd.f32 %v2889, %v2893
    %v2896 = vsel %vm88, %v2894, 0.0
    %2897 = vadd.xlane.f32.xlu0 %v2896
    %v2898 = vpop.xlane.xlu0 %2897
    %v2899 = vsel %vm88, %v2895, 0.0
    %2900 = vadd.xlane.f32.xlu0 %v2899
    %v2901 = vpop.xlane.xlu0 %2900
    %v2902 = vmul.f32 %v2898, %v2863
    %v2903 = vmul.f32 %v2901, %v2863
    %v2904 = vsub.f32 %v2894, %v2902
    %v2905 = vsub.f32 %v2895, %v2903
    %v2906 = vmul.f32 %v2904, %v2904
    %v2907 = vmul.f32 %v2905, %v2905
    %v2908 = vsel %vm88, %v2906, 0.0
    %2909 = vadd.xlane.f32.xlu0 %v2908
    %v2910 = vpop.xlane.xlu0 %2909
    %v2911 = vsel %vm88, %v2907, 0.0
    %2912 = vadd.xlane.f32.xlu0 %v2911
    %v2913 = vpop.xlane.xlu0 %2912
    %v2914 = vmul.f32 %v2910, %v2863
    %v2915 = vmul.f32 %v2913, %v2863
    %v2916 = vadd.f32 %v2914, 1e-05
    %v2917 = vadd.f32 %v2915, 1e-05
    %v2918 = vrsqrt.pop %v2916
    %v2919 = vrsqrt.pop %v2917
    %v2920 = vmul.f32 %v2904, %v2918
    %v2921 = vmul.f32 %v2905, %v2919
    %v2922 = vlaneseq
    %v2923 = vshrl.u32 %v2922, 7
    %v2924 = vsub.s32 4, %v2923
    %v2925 = vrot.slane %v38, %v2924
    %v2926 = vmul.f32 %v2920, %v2925
    %v2927 = vmul.f32 %v2921, %v2925
    %v2928 = vlaneseq
    %v2929 = vshrl.u32 %v2928, 7
    %v2930 = vsub.s32 5, %v2929
    %v2931 = vrot.slane %v38, %v2930
    %v2932 = vadd.f32 %v2926, %v2931
    %v2933 = vadd.f32 %v2927, %v2931
    %v2934 = vpack.c.bf16 %v2933, %v2932
    %v2935 = vld [vmem:[%s5] sm:$0xf]
    %v2936 = vld [vmem:[%s5 + $0x4] sm:$0xf]
    %v2937 = vld [vmem:[%s5 + $0x8] sm:$0xf]
    %v2938 = vld [vmem:[%s5 + $0xc] sm:$0xf]
    %v2939 = vld [vmem:[%s8] sm:$0x1]
    %v2941 = vlaneseq
    %v2942 = vshrl.u32 %v2941, 7
    %v2943 = vsub.s32 0, %v2942
    %v2944 = vrot.slane %v2939, %v2943
    %v2950 = vunpack.c.l.b16 %v2935
    %v2951 = vunpack.c.l.b16 %v2936
    %v2952 = vunpack.c.l.b16 %v2937
    %v2953 = vunpack.c.l.b16 %v2938
    %v2954 = vpack.c.b16 %v2951, %v2950
    %v2955 = vpack.c.b16 %v2953, %v2952
    %v2959 = vsel %vm88, %v2934, 0
    %2961 = vmatprep.subr.bf16.mxu0 0
    %2962 = vmatpush1.bf16.msra.mxu0 %v2954
    %2963 = vmatprep.subr.bf16.mxu0 0
    %2964 = vmatpush1.bf16.msra.mxu0 %v2955
    %2965 = vmatprep.subr.bf16.mxu0 0
    %2966 = vmatpush1.bf16.msra.mxu0 0
    %2967 = vmatprep.subr.bf16.mxu0 0
    %2968 = vmatpush1.bf16.msra.mxu0 0
    %2969 = vmatprep.subr.bf16.mxu0 0
    %2970 = vmatpush1.bf16.msra.mxu0 0
    %2971 = vmatprep.subr.bf16.mxu0 0
    %2972 = vmatpush1.bf16.msra.mxu0 0
    %2973 = vmatprep.subr.bf16.mxu0 0
    %2974 = vmatpush1.bf16.msra.mxu0 0
    %2975 = vmatprep.subr.bf16.mxu0 0
    %2976 = vmatpush1.bf16.msra.mxu0 0
    %2977 = vmatprep.subr.bf16.mxu0 0
    %2978 = vmatpush1.bf16.msra.mxu0 0
    %2979 = vmatprep.subr.bf16.mxu0 0
    %2980 = vmatpush1.bf16.msra.mxu0 0
    %2981 = vmatprep.subr.bf16.mxu0 0
    %2982 = vmatpush1.bf16.msra.mxu0 0
    %2983 = vmatprep.subr.bf16.mxu0 0
    %2984 = vmatpush1.bf16.msra.mxu0 0
    %2985 = vmatprep.subr.bf16.mxu0 0
    %2986 = vmatpush1.bf16.msra.mxu0 0
    %2987 = vmatprep.subr.bf16.mxu0 0
    %2988 = vmatpush1.bf16.msra.mxu0 0
    %2989 = vmatprep.subr.bf16.mxu0 0
    %2990 = vmatpush1.bf16.msra.mxu0 0
    %2991 = vmatprep.subr.bf16.mxu0 0
    %2992 = vmatpush1.bf16.msra.mxu0 0
    %2993 = vmatprep.mubr.bf16.mxu0 0
    %2994 = vmatmul.mubr.bf16.gmra.mrb[0].mxu0 %v2959
    %v2995 = vpop.f32.mrb[0].mxu0
    %v2996 = vadd.f32 %v2944, %v2995
    %v2997 = vpop.f32.mrb[0].mxu0
    %v2998 = vpop.f32.mrb[0].mxu0
    %v2999 = vadd.f32 %v2944, %v2998
    %v3000 = vpop.f32.mrb[0].mxu0
    %3001 = vdwg.mxu0
    %v3002 = vmul.f32 %v2996, 0.5
    %v3003 = vmul.f32 %v2999, 0.5
    %v3004 = vmul.f32 %v2996, 0.70710677
    %v3005 = vmul.f32 %v2999, 0.70710677
    %v3006 = verf.f32.pop %v3004
    %v3007 = verf.f32.pop %v3005
    %v3008 = vadd.f32 %v3006, 1.0
    %v3009 = vadd.f32 %v3007, 1.0
    %v3010 = vmul.f32 %v3002, %v3008
    %v3011 = vmul.f32 %v3003, %v3009
    %v3012 = vpack.c.bf16 %v3011, %v3010
    %v3013 = vld [vmem:[%s6] sm:$0xf]
    %v3014 = vld [vmem:[%s6 + $0x4] sm:$0xf]
    %v3015 = vld [vmem:[%s6 + $0x8] sm:$0xf]
    %v3016 = vld [vmem:[%s6 + $0xc] sm:$0xf]
    %v3017 = vld [vmem:[%s6 + $0x10] sm:$0xf]
    %v3018 = vld [vmem:[%s6 + $0x14] sm:$0xf]
    %v3019 = vld [vmem:[%s6 + $0x18] sm:$0xf]
    %v3020 = vld [vmem:[%s6 + $0x1c] sm:$0xf]
    %v3021 = vlaneseq
    %v3022 = vshrl.u32 %v3021, 7
    %v3023 = vsub.s32 1, %v3022
    %v3024 = vrot.slane %v38, %v3023
    %v3033 = vunpack.c.l.b16 %v3013
    %v3034 = vunpack.c.l.b16 %v3014
    %v3035 = vunpack.c.l.b16 %v3015
    %v3036 = vunpack.c.l.b16 %v3016
    %v3037 = vunpack.c.l.b16 %v3017
    %v3038 = vunpack.c.l.b16 %v3018
    %v3039 = vunpack.c.l.b16 %v3019
    %v3040 = vunpack.c.l.b16 %v3020
    %v3041 = vpack.c.b16 %v3034, %v3033
    %v3042 = vpack.c.b16 %v3036, %v3035
    %v3043 = vpack.c.b16 %v3038, %v3037
    %v3044 = vpack.c.b16 %v3040, %v3039
    %v3050 = vsel %vm546, %v3012, 0
    %3052 = vmatprep.subr.bf16.mxu0 0
    %3053 = vmatpush1.bf16.msra.mxu0 %v3041
    %3054 = vmatprep.subr.bf16.mxu0 0
    %3055 = vmatpush1.bf16.msra.mxu0 %v3042
    %3056 = vmatprep.subr.bf16.mxu0 0
    %3057 = vmatpush1.bf16.msra.mxu0 %v3043
    %3058 = vmatprep.subr.bf16.mxu0 0
    %3059 = vmatpush1.bf16.msra.mxu0 %v3044
    %3060 = vmatprep.subr.bf16.mxu0 0
    %3061 = vmatpush1.bf16.msra.mxu0 0
    %3062 = vmatprep.subr.bf16.mxu0 0
    %3063 = vmatpush1.bf16.msra.mxu0 0
    %3064 = vmatprep.subr.bf16.mxu0 0
    %3065 = vmatpush1.bf16.msra.mxu0 0
    %3066 = vmatprep.subr.bf16.mxu0 0
    %3067 = vmatpush1.bf16.msra.mxu0 0
    %3068 = vmatprep.subr.bf16.mxu0 0
    %3069 = vmatpush1.bf16.msra.mxu0 0
    %3070 = vmatprep.subr.bf16.mxu0 0
    %3071 = vmatpush1.bf16.msra.mxu0 0
    %3072 = vmatprep.subr.bf16.mxu0 0
    %3073 = vmatpush1.bf16.msra.mxu0 0
    %3074 = vmatprep.subr.bf16.mxu0 0
    %3075 = vmatpush1.bf16.msra.mxu0 0
    %3076 = vmatprep.subr.bf16.mxu0 0
    %3077 = vmatpush1.bf16.msra.mxu0 0
    %3078 = vmatprep.subr.bf16.mxu0 0
    %3079 = vmatpush1.bf16.msra.mxu0 0
    %3080 = vmatprep.subr.bf16.mxu0 0
    %3081 = vmatpush1.bf16.msra.mxu0 0
    %3082 = vmatprep.subr.bf16.mxu0 0
    %3083 = vmatpush1.bf16.msra.mxu0 0
    %3084 = vmatprep.mubr.bf16.mxu0 0
    %3085 = vmatmul.mubr.bf16.gmra.mrb[0].mxu0 %v3050
    %v3086 = vpop.f32.mrb[0].mxu0
    %v3087 = vadd.f32 %v3024, %v3086
    %v3088 = vpop.f32.mrb[0].mxu0
    %v3089 = vpop.f32.mrb[0].mxu0
    %v3090 = vadd.f32 %v3024, %v3089
    %v3091 = vpop.f32.mrb[0].mxu0
    %3092 = vdwg.mxu0
    %v3093 = vadd.f32 %v3087, %v2894
    %v3094 = vadd.f32 %v3090, %v2895
    %v3095 = vsel %vm88, %v3093, 0.0
    %3096 = vadd.xlane.f32.xlu0 %v3095
    %v3097 = vpop.xlane.xlu0 %3096
    %v3098 = vsel %vm88, %v3094, 0.0
    %3099 = vadd.xlane.f32.xlu0 %v3098
    %v3100 = vpop.xlane.xlu0 %3099
    %v3101 = vmul.f32 %v3097, %v2863
    %v3102 = vmul.f32 %v3100, %v2863
    %v3103 = vsub.f32 %v3093, %v3101
    %v3104 = vsub.f32 %v3094, %v3102
    %v3105 = vmul.f32 %v3103, %v3103
    %v3106 = vmul.f32 %v3104, %v3104
    %v3107 = vsel %vm88, %v3105, 0.0
    %3108 = vadd.xlane.f32.xlu0 %v3107
    %v3109 = vpop.xlane.xlu0 %3108
    %v3110 = vsel %vm88, %v3106, 0.0
    %3111 = vadd.xlane.f32.xlu0 %v3110
    %v3112 = vpop.xlane.xlu0 %3111
    %v3113 = vmul.f32 %v3109, %v2863
    %v3114 = vmul.f32 %v3112, %v2863
    %v3115 = vadd.f32 %v3113, 1e-05
    %v3116 = vadd.f32 %v3114, 1e-05
    %v3117 = vrsqrt.pop %v3115
    %v3118 = vrsqrt.pop %v3116
    %v3119 = vmul.f32 %v3103, %v3117
    %v3120 = vmul.f32 %v3104, %v3118
    %v3121 = vlaneseq
    %v3122 = vshrl.u32 %v3121, 7
    %v3123 = vsub.s32 6, %v3122
    %v3124 = vrot.slane %v38, %v3123
    %v3125 = vmul.f32 %v3119, %v3124
    %v3126 = vmul.f32 %v3120, %v3124
    %v3127 = vlaneseq
    %v3128 = vshrl.u32 %v3127, 7
    %v3129 = vsub.s32 7, %v3128
    %v3130 = vrot.slane %v38, %v3129
    %v3131 = vadd.f32 %v3125, %v3130
    %v3132 = vadd.f32 %v3126, %v3130
    %3133 = vst.msk [vmem:[#allocation2] sm:$0xff] %vm88, %v3131
    %3134 = vst.msk [vmem:[#allocation2 + $0x8] sm:$0xff] %vm88, %v3132
    // Predicated region
    $region38: #{tpu_custom_call.1} parent=1 // pred_check
      _
    $region39: #{tpu_custom_call.1} parent=1 // pred_check_branch
      %3136 = sbr.rel (0) target = $region41
    $region40: #{tpu_custom_call.1} parent=1 // pred_region
      %s3138 = ssub.s32 256, 256
      %3139 = vsyncadd [#allocation3], %s3138
      %s3140 = sshll.u32 [#allocation2], 4
      %s3141 = int_to_ptr.vmem [resolvable:$true] %s3140
      %3146 = dma.vmem_to_hbm [thread:$0]  %s3141, 256, %s9, [#allocation3], 128, 128, 8
    $region41: #{tpu_custom_call.1} parent=1 // pred_fallthru
      _
    // Predicated region
    $region42: #{tpu_custom_call.1} parent=1 // pred_check
      _
    $region43: #{tpu_custom_call.1} parent=1 // pred_check_branch
      %3148 = sbr.rel (0) target = $region45
    $region44: #{tpu_custom_call.1} parent=1 // pred_region
      %3149 = dma.done [#allocation3], 256
    $region45: #{tpu_custom_call.1} parent=1 // pred_fallthru
      _
    %3150 = vsyncpa [#allocation3], 1

</llo_original>
